<compile_context>
chip_gen: v7x
topology: tpu7x:2x2x1
jax: 0.10.0
libtpu: 0.0.40
codegen_flags: <defaults>
</compile_context>

<pallas_src>
import functools
import math

import jax
import jax.numpy as jnp
from jax.experimental import pallas as pl
from jax.experimental.pallas import tpu as pltpu

LN_EPS = 1e-5  # nn.LayerNorm default eps


def _vmem_limit_bytes():
    # Per-generation budget: <= half of the chip's VMEM (v7x has 64 MiB/TC).
    try:
        cap = pltpu.get_tpu_info().vmem_capacity_bytes
        return min(int(cap) // 2, 64 * 1024 * 1024)
    except Exception:
        return 32 * 1024 * 1024


VMEM_LIMIT = _vmem_limit_bytes()

# Small test configuration (torch defaults are embed=528, heads=8, ffn=2048,
# img=(84,84), patch=6, fc1=512, fc2=128, fc_int=256 — this code handles those
# shapes too; the __main__ check runs the small config below).
CFG = dict(
    num_actions=6,
    embed_size=128,
    num_heads=8,
    num_layers=1,
    dim_feedforward=256,
    fc1_out=128,
    fc2_out=64,
    fc_intermediate=64,
    num_stacked_frames=4,
    patch_size=4,
    img_size=(16, 16),
)


# ---------------------------------------------------------------------------
# helpers
# ---------------------------------------------------------------------------
def _pick_token_tile(t, cap=128):
    """Largest multiple-of-8 divisor of t <= cap, preferring an even grid count
    (v7x has 2 TensorCores; odd parallel grids leave one core idle ~1/grid)."""
    best_even = best_any = None
    tile = 8
    while tile <= min(cap, t):
        if t % tile == 0:
            best_any = tile
            if (t // tile) % 2 == 0:
                best_even = tile
        tile += 8
    return best_even or best_any or t


def _const_spec(shape):
    nd = len(shape)
    return pl.BlockSpec(shape, lambda *_: (0,) * nd)


def _cparams(n_parallel_axes=0):
    if n_parallel_axes:
        return pltpu.CompilerParams(
            dimension_semantics=("parallel",) * n_parallel_axes,
            vmem_limit_bytes=VMEM_LIMIT)
    return pltpu.CompilerParams(vmem_limit_bytes=VMEM_LIMIT)


def _layernorm(x, g, b):
    mu = jnp.mean(x, axis=-1, keepdims=True)
    xc = x - mu
    var = jnp.mean(xc * xc, axis=-1, keepdims=True)
    return xc * jax.lax.rsqrt(var + LN_EPS) * g + b


# ---------------------------------------------------------------------------
# Pallas kernels
# ---------------------------------------------------------------------------
def _patch_embed_kernel(p_ref, w_ref, b_ref, pos_ref, o_ref):
    # p_ref:(B,T,PP) bf16  w_ref:(PP,E) bf16  b_ref:(1,E)  pos_ref:(T,E)  o:(B,T,E)
    B, T, PP = p_ref.shape
    E = w_ref.shape[1]
    y = jnp.dot(p_ref[...].reshape(B * T, PP), w_ref[...],
                preferred_element_type=jnp.float32)
    o_ref[...] = y.reshape(B, T, E) + b_ref[...] + pos_ref[...]


def _layer_kernel(x_ref,
                  ln1g, ln1b, wq, bq, wk, bk, wv, bv, sel, selT,
                  wo, bo, wg1a, wg1b, bg1,
                  ln2g, ln2b, w1, b1, w2, b2, wg2a, wg2b, bg2,
                  ln3g, ln3b,
                  o_ref, *, nb, scale):
    """One full GatedTransformerXLLayer on a (B, tt, E) token tile."""
    B, TT, E = x_ref.shape
    x = x_ref[...].reshape(B * TT, E)                                # f32 rows

    # ---- LayerNorm1 + Q/K/V projections (shared bf16 LHS, f32 accumulation)
    h = _layernorm(x, ln1g[...], ln1b[...]).astype(jnp.bfloat16)
    q = (jnp.dot(h, wq[...], preferred_element_type=jnp.float32) + bq[...]) * scale
    k = jnp.dot(h, wk[...], preferred_element_type=jnp.float32) + bk[...]
    v = jnp.dot(h, wv[...], preferred_element_type=jnp.float32) + bv[...]
    q3 = q.reshape(B, TT, E)
    k3 = k.reshape(B, TT, E)
    v3 = v.reshape(B, TT, E)

    # ---- multi-head attention over the (tiny, static) batch axis, per token
    # & head (batch_first=False semantics, faithful to the source module).
    # Per-head reductions stay lane-dense: sel/selT are 0/1 (E,H)/(H,E) maps.
    # TODO(synk): for large batch sizes replace the Python-unrolled B^2 loops
    # with a fori_loop / B-tiled grid axis to bound VMEM and trace size.
    outs = []
    for i in range(nb):
        s = [jnp.dot((q3[i] * k3[j]).astype(jnp.bfloat16), sel[...],
                     preferred_element_type=jnp.float32) for j in range(nb)]
        m = s[0]
        for j in range(1, nb):
            m = jnp.maximum(m, s[j])
        e = [jnp.exp(sj - m) for sj in s]
        den = e[0]
        for j in range(1, nb):
            den = den + e[j]
        inv = pl.reciprocal(den, approx=True)                        # (TT, H)
        acc = jnp.zeros((TT, E), jnp.float32)
        for j in range(nb):
            wexp = jnp.dot((e[j] * inv).astype(jnp.bfloat16), selT[...],
                           preferred_element_type=jnp.float32)       # (TT, E)
            acc = acc + wexp * v3[j]
        outs.append(acc)
    attn = jnp.stack(outs, axis=0).reshape(B * TT, E)

    # ---- out-proj + gate1 + residual (dropout1 == identity, eval mode)
    src2 = jnp.dot(attn.astype(jnp.bfloat16), wo[...],
                   preferred_element_type=jnp.float32) + bo[...]
    g1 = (jnp.dot(x.astype(jnp.bfloat16), wg1a[...], preferred_element_type=jnp.float32)
          + jnp.dot(src2.astype(jnp.bfloat16), wg1b[...], preferred_element_type=jnp.float32)
          + bg1[...])
    x1 = x + g1

    # ---- LayerNorm2 + FFN(relu) + gate2 + residual + LayerNorm3
    h2 = _layernorm(x1, ln2g[...], ln2b[...]).astype(jnp.bfloat16)
    a1 = jnp.maximum(jnp.dot(h2, w1[...], preferred_element_type=jnp.float32)
                     + b1[...], 0.0)
    ff = jnp.dot(a1.astype(jnp.bfloat16), w2[...],
                 preferred_element_type=jnp.float32) + b2[...]
    g2 = (jnp.dot(x1.astype(jnp.bfloat16), wg2a[...], preferred_element_type=jnp.float32)
          + jnp.dot(ff.astype(jnp.bfloat16), wg2b[...], preferred_element_type=jnp.float32)
          + bg2[...])
    y = x1 + g2
    o_ref[...] = _layernorm(y, ln3g[...], ln3b[...]).reshape(B, TT, E)


def _pool_head_kernel(x_ref, q_ref, w1, b1, w2, b2, w3, b3, w4, b4, o_ref):
    # AttentionPooling (softmax over tokens) + fc1->fc2->fc3->fc_out with ReLUs.
    x = x_ref[...]                                                   # (B,T,E)
    s = jnp.sum(x * q_ref[...], axis=-1, keepdims=True)              # (B,T,1)
    m = jnp.max(s, axis=1, keepdims=True)
    e = jnp.exp(s - m)
    den = jnp.sum(e, axis=1, keepdims=True)
    wgt = e * pl.reciprocal(den, approx=True)                        # softmax
    ctx = jnp.sum(x * wgt, axis=1)                                   # (B,E)
    h = jnp.maximum(jnp.dot(ctx.astype(jnp.bfloat16), w1[...],
                            preferred_element_type=jnp.float32) + b1[...], 0.0)
    h = jnp.maximum(jnp.dot(h.astype(jnp.bfloat16), w2[...],
                            preferred_element_type=jnp.float32) + b2[...], 0.0)
    h = jnp.maximum(jnp.dot(h.astype(jnp.bfloat16), w3[...],
                            preferred_element_type=jnp.float32) + b3[...], 0.0)
    o_ref[...] = jnp.dot(h.astype(jnp.bfloat16), w4[...],
                         preferred_element_type=jnp.float32) + b4[...]


# ---------------------------------------------------------------------------
# pallas_call wrappers
# ---------------------------------------------------------------------------
def patch_embed(patches_bf16, w, b, pos):
    B, T, _ = patches_bf16.shape
    E = w.shape[1]
    return pl.pallas_call(
        _patch_embed_kernel,
        out_shape=jax.ShapeDtypeStruct((B, T, E), jnp.float32),
        compiler_params=_cparams(0),
    )(patches_bf16, w, b, pos)


def transformer_layer(x3, lp, sel, selT, num_heads):
    B, T, E = x3.shape
    Fd = lp["w1"].shape[1]
    D = E // num_heads
    tt = _pick_token_tile(T)
    xspec = pl.BlockSpec((B, tt, E), lambda t: (0, t, 0))
    vec_e = _const_spec((1, E))
    vec_f = _const_spec((1, Fd))
    mat_ee = _const_spec((E, E))
    kern = functools.partial(_layer_kernel, nb=B, scale=1.0 / math.sqrt(D))
    return pl.pallas_call(
        kern,
        grid=(T // tt,),
        in_specs=[xspec,
                  vec_e, vec_e,                                   # ln1
                  mat_ee, vec_e, mat_ee, vec_e, mat_ee, vec_e,    # wq,bq,wk,bk,wv,bv
                  _const_spec((E, num_heads)),                    # sel
                  _const_spec((num_heads, E)),                    # selT
                  mat_ee, vec_e,                                  # wo, bo
                  mat_ee, mat_ee, vec_e,                          # gate1
                  vec_e, vec_e,                                   # ln2
                  _const_spec((E, Fd)), vec_f,                    # w1, b1
                  _const_spec((Fd, E)), vec_e,                    # w2, b2
                  mat_ee, mat_ee, vec_e,                          # gate2
                  vec_e, vec_e],                                  # ln3
        out_specs=xspec,
        out_shape=jax.ShapeDtypeStruct((B, T, E), jnp.float32),
        compiler_params=_cparams(1),
    )(x3, lp["ln1_g"], lp["ln1_b"], lp["wq"], lp["bq"], lp["wk"], lp["bk"],
      lp["wv"], lp["bv"], sel, selT, lp["wo"], lp["bo"],
      lp["wg1a"], lp["wg1b"], lp["bg1"], lp["ln2_g"], lp["ln2_b"],
      lp["w1"], lp["b1"], lp["w2"], lp["b2"],
      lp["wg2a"], lp["wg2b"], lp["bg2"], lp["ln3_g"], lp["ln3_b"])


def pool_head(x3, params):
    B = x3.shape[0]
    A = params["fco_w"].shape[1]
    return pl.pallas_call(
        _pool_head_kernel,
        out_shape=jax.ShapeDtypeStruct((B, A), jnp.float32),
        compiler_params=_cparams(0),
    )(x3, params["query"], params["fc1_w"], params["fc1_b"],
      params["fc2_w"], params["fc2_b"], params["fc3_w"], params["fc3_b"],
      params["fco_w"], params["fco_b"])


# ---------------------------------------------------------------------------
# glue + forward pass
# ---------------------------------------------------------------------------
def _extract_patches(x, ps):
    # matches x.unfold(2,ps,ps).unfold(3,ps,ps).view(B, F, -1, ps*ps)
    B, F, H, W = x.shape
    hp, wp = H // ps, W // ps
    x = x.reshape(B, F, hp, ps, wp, ps)
    x = jnp.transpose(x, (0, 1, 2, 4, 3, 5))
    return x.reshape(B, F * hp * wp, ps * ps)


def dtqn_forward(params, x, cfg=CFG):
    if x.ndim == 5:                      # mirrors `if x.dim()==5: x = x.squeeze(2)`
        x = jnp.squeeze(x, axis=2)
    E = cfg["embed_size"]
    Hh = cfg["num_heads"]
    D = E // Hh

    patches = _extract_patches(x.astype(jnp.float32),
                               cfg["patch_size"]).astype(jnp.bfloat16)

    # patch projection + bias + positional embedding (one fused kernel)
    h3 = patch_embed(patches, params["patch_w"], params["patch_b"], params["pos"])

    # 0/1 head-selection matrices (lane-dense per-head reduce / broadcast)
    head_id = jnp.arange(E, dtype=jnp.int32) // D
    sel = (head_id[:, None] == jnp.arange(Hh, dtype=jnp.int32)[None, :]
           ).astype(jnp.bfloat16)                                   # (E, H)
    selT = jnp.transpose(sel)                                       # (H, E)

    # GatedTransformerXL (dropout == identity, i.e. eval mode) — fused per layer
    for lp in params["layers"]:
        h3 = transformer_layer(h3, lp, sel, selT, Hh)

    # attention pooling + FC head, fused
    return pool_head(h3, params)


# ---------------------------------------------------------------------------
# parameter init (deterministic; torch-Linear-style scales, our own init)
# ---------------------------------------------------------------------------
def init_params(key, cfg=CFG):
    E, Fd = cfg["embed_size"], cfg["dim_feedforward"]
    ps, Fr = cfg["patch_size"], cfg["num_stacked_frames"]
    Himg, Wimg = cfg["img_size"]
    P = (Himg // ps) * (Wimg // ps)
    T = Fr * P
    PP = ps * ps

    def dense(k, fan_in, shape):
        bound = 1.0 / math.sqrt(fan_in)
        return jax.random.uniform(k, shape, jnp.float32, -bound, bound)

    keys = iter(jax.random.split(key, 64))
    params = {
        "patch_w": dense(next(keys), PP, (PP, E)).astype(jnp.bfloat16),
        "patch_b": jnp.zeros((1, E), jnp.float32),
        "pos": jax.random.normal(next(keys), (T, E), jnp.float32),
        "query": jax.random.normal(next(keys), (1, E), jnp.float32),
        "layers": [],
    }
    for _ in range(cfg["num_layers"]):
        lp = {
            "ln1_g": jnp.ones((1, E), jnp.float32), "ln1_b": jnp.zeros((1, E), jnp.float32),
            "wq": dense(next(keys), E, (E, E)).astype(jnp.bfloat16), "bq": jnp.zeros((1, E), jnp.float32),
            "wk": dense(next(keys), E, (E, E)).astype(jnp.bfloat16), "bk": jnp.zeros((1, E), jnp.float32),
            "wv": dense(next(keys), E, (E, E)).astype(jnp.bfloat16), "bv": jnp.zeros((1, E), jnp.float32),
            "wo": dense(next(keys), E, (E, E)).astype(jnp.bfloat16), "bo": jnp.zeros((1, E), jnp.float32),
            "wg1a": dense(next(keys), 2 * E, (E, E)).astype(jnp.bfloat16),
            "wg1b": dense(next(keys), 2 * E, (E, E)).astype(jnp.bfloat16),
            "bg1": jnp.zeros((1, E), jnp.float32),
            "ln2_g": jnp.ones((1, E), jnp.float32), "ln2_b": jnp.zeros((1, E), jnp.float32),
            "w1": dense(next(keys), E, (E, Fd)).astype(jnp.bfloat16), "b1": jnp.zeros((1, Fd), jnp.float32),
            "w2": dense(next(keys), Fd, (Fd, E)).astype(jnp.bfloat16), "b2": jnp.zeros((1, E), jnp.float32),
            "wg2a": dense(next(keys), 2 * E, (E, E)).astype(jnp.bfloat16),
            "wg2b": dense(next(keys), 2 * E, (E, E)).astype(jnp.bfloat16),
            "bg2": jnp.zeros((1, E), jnp.float32),
            "ln3_g": jnp.ones((1, E), jnp.float32), "ln3_b": jnp.zeros((1, E), jnp.float32),
        }
        params["layers"].append(lp)

    # TODO(synk): the torch spec declares fc1 with in_features =
    # embed_size*num_patches*num_stacked_frames, inconsistent with the
    # (batch, embed_size) output of AttentionPooling (would raise at runtime);
    # we use in_features = embed_size so the forward is well-defined.
    params["fc1_w"] = dense(next(keys), E, (E, cfg["fc1_out"])).astype(jnp.bfloat16)
    params["fc1_b"] = jnp.zeros((1, cfg["fc1_out"]), jnp.float32)
    params["fc2_w"] = dense(next(keys), cfg["fc1_out"],
                            (cfg["fc1_out"], cfg["fc2_out"])).astype(jnp.bfloat16)
    params["fc2_b"] = jnp.zeros((1, cfg["fc2_out"]), jnp.float32)
    params["fc3_w"] = dense(next(keys), cfg["fc2_out"],
                            (cfg["fc2_out"], cfg["fc_intermediate"])).astype(jnp.bfloat16)
    params["fc3_b"] = jnp.zeros((1, cfg["fc_intermediate"]), jnp.float32)
    params["fco_w"] = dense(next(keys), cfg["fc_intermediate"],
                            (cfg["fc_intermediate"], cfg["num_actions"])).astype(jnp.bfloat16)
    params["fco_b"] = jnp.zeros((1, cfg["num_actions"]), jnp.float32)
    return params


if __name__ == "__main__":
    key = jax.random.PRNGKey(0)
    kx, kp = jax.random.split(key)
    x = jax.random.normal(
        kx, (2, CFG["num_stacked_frames"], CFG["img_size"][0], CFG["img_size"][1]),
        dtype=jnp.float32)
    params = init_params(kp)

    fwd = jax.jit(dtqn_forward)
    out = jax.block_until_ready(fwd(params, x))
    assert out.shape == (2, CFG["num_actions"]), out.shape
    assert bool(jnp.all(jnp.isfinite(out)))
    print("KERNEL_OK")
</pallas_src>

<mosaic_0001>
module attributes {stable_mosaic.version = 11 : i64} {
  func.func @_patch_embed_kernel(%arg0: memref<2x64x16xbf16, #tpu.memory_space<vmem>>, %arg1: memref<16x128xbf16, #tpu.memory_space<vmem>>, %arg2: memref<1x128xf32, #tpu.memory_space<vmem>>, %arg3: memref<64x128xf32, #tpu.memory_space<vmem>>, %arg4: memref<2x64x128xf32, #tpu.memory_space<vmem>>) attributes {dimension_semantics = [], scalar_prefetch = 0 : i64, scratch_operands = 0 : i64, tpu.core_type = #tpu.core_type<tc>} {
    %c0 = arith.constant 0 : index
    %c0_0 = arith.constant 0 : index
    %c0_1 = arith.constant 0 : index
    %0 = vector.load %arg0[%c0, %c0_0, %c0_1] : memref<2x64x16xbf16, #tpu.memory_space<vmem>>, vector<2x64x16xbf16>
    %1 = vector.shape_cast %0 : vector<2x64x16xbf16> to vector<128x16xbf16>
    %c0_2 = arith.constant 0 : index
    %c0_3 = arith.constant 0 : index
    %2 = vector.load %arg1[%c0_2, %c0_3] : memref<16x128xbf16, #tpu.memory_space<vmem>>, vector<16x128xbf16>
    %cst = arith.constant dense<0.000000e+00> : vector<128x128xf32>
    %3 = tpu.matmul %1, %2, %cst {dimension_numbers = #tpu.dot_dimension_numbers<[1], [0], [0], [1], [0, 0, 1, 1], [], []>} : vector<128x16xbf16>, vector<16x128xbf16>, vector<128x128xf32> -> vector<128x128xf32>
    %4 = vector.shape_cast %3 : vector<128x128xf32> to vector<2x64x128xf32>
    %c0_4 = arith.constant 0 : index
    %c0_5 = arith.constant 0 : index
    %5 = vector.load %arg2[%c0_4, %c0_5] : memref<1x128xf32, #tpu.memory_space<vmem>>, vector<1x128xf32>
    %6 = vector.shape_cast %5 : vector<1x128xf32> to vector<1x1x128xf32>
    %7 = vector.broadcast %6 : vector<1x1x128xf32> to vector<2x64x128xf32>
    %8 = arith.addf %4, %7 : vector<2x64x128xf32>
    %c0_6 = arith.constant 0 : index
    %c0_7 = arith.constant 0 : index
    %9 = vector.load %arg3[%c0_6, %c0_7] : memref<64x128xf32, #tpu.memory_space<vmem>>, vector<64x128xf32>
    %10 = vector.shape_cast %9 : vector<64x128xf32> to vector<1x64x128xf32>
    %11 = vector.broadcast %10 : vector<1x64x128xf32> to vector<2x64x128xf32>
    %12 = arith.addf %8, %11 : vector<2x64x128xf32>
    %c0_8 = arith.constant 0 : index
    %c0_9 = arith.constant 0 : index
    %c0_10 = arith.constant 0 : index
    %13 = vector.load %arg4[%c0_8, %c0_9, %c0_10] : memref<2x64x128xf32, #tpu.memory_space<vmem>>, vector<2x64x128xf32>
    tpu.vector_store %arg4[%c0_8, %c0_9, %c0_10], %12 {strides = array<i32>} : memref<2x64x128xf32, #tpu.memory_space<vmem>>, vector<2x64x128xf32>,
    return
  }
}

module attributes {stable_mosaic.version = 11 : i64} {
  func.func @_layer_kernel(%arg0: i32, %arg1: memref<2x32x128xf32, #tpu.memory_space<vmem>>, %arg2: memref<1x128xf32, #tpu.memory_space<vmem>>, %arg3: memref<1x128xf32, #tpu.memory_space<vmem>>, %arg4: memref<128x128xbf16, #tpu.memory_space<vmem>>, %arg5: memref<1x128xf32, #tpu.memory_space<vmem>>, %arg6: memref<128x128xbf16, #tpu.memory_space<vmem>>, %arg7: memref<1x128xf32, #tpu.memory_space<vmem>>, %arg8: memref<128x128xbf16, #tpu.memory_space<vmem>>, %arg9: memref<1x128xf32, #tpu.memory_space<vmem>>, %arg10: memref<128x8xbf16, #tpu.memory_space<vmem>>, %arg11: memref<8x128xbf16, #tpu.memory_space<vmem>>, %arg12: memref<128x128xbf16, #tpu.memory_space<vmem>>, %arg13: memref<1x128xf32, #tpu.memory_space<vmem>>, %arg14: memref<128x128xbf16, #tpu.memory_space<vmem>>, %arg15: memref<128x128xbf16, #tpu.memory_space<vmem>>, %arg16: memref<1x128xf32, #tpu.memory_space<vmem>>, %arg17: memref<1x128xf32, #tpu.memory_space<vmem>>, %arg18: memref<1x128xf32, #tpu.memory_space<vmem>>, %arg19: memref<128x256xbf16, #tpu.memory_space<vmem>>, %arg20: memref<1x256xf32, #tpu.memory_space<vmem>>, %arg21: memref<256x128xbf16, #tpu.memory_space<vmem>>, %arg22: memref<1x128xf32, #tpu.memory_space<vmem>>, %arg23: memref<128x128xbf16, #tpu.memory_space<vmem>>, %arg24: memref<128x128xbf16, #tpu.memory_space<vmem>>, %arg25: memref<1x128xf32, #tpu.memory_space<vmem>>, %arg26: memref<1x128xf32, #tpu.memory_space<vmem>>, %arg27: memref<1x128xf32, #tpu.memory_space<vmem>>, %arg28: memref<2x32x128xf32, #tpu.memory_space<vmem>>) attributes {dimension_semantics = [#tpu.dimension_semantics<parallel>], iteration_bounds = array<i64: 2>, scalar_prefetch = 0 : i64, scratch_operands = 0 : i64, tpu.core_type = #tpu.core_type<tc>, window_params = [{transform_indices = @transform_0, window_bounds = array<i64: 2, 32, 128>}, {pipeline_mode = #tpu.pipeline_mode<synchronous>, transform_indices = @transform_1, window_bounds = array<i64: 1, 128>}, {pipeline_mode = #tpu.pipeline_mode<synchronous>, transform_indices = @transform_2, window_bounds = array<i64: 1, 128>}, {pipeline_mode = #tpu.pipeline_mode<synchronous>, transform_indices = @transform_3, window_bounds = array<i64: 128, 128>}, {pipeline_mode = #tpu.pipeline_mode<synchronous>, transform_indices = @transform_4, window_bounds = array<i64: 1, 128>}, {pipeline_mode = #tpu.pipeline_mode<synchronous>, transform_indices = @transform_5, window_bounds = array<i64: 128, 128>}, {pipeline_mode = #tpu.pipeline_mode<synchronous>, transform_indices = @transform_6, window_bounds = array<i64: 1, 128>}, {pipeline_mode = #tpu.pipeline_mode<synchronous>, transform_indices = @transform_7, window_bounds = array<i64: 128, 128>}, {pipeline_mode = #tpu.pipeline_mode<synchronous>, transform_indices = @transform_8, window_bounds = array<i64: 1, 128>}, {pipeline_mode = #tpu.pipeline_mode<synchronous>, transform_indices = @transform_9, window_bounds = array<i64: 128, 8>}, {pipeline_mode = #tpu.pipeline_mode<synchronous>, transform_indices = @transform_10, window_bounds = array<i64: 8, 128>}, {pipeline_mode = #tpu.pipeline_mode<synchronous>, transform_indices = @transform_11, window_bounds = array<i64: 128, 128>}, {pipeline_mode = #tpu.pipeline_mode<synchronous>, transform_indices = @transform_12, window_bounds = array<i64: 1, 128>}, {pipeline_mode = #tpu.pipeline_mode<synchronous>, transform_indices = @transform_13, window_bounds = array<i64: 128, 128>}, {pipeline_mode = #tpu.pipeline_mode<synchronous>, transform_indices = @transform_14, window_bounds = array<i64: 128, 128>}, {pipeline_mode = #tpu.pipeline_mode<synchronous>, transform_indices = @transform_15, window_bounds = array<i64: 1, 128>}, {pipeline_mode = #tpu.pipeline_mode<synchronous>, transform_indices = @transform_16, window_bounds = array<i64: 1, 128>}, {pipeline_mode = #tpu.pipeline_mode<synchronous>, transform_indices = @transform_17, window_bounds = array<i64: 1, 128>}, {pipeline_mode = #tpu.pipeline_mode<synchronous>, transform_indices = @transform_18, window_bounds = array<i64: 128, 256>}, {pipeline_mode = #tpu.pipeline_mode<synchronous>, transform_indices = @transform_19, window_bounds = array<i64: 1, 256>}, {pipeline_mode = #tpu.pipeline_mode<synchronous>, transform_indices = @transform_20, window_bounds = array<i64: 256, 128>}, {pipeline_mode = #tpu.pipeline_mode<synchronous>, transform_indices = @transform_21, window_bounds = array<i64: 1, 128>}, {pipeline_mode = #tpu.pipeline_mode<synchronous>, transform_indices = @transform_22, window_bounds = array<i64: 128, 128>}, {pipeline_mode = #tpu.pipeline_mode<synchronous>, transform_indices = @transform_23, window_bounds = array<i64: 128, 128>}, {pipeline_mode = #tpu.pipeline_mode<synchronous>, transform_indices = @transform_24, window_bounds = array<i64: 1, 128>}, {pipeline_mode = #tpu.pipeline_mode<synchronous>, transform_indices = @transform_25, window_bounds = array<i64: 1, 128>}, {pipeline_mode = #tpu.pipeline_mode<synchronous>, transform_indices = @transform_26, window_bounds = array<i64: 1, 128>}, {transform_indices = @transform_27, window_bounds = array<i64: 2, 32, 128>}]} {
    %c0 = arith.constant 0 : index
    %c0_0 = arith.constant 0 : index
    %c0_1 = arith.constant 0 : index
    %0 = vector.load %arg1[%c0, %c0_0, %c0_1] : memref<2x32x128xf32, #tpu.memory_space<vmem>>, vector<2x32x128xf32>
    %1 = vector.shape_cast %0 : vector<2x32x128xf32> to vector<64x128xf32>
    %c0_2 = arith.constant 0 : index
    %c0_3 = arith.constant 0 : index
    %2 = vector.load %arg2[%c0_2, %c0_3] : memref<1x128xf32, #tpu.memory_space<vmem>>, vector<1x128xf32>
    %c0_4 = arith.constant 0 : index
    %c0_5 = arith.constant 0 : index
    %3 = vector.load %arg3[%c0_4, %c0_5] : memref<1x128xf32, #tpu.memory_space<vmem>>, vector<1x128xf32>
    %cst = arith.constant dense<0.000000e+00> : vector<64xf32>
    %4 = vector.multi_reduction <add>, %1, %cst [1] : vector<64x128xf32> to vector<64xf32>
    %5 = vector.shape_cast %4 : vector<64xf32> to vector<64x1xf32>
    %cst_6 = arith.constant 1.280000e+02 : f32
    %6 = vector.broadcast %cst_6 : f32 to vector<64x1xf32>
    %7 = arith.divf %5, %6 : vector<64x1xf32>
    %8 = vector.broadcast %7 : vector<64x1xf32> to vector<64x128xf32>
    %9 = arith.subf %1, %8 : vector<64x128xf32>
    %10 = arith.mulf %9, %9 : vector<64x128xf32>
    %cst_7 = arith.constant dense<0.000000e+00> : vector<64xf32>
    %11 = vector.multi_reduction <add>, %10, %cst_7 [1] : vector<64x128xf32> to vector<64xf32>
    %12 = vector.shape_cast %11 : vector<64xf32> to vector<64x1xf32>
    %cst_8 = arith.constant 1.280000e+02 : f32
    %13 = vector.broadcast %cst_8 : f32 to vector<64x1xf32>
    %14 = arith.divf %12, %13 : vector<64x1xf32>
    %cst_9 = arith.constant 9.99999974E-6 : f32
    %15 = vector.broadcast %cst_9 : f32 to vector<64x1xf32>
    %16 = arith.addf %14, %15 : vector<64x1xf32>
    %17 = math.rsqrt %16 : vector<64x1xf32>
    %18 = vector.broadcast %17 : vector<64x1xf32> to vector<64x128xf32>
    %19 = arith.mulf %9, %18 : vector<64x128xf32>
    %20 = vector.broadcast %2 : vector<1x128xf32> to vector<64x128xf32>
    %21 = arith.mulf %19, %20 : vector<64x128xf32>
    %22 = vector.broadcast %3 : vector<1x128xf32> to vector<64x128xf32>
    %23 = arith.addf %21, %22 : vector<64x128xf32>
    %24 = arith.truncf %23 : vector<64x128xf32> to vector<64x128xbf16>
    %c0_10 = arith.constant 0 : index
    %c0_11 = arith.constant 0 : index
    %25 = vector.load %arg4[%c0_10, %c0_11] : memref<128x128xbf16, #tpu.memory_space<vmem>>, vector<128x128xbf16>
    %cst_12 = arith.constant dense<0.000000e+00> : vector<64x128xf32>
    %26 = tpu.matmul %24, %25, %cst_12 {dimension_numbers = #tpu.dot_dimension_numbers<[1], [0], [0], [1], [0, 0, 1, 1], [], []>} : vector<64x128xbf16>, vector<128x128xbf16>, vector<64x128xf32> -> vector<64x128xf32>
    %c0_13 = arith.constant 0 : index
    %c0_14 = arith.constant 0 : index
    %27 = vector.load %arg5[%c0_13, %c0_14] : memref<1x128xf32, #tpu.memory_space<vmem>>, vector<1x128xf32>
    %28 = vector.broadcast %27 : vector<1x128xf32> to vector<64x128xf32>
    %29 = arith.addf %26, %28 : vector<64x128xf32>
    %cst_15 = arith.constant 2.500000e-01 : f32
    %30 = vector.broadcast %cst_15 : f32 to vector<64x128xf32>
    %31 = arith.mulf %29, %30 : vector<64x128xf32>
    %c0_16 = arith.constant 0 : index
    %c0_17 = arith.constant 0 : index
    %32 = vector.load %arg6[%c0_16, %c0_17] : memref<128x128xbf16, #tpu.memory_space<vmem>>, vector<128x128xbf16>
    %cst_18 = arith.constant dense<0.000000e+00> : vector<64x128xf32>
    %33 = tpu.matmul %24, %32, %cst_18 {dimension_numbers = #tpu.dot_dimension_numbers<[1], [0], [0], [1], [0, 0, 1, 1], [], []>} : vector<64x128xbf16>, vector<128x128xbf16>, vector<64x128xf32> -> vector<64x128xf32>
    %c0_19 = arith.constant 0 : index
    %c0_20 = arith.constant 0 : index
    %34 = vector.load %arg7[%c0_19, %c0_20] : memref<1x128xf32, #tpu.memory_space<vmem>>, vector<1x128xf32>
    %35 = vector.broadcast %34 : vector<1x128xf32> to vector<64x128xf32>
    %36 = arith.addf %33, %35 : vector<64x128xf32>
    %c0_21 = arith.constant 0 : index
    %c0_22 = arith.constant 0 : index
    %37 = vector.load %arg8[%c0_21, %c0_22] : memref<128x128xbf16, #tpu.memory_space<vmem>>, vector<128x128xbf16>
    %cst_23 = arith.constant dense<0.000000e+00> : vector<64x128xf32>
    %38 = tpu.matmul %24, %37, %cst_23 {dimension_numbers = #tpu.dot_dimension_numbers<[1], [0], [0], [1], [0, 0, 1, 1], [], []>} : vector<64x128xbf16>, vector<128x128xbf16>, vector<64x128xf32> -> vector<64x128xf32>
    %c0_24 = arith.constant 0 : index
    %c0_25 = arith.constant 0 : index
    %39 = vector.load %arg9[%c0_24, %c0_25] : memref<1x128xf32, #tpu.memory_space<vmem>>, vector<1x128xf32>
    %40 = vector.broadcast %39 : vector<1x128xf32> to vector<64x128xf32>
    %41 = arith.addf %38, %40 : vector<64x128xf32>
    %42 = vector.shape_cast %31 : vector<64x128xf32> to vector<2x32x128xf32>
    %43 = vector.shape_cast %36 : vector<64x128xf32> to vector<2x32x128xf32>
    %44 = vector.shape_cast %41 : vector<64x128xf32> to vector<2x32x128xf32>
    %45 = vector.extract_strided_slice %42 {offsets = [0, 0, 0], sizes = [1, 32, 128], strides = [1, 1, 1]} : vector<2x32x128xf32> to vector<1x32x128xf32>
    %46 = vector.shape_cast %45 : vector<1x32x128xf32> to vector<32x128xf32>
    %47 = vector.extract_strided_slice %43 {offsets = [0, 0, 0], sizes = [1, 32, 128], strides = [1, 1, 1]} : vector<2x32x128xf32> to vector<1x32x128xf32>
    %48 = vector.shape_cast %47 : vector<1x32x128xf32> to vector<32x128xf32>
    %49 = arith.mulf %46, %48 : vector<32x128xf32>
    %50 = arith.truncf %49 : vector<32x128xf32> to vector<32x128xbf16>
    %c0_26 = arith.constant 0 : index
    %c0_27 = arith.constant 0 : index
    %51 = vector.load %arg10[%c0_26, %c0_27] : memref<128x8xbf16, #tpu.memory_space<vmem>>, vector<128x8xbf16>
    %cst_28 = arith.constant dense<0.000000e+00> : vector<32x8xf32>
    %52 = tpu.matmul %50, %51, %cst_28 {dimension_numbers = #tpu.dot_dimension_numbers<[1], [0], [0], [1], [0, 0, 1, 1], [], []>} : vector<32x128xbf16>, vector<128x8xbf16>, vector<32x8xf32> -> vector<32x8xf32>
    %53 = vector.extract_strided_slice %42 {offsets = [0, 0, 0], sizes = [1, 32, 128], strides = [1, 1, 1]} : vector<2x32x128xf32> to vector<1x32x128xf32>
    %54 = vector.shape_cast %53 : vector<1x32x128xf32> to vector<32x128xf32>
    %55 = vector.extract_strided_slice %43 {offsets = [1, 0, 0], sizes = [1, 32, 128], strides = [1, 1, 1]} : vector<2x32x128xf32> to vector<1x32x128xf32>
    %56 = vector.shape_cast %55 : vector<1x32x128xf32> to vector<32x128xf32>
    %57 = arith.mulf %54, %56 : vector<32x128xf32>
    %58 = arith.truncf %57 : vector<32x128xf32> to vector<32x128xbf16>
    %c0_29 = arith.constant 0 : index
    %c0_30 = arith.constant 0 : index
    %59 = vector.load %arg10[%c0_29, %c0_30] : memref<128x8xbf16, #tpu.memory_space<vmem>>, vector<128x8xbf16>
    %cst_31 = arith.constant dense<0.000000e+00> : vector<32x8xf32>
    %60 = tpu.matmul %58, %59, %cst_31 {dimension_numbers = #tpu.dot_dimension_numbers<[1], [0], [0], [1], [0, 0, 1, 1], [], []>} : vector<32x128xbf16>, vector<128x8xbf16>, vector<32x8xf32> -> vector<32x8xf32>
    %61 = arith.maximumf %52, %60 : vector<32x8xf32>
    %62 = arith.subf %52, %61 : vector<32x8xf32>
    %63 = math.exp %62 : vector<32x8xf32>
    %64 = arith.subf %60, %61 : vector<32x8xf32>
    %65 = math.exp %64 : vector<32x8xf32>
    %66 = arith.addf %63, %65 : vector<32x8xf32>
    %67 = tpu.reciprocal %66 {approx = true} : vector<32x8xf32> -> vector<32x8xf32>
    %cst_32 = arith.constant 0.000000e+00 : f32
    %68 = vector.broadcast %cst_32 : f32 to vector<32x128xf32>
    %69 = arith.mulf %63, %67 : vector<32x8xf32>
    %70 = arith.truncf %69 : vector<32x8xf32> to vector<32x8xbf16>
    %c0_33 = arith.constant 0 : index
    %c0_34 = arith.constant 0 : index
    %71 = vector.load %arg11[%c0_33, %c0_34] : memref<8x128xbf16, #tpu.memory_space<vmem>>, vector<8x128xbf16>
    %cst_35 = arith.constant dense<0.000000e+00> : vector<32x128xf32>
    %72 = tpu.matmul %70, %71, %cst_35 {dimension_numbers = #tpu.dot_dimension_numbers<[1], [0], [0], [1], [0, 0, 1, 1], [], []>} : vector<32x8xbf16>, vector<8x128xbf16>, vector<32x128xf32> -> vector<32x128xf32>
    %73 = vector.extract_strided_slice %44 {offsets = [0, 0, 0], sizes = [1, 32, 128], strides = [1, 1, 1]} : vector<2x32x128xf32> to vector<1x32x128xf32>
    %74 = vector.shape_cast %73 : vector<1x32x128xf32> to vector<32x128xf32>
    %75 = arith.mulf %72, %74 : vector<32x128xf32>
    %76 = arith.addf %68, %75 : vector<32x128xf32>
    %77 = arith.mulf %65, %67 : vector<32x8xf32>
    %78 = arith.truncf %77 : vector<32x8xf32> to vector<32x8xbf16>
    %c0_36 = arith.constant 0 : index
    %c0_37 = arith.constant 0 : index
    %79 = vector.load %arg11[%c0_36, %c0_37] : memref<8x128xbf16, #tpu.memory_space<vmem>>, vector<8x128xbf16>
    %cst_38 = arith.constant dense<0.000000e+00> : vector<32x128xf32>
    %80 = tpu.matmul %78, %79, %cst_38 {dimension_numbers = #tpu.dot_dimension_numbers<[1], [0], [0], [1], [0, 0, 1, 1], [], []>} : vector<32x8xbf16>, vector<8x128xbf16>, vector<32x128xf32> -> vector<32x128xf32>
    %81 = vector.extract_strided_slice %44 {offsets = [1, 0, 0], sizes = [1, 32, 128], strides = [1, 1, 1]} : vector<2x32x128xf32> to vector<1x32x128xf32>
    %82 = vector.shape_cast %81 : vector<1x32x128xf32> to vector<32x128xf32>
    %83 = arith.mulf %80, %82 : vector<32x128xf32>
    %84 = arith.addf %76, %83 : vector<32x128xf32>
    %85 = vector.extract_strided_slice %42 {offsets = [1, 0, 0], sizes = [1, 32, 128], strides = [1, 1, 1]} : vector<2x32x128xf32> to vector<1x32x128xf32>
    %86 = vector.shape_cast %85 : vector<1x32x128xf32> to vector<32x128xf32>
    %87 = vector.extract_strided_slice %43 {offsets = [0, 0, 0], sizes = [1, 32, 128], strides = [1, 1, 1]} : vector<2x32x128xf32> to vector<1x32x128xf32>
    %88 = vector.shape_cast %87 : vector<1x32x128xf32> to vector<32x128xf32>
    %89 = arith.mulf %86, %88 : vector<32x128xf32>
    %90 = arith.truncf %89 : vector<32x128xf32> to vector<32x128xbf16>
    %c0_39 = arith.constant 0 : index
    %c0_40 = arith.constant 0 : index
    %91 = vector.load %arg10[%c0_39, %c0_40] : memref<128x8xbf16, #tpu.memory_space<vmem>>, vector<128x8xbf16>
    %cst_41 = arith.constant dense<0.000000e+00> : vector<32x8xf32>
    %92 = tpu.matmul %90, %91, %cst_41 {dimension_numbers = #tpu.dot_dimension_numbers<[1], [0], [0], [1], [0, 0, 1, 1], [], []>} : vector<32x128xbf16>, vector<128x8xbf16>, vector<32x8xf32> -> vector<32x8xf32>
    %93 = vector.extract_strided_slice %42 {offsets = [1, 0, 0], sizes = [1, 32, 128], strides = [1, 1, 1]} : vector<2x32x128xf32> to vector<1x32x128xf32>
    %94 = vector.shape_cast %93 : vector<1x32x128xf32> to vector<32x128xf32>
    %95 = vector.extract_strided_slice %43 {offsets = [1, 0, 0], sizes = [1, 32, 128], strides = [1, 1, 1]} : vector<2x32x128xf32> to vector<1x32x128xf32>
    %96 = vector.shape_cast %95 : vector<1x32x128xf32> to vector<32x128xf32>
    %97 = arith.mulf %94, %96 : vector<32x128xf32>
    %98 = arith.truncf %97 : vector<32x128xf32> to vector<32x128xbf16>
    %c0_42 = arith.constant 0 : index
    %c0_43 = arith.constant 0 : index
    %99 = vector.load %arg10[%c0_42, %c0_43] : memref<128x8xbf16, #tpu.memory_space<vmem>>, vector<128x8xbf16>
    %cst_44 = arith.constant dense<0.000000e+00> : vector<32x8xf32>
    %100 = tpu.matmul %98, %99, %cst_44 {dimension_numbers = #tpu.dot_dimension_numbers<[1], [0], [0], [1], [0, 0, 1, 1], [], []>} : vector<32x128xbf16>, vector<128x8xbf16>, vector<32x8xf32> -> vector<32x8xf32>
    %101 = arith.maximumf %92, %100 : vector<32x8xf32>
    %102 = arith.subf %92, %101 : vector<32x8xf32>
    %103 = math.exp %102 : vector<32x8xf32>
    %104 = arith.subf %100, %101 : vector<32x8xf32>
    %105 = math.exp %104 : vector<32x8xf32>
    %106 = arith.addf %103, %105 : vector<32x8xf32>
    %107 = tpu.reciprocal %106 {approx = true} : vector<32x8xf32> -> vector<32x8xf32>
    %cst_45 = arith.constant 0.000000e+00 : f32
    %108 = vector.broadcast %cst_45 : f32 to vector<32x128xf32>
    %109 = arith.mulf %103, %107 : vector<32x8xf32>
    %110 = arith.truncf %109 : vector<32x8xf32> to vector<32x8xbf16>
    %c0_46 = arith.constant 0 : index
    %c0_47 = arith.constant 0 : index
    %111 = vector.load %arg11[%c0_46, %c0_47] : memref<8x128xbf16, #tpu.memory_space<vmem>>, vector<8x128xbf16>
    %cst_48 = arith.constant dense<0.000000e+00> : vector<32x128xf32>
    %112 = tpu.matmul %110, %111, %cst_48 {dimension_numbers = #tpu.dot_dimension_numbers<[1], [0], [0], [1], [0, 0, 1, 1], [], []>} : vector<32x8xbf16>, vector<8x128xbf16>, vector<32x128xf32> -> vector<32x128xf32>
    %113 = vector.extract_strided_slice %44 {offsets = [0, 0, 0], sizes = [1, 32, 128], strides = [1, 1, 1]} : vector<2x32x128xf32> to vector<1x32x128xf32>
    %114 = vector.shape_cast %113 : vector<1x32x128xf32> to vector<32x128xf32>
    %115 = arith.mulf %112, %114 : vector<32x128xf32>
    %116 = arith.addf %108, %115 : vector<32x128xf32>
    %117 = arith.mulf %105, %107 : vector<32x8xf32>
    %118 = arith.truncf %117 : vector<32x8xf32> to vector<32x8xbf16>
    %c0_49 = arith.constant 0 : index
    %c0_50 = arith.constant 0 : index
    %119 = vector.load %arg11[%c0_49, %c0_50] : memref<8x128xbf16, #tpu.memory_space<vmem>>, vector<8x128xbf16>
    %cst_51 = arith.constant dense<0.000000e+00> : vector<32x128xf32>
    %120 = tpu.matmul %118, %119, %cst_51 {dimension_numbers = #tpu.dot_dimension_numbers<[1], [0], [0], [1], [0, 0, 1, 1], [], []>} : vector<32x8xbf16>, vector<8x128xbf16>, vector<32x128xf32> -> vector<32x128xf32>
    %121 = vector.extract_strided_slice %44 {offsets = [1, 0, 0], sizes = [1, 32, 128], strides = [1, 1, 1]} : vector<2x32x128xf32> to vector<1x32x128xf32>
    %122 = vector.shape_cast %121 : vector<1x32x128xf32> to vector<32x128xf32>
    %123 = arith.mulf %120, %122 : vector<32x128xf32>
    %124 = arith.addf %116, %123 : vector<32x128xf32>
    %125 = vector.shape_cast %84 : vector<32x128xf32> to vector<1x32x128xf32>
    %126 = vector.shape_cast %124 : vector<32x128xf32> to vector<1x32x128xf32>
    %127 = tpu.concatenate %125, %126 in 0 : vector<1x32x128xf32>, vector<1x32x128xf32> -> vector<2x32x128xf32>
    %128 = vector.shape_cast %127 : vector<2x32x128xf32> to vector<64x128xf32>
    %129 = arith.truncf %128 : vector<64x128xf32> to vector<64x128xbf16>
    %c0_52 = arith.constant 0 : index
    %c0_53 = arith.constant 0 : index
    %130 = vector.load %arg12[%c0_52, %c0_53] : memref<128x128xbf16, #tpu.memory_space<vmem>>, vector<128x128xbf16>
    %cst_54 = arith.constant dense<0.000000e+00> : vector<64x128xf32>
    %131 = tpu.matmul %129, %130, %cst_54 {dimension_numbers = #tpu.dot_dimension_numbers<[1], [0], [0], [1], [0, 0, 1, 1], [], []>} : vector<64x128xbf16>, vector<128x128xbf16>, vector<64x128xf32> -> vector<64x128xf32>
    %c0_55 = arith.constant 0 : index
    %c0_56 = arith.constant 0 : index
    %132 = vector.load %arg13[%c0_55, %c0_56] : memref<1x128xf32, #tpu.memory_space<vmem>>, vector<1x128xf32>
    %133 = vector.broadcast %132 : vector<1x128xf32> to vector<64x128xf32>
    %134 = arith.addf %131, %133 : vector<64x128xf32>
    %135 = arith.truncf %1 : vector<64x128xf32> to vector<64x128xbf16>
    %c0_57 = arith.constant 0 : index
    %c0_58 = arith.constant 0 : index
    %136 = vector.load %arg14[%c0_57, %c0_58] : memref<128x128xbf16, #tpu.memory_space<vmem>>, vector<128x128xbf16>
    %cst_59 = arith.constant dense<0.000000e+00> : vector<64x128xf32>
    %137 = tpu.matmul %135, %136, %cst_59 {dimension_numbers = #tpu.dot_dimension_numbers<[1], [0], [0], [1], [0, 0, 1, 1], [], []>} : vector<64x128xbf16>, vector<128x128xbf16>, vector<64x128xf32> -> vector<64x128xf32>
    %138 = arith.truncf %134 : vector<64x128xf32> to vector<64x128xbf16>
    %c0_60 = arith.constant 0 : index
    %c0_61 = arith.constant 0 : index
    %139 = vector.load %arg15[%c0_60, %c0_61] : memref<128x128xbf16, #tpu.memory_space<vmem>>, vector<128x128xbf16>
    %cst_62 = arith.constant dense<0.000000e+00> : vector<64x128xf32>
    %140 = tpu.matmul %138, %139, %cst_62 {dimension_numbers = #tpu.dot_dimension_numbers<[1], [0], [0], [1], [0, 0, 1, 1], [], []>} : vector<64x128xbf16>, vector<128x128xbf16>, vector<64x128xf32> -> vector<64x128xf32>
    %141 = arith.addf %137, %140 : vector<64x128xf32>
    %c0_63 = arith.constant 0 : index
    %c0_64 = arith.constant 0 : index
    %142 = vector.load %arg16[%c0_63, %c0_64] : memref<1x128xf32, #tpu.memory_space<vmem>>, vector<1x128xf32>
    %143 = vector.broadcast %142 : vector<1x128xf32> to vector<64x128xf32>
    %144 = arith.addf %141, %143 : vector<64x128xf32>
    %145 = arith.addf %1, %144 : vector<64x128xf32>
    %c0_65 = arith.constant 0 : index
    %c0_66 = arith.constant 0 : index
    %146 = vector.load %arg17[%c0_65, %c0_66] : memref<1x128xf32, #tpu.memory_space<vmem>>, vector<1x128xf32>
    %c0_67 = arith.constant 0 : index
    %c0_68 = arith.constant 0 : index
    %147 = vector.load %arg18[%c0_67, %c0_68] : memref<1x128xf32, #tpu.memory_space<vmem>>, vector<1x128xf32>
    %cst_69 = arith.constant dense<0.000000e+00> : vector<64xf32>
    %148 = vector.multi_reduction <add>, %145, %cst_69 [1] : vector<64x128xf32> to vector<64xf32>
    %149 = vector.shape_cast %148 : vector<64xf32> to vector<64x1xf32>
    %cst_70 = arith.constant 1.280000e+02 : f32
    %150 = vector.broadcast %cst_70 : f32 to vector<64x1xf32>
    %151 = arith.divf %149, %150 : vector<64x1xf32>
    %152 = vector.broadcast %151 : vector<64x1xf32> to vector<64x128xf32>
    %153 = arith.subf %145, %152 : vector<64x128xf32>
    %154 = arith.mulf %153, %153 : vector<64x128xf32>
    %cst_71 = arith.constant dense<0.000000e+00> : vector<64xf32>
    %155 = vector.multi_reduction <add>, %154, %cst_71 [1] : vector<64x128xf32> to vector<64xf32>
    %156 = vector.shape_cast %155 : vector<64xf32> to vector<64x1xf32>
    %cst_72 = arith.constant 1.280000e+02 : f32
    %157 = vector.broadcast %cst_72 : f32 to vector<64x1xf32>
    %158 = arith.divf %156, %157 : vector<64x1xf32>
    %cst_73 = arith.constant 9.99999974E-6 : f32
    %159 = vector.broadcast %cst_73 : f32 to vector<64x1xf32>
    %160 = arith.addf %158, %159 : vector<64x1xf32>
    %161 = math.rsqrt %160 : vector<64x1xf32>
    %162 = vector.broadcast %161 : vector<64x1xf32> to vector<64x128xf32>
    %163 = arith.mulf %153, %162 : vector<64x128xf32>
    %164 = vector.broadcast %146 : vector<1x128xf32> to vector<64x128xf32>
    %165 = arith.mulf %163, %164 : vector<64x128xf32>
    %166 = vector.broadcast %147 : vector<1x128xf32> to vector<64x128xf32>
    %167 = arith.addf %165, %166 : vector<64x128xf32>
    %168 = arith.truncf %167 : vector<64x128xf32> to vector<64x128xbf16>
    %c0_74 = arith.constant 0 : index
    %c0_75 = arith.constant 0 : index
    %169 = vector.load %arg19[%c0_74, %c0_75] : memref<128x256xbf16, #tpu.memory_space<vmem>>, vector<128x256xbf16>
    %cst_76 = arith.constant dense<0.000000e+00> : vector<64x256xf32>
    %170 = tpu.matmul %168, %169, %cst_76 {dimension_numbers = #tpu.dot_dimension_numbers<[1], [0], [0], [1], [0, 0, 1, 1], [], []>} : vector<64x128xbf16>, vector<128x256xbf16>, vector<64x256xf32> -> vector<64x256xf32>
    %c0_77 = arith.constant 0 : index
    %c0_78 = arith.constant 0 : index
    %171 = vector.load %arg20[%c0_77, %c0_78] : memref<1x256xf32, #tpu.memory_space<vmem>>, vector<1x256xf32>
    %172 = vector.broadcast %171 : vector<1x256xf32> to vector<64x256xf32>
    %173 = arith.addf %170, %172 : vector<64x256xf32>
    %cst_79 = arith.constant 0.000000e+00 : f32
    %174 = vector.broadcast %cst_79 : f32 to vector<64x256xf32>
    %175 = arith.maximumf %173, %174 : vector<64x256xf32>
    %176 = arith.truncf %175 : vector<64x256xf32> to vector<64x256xbf16>
    %c0_80 = arith.constant 0 : index
    %c0_81 = arith.constant 0 : index
    %177 = vector.load %arg21[%c0_80, %c0_81] : memref<256x128xbf16, #tpu.memory_space<vmem>>, vector<256x128xbf16>
    %cst_82 = arith.constant dense<0.000000e+00> : vector<64x128xf32>
    %178 = tpu.matmul %176, %177, %cst_82 {dimension_numbers = #tpu.dot_dimension_numbers<[1], [0], [0], [1], [0, 0, 1, 1], [], []>} : vector<64x256xbf16>, vector<256x128xbf16>, vector<64x128xf32> -> vector<64x128xf32>
    %c0_83 = arith.constant 0 : index
    %c0_84 = arith.constant 0 : index
    %179 = vector.load %arg22[%c0_83, %c0_84] : memref<1x128xf32, #tpu.memory_space<vmem>>, vector<1x128xf32>
    %180 = vector.broadcast %179 : vector<1x128xf32> to vector<64x128xf32>
    %181 = arith.addf %178, %180 : vector<64x128xf32>
    %182 = arith.truncf %145 : vector<64x128xf32> to vector<64x128xbf16>
    %c0_85 = arith.constant 0 : index
    %c0_86 = arith.constant 0 : index
    %183 = vector.load %arg23[%c0_85, %c0_86] : memref<128x128xbf16, #tpu.memory_space<vmem>>, vector<128x128xbf16>
    %cst_87 = arith.constant dense<0.000000e+00> : vector<64x128xf32>
    %184 = tpu.matmul %182, %183, %cst_87 {dimension_numbers = #tpu.dot_dimension_numbers<[1], [0], [0], [1], [0, 0, 1, 1], [], []>} : vector<64x128xbf16>, vector<128x128xbf16>, vector<64x128xf32> -> vector<64x128xf32>
    %185 = arith.truncf %181 : vector<64x128xf32> to vector<64x128xbf16>
    %c0_88 = arith.constant 0 : index
    %c0_89 = arith.constant 0 : index
    %186 = vector.load %arg24[%c0_88, %c0_89] : memref<128x128xbf16, #tpu.memory_space<vmem>>, vector<128x128xbf16>
    %cst_90 = arith.constant dense<0.000000e+00> : vector<64x128xf32>
    %187 = tpu.matmul %185, %186, %cst_90 {dimension_numbers = #tpu.dot_dimension_numbers<[1], [0], [0], [1], [0, 0, 1, 1], [], []>} : vector<64x128xbf16>, vector<128x128xbf16>, vector<64x128xf32> -> vector<64x128xf32>
    %188 = arith.addf %184, %187 : vector<64x128xf32>
    %c0_91 = arith.constant 0 : index
    %c0_92 = arith.constant 0 : index
    %189 = vector.load %arg25[%c0_91, %c0_92] : memref<1x128xf32, #tpu.memory_space<vmem>>, vector<1x128xf32>
    %190 = vector.broadcast %189 : vector<1x128xf32> to vector<64x128xf32>
    %191 = arith.addf %188, %190 : vector<64x128xf32>
    %192 = arith.addf %145, %191 : vector<64x128xf32>
    %c0_93 = arith.constant 0 : index
    %c0_94 = arith.constant 0 : index
    %193 = vector.load %arg26[%c0_93, %c0_94] : memref<1x128xf32, #tpu.memory_space<vmem>>, vector<1x128xf32>
    %c0_95 = arith.constant 0 : index
    %c0_96 = arith.constant 0 : index
    %194 = vector.load %arg27[%c0_95, %c0_96] : memref<1x128xf32, #tpu.memory_space<vmem>>, vector<1x128xf32>
    %cst_97 = arith.constant dense<0.000000e+00> : vector<64xf32>
    %195 = vector.multi_reduction <add>, %192, %cst_97 [1] : vector<64x128xf32> to vector<64xf32>
    %196 = vector.shape_cast %195 : vector<64xf32> to vector<64x1xf32>
    %cst_98 = arith.constant 1.280000e+02 : f32
    %197 = vector.broadcast %cst_98 : f32 to vector<64x1xf32>
    %198 = arith.divf %196, %197 : vector<64x1xf32>
    %199 = vector.broadcast %198 : vector<64x1xf32> to vector<64x128xf32>
    %200 = arith.subf %192, %199 : vector<64x128xf32>
    %201 = arith.mulf %200, %200 : vector<64x128xf32>
    %cst_99 = arith.constant dense<0.000000e+00> : vector<64xf32>
    %202 = vector.multi_reduction <add>, %201, %cst_99 [1] : vector<64x128xf32> to vector<64xf32>
    %203 = vector.shape_cast %202 : vector<64xf32> to vector<64x1xf32>
    %cst_100 = arith.constant 1.280000e+02 : f32
    %204 = vector.broadcast %cst_100 : f32 to vector<64x1xf32>
    %205 = arith.divf %203, %204 : vector<64x1xf32>
    %cst_101 = arith.constant 9.99999974E-6 : f32
    %206 = vector.broadcast %cst_101 : f32 to vector<64x1xf32>
    %207 = arith.addf %205, %206 : vector<64x1xf32>
    %208 = math.rsqrt %207 : vector<64x1xf32>
    %209 = vector.broadcast %208 : vector<64x1xf32> to vector<64x128xf32>
    %210 = arith.mulf %200, %209 : vector<64x128xf32>
    %211 = vector.broadcast %193 : vector<1x128xf32> to vector<64x128xf32>
    %212 = arith.mulf %210, %211 : vector<64x128xf32>
    %213 = vector.broadcast %194 : vector<1x128xf32> to vector<64x128xf32>
    %214 = arith.addf %212, %213 : vector<64x128xf32>
    %215 = vector.shape_cast %214 : vector<64x128xf32> to vector<2x32x128xf32>
    %c0_102 = arith.constant 0 : index
    %c0_103 = arith.constant 0 : index
    %c0_104 = arith.constant 0 : index
    %216 = vector.load %arg28[%c0_102, %c0_103, %c0_104] : memref<2x32x128xf32, #tpu.memory_space<vmem>>, vector<2x32x128xf32>
    tpu.vector_store %arg28[%c0_102, %c0_103, %c0_104], %215 {strides = array<i32>} : memref<2x32x128xf32, #tpu.memory_space<vmem>>, vector<2x32x128xf32>,
    return
  }
  func.func @transform_0(%arg0: i32) -> (i32, i32, i32) {
    %c0_i32 = arith.constant 0 : i32
    %c0_i32_0 = arith.constant 0 : i32
    %c0_i32_1 = arith.constant 0 : i32
    return %c0_i32, %arg0, %c0_i32_0 : i32, i32, i32
  }
  func.func @transform_1(%arg0: i32) -> (i32, i32) {
    %c0_i32 = arith.constant 0 : i32
    %c0_i32_0 = arith.constant 0 : i32
    %c0_i32_1 = arith.constant 0 : i32
    return %c0_i32, %c0_i32_0 : i32, i32
  }
  func.func @transform_2(%arg0: i32) -> (i32, i32) {
    %c0_i32 = arith.constant 0 : i32
    %c0_i32_0 = arith.constant 0 : i32
    %c0_i32_1 = arith.constant 0 : i32
    return %c0_i32, %c0_i32_0 : i32, i32
  }
  func.func @transform_3(%arg0: i32) -> (i32, i32) {
    %c0_i32 = arith.constant 0 : i32
    %c0_i32_0 = arith.constant 0 : i32
    %c0_i32_1 = arith.constant 0 : i32
    return %c0_i32, %c0_i32_0 : i32, i32
  }
  func.func @transform_4(%arg0: i32) -> (i32, i32) {
    %c0_i32 = arith.constant 0 : i32
    %c0_i32_0 = arith.constant 0 : i32
    %c0_i32_1 = arith.constant 0 : i32
    return %c0_i32, %c0_i32_0 : i32, i32
  }
  func.func @transform_5(%arg0: i32) -> (i32, i32) {
    %c0_i32 = arith.constant 0 : i32
    %c0_i32_0 = arith.constant 0 : i32
    %c0_i32_1 = arith.constant 0 : i32
    return %c0_i32, %c0_i32_0 : i32, i32
  }
  func.func @transform_6(%arg0: i32) -> (i32, i32) {
    %c0_i32 = arith.constant 0 : i32
    %c0_i32_0 = arith.constant 0 : i32
    %c0_i32_1 = arith.constant 0 : i32
    return %c0_i32, %c0_i32_0 : i32, i32
  }
  func.func @transform_7(%arg0: i32) -> (i32, i32) {
    %c0_i32 = arith.constant 0 : i32
    %c0_i32_0 = arith.constant 0 : i32
    %c0_i32_1 = arith.constant 0 : i32
    return %c0_i32, %c0_i32_0 : i32, i32
  }
  func.func @transform_8(%arg0: i32) -> (i32, i32) {
    %c0_i32 = arith.constant 0 : i32
    %c0_i32_0 = arith.constant 0 : i32
    %c0_i32_1 = arith.constant 0 : i32
    return %c0_i32, %c0_i32_0 : i32, i32
  }
  func.func @transform_9(%arg0: i32) -> (i32, i32) {
    %c0_i32 = arith.constant 0 : i32
    %c0_i32_0 = arith.constant 0 : i32
    %c0_i32_1 = arith.constant 0 : i32
    return %c0_i32, %c0_i32_0 : i32, i32
  }
  func.func @transform_10(%arg0: i32) -> (i32, i32) {
    %c0_i32 = arith.constant 0 : i32
    %c0_i32_0 = arith.constant 0 : i32
    %c0_i32_1 = arith.constant 0 : i32
    return %c0_i32, %c0_i32_0 : i32, i32
  }
  func.func @transform_11(%arg0: i32) -> (i32, i32) {
    %c0_i32 = arith.constant 0 : i32
    %c0_i32_0 = arith.constant 0 : i32
    %c0_i32_1 = arith.constant 0 : i32
    return %c0_i32, %c0_i32_0 : i32, i32
  }
  func.func @transform_12(%arg0: i32) -> (i32, i32) {
    %c0_i32 = arith.constant 0 : i32
    %c0_i32_0 = arith.constant 0 : i32
    %c0_i32_1 = arith.constant 0 : i32
    return %c0_i32, %c0_i32_0 : i32, i32
  }
  func.func @transform_13(%arg0: i32) -> (i32, i32) {
    %c0_i32 = arith.constant 0 : i32
    %c0_i32_0 = arith.constant 0 : i32
    %c0_i32_1 = arith.constant 0 : i32
    return %c0_i32, %c0_i32_0 : i32, i32
  }
  func.func @transform_14(%arg0: i32) -> (i32, i32) {
    %c0_i32 = arith.constant 0 : i32
    %c0_i32_0 = arith.constant 0 : i32
    %c0_i32_1 = arith.constant 0 : i32
    return %c0_i32, %c0_i32_0 : i32, i32
  }
  func.func @transform_15(%arg0: i32) -> (i32, i32) {
    %c0_i32 = arith.constant 0 : i32
    %c0_i32_0 = arith.constant 0 : i32
    %c0_i32_1 = arith.constant 0 : i32
    return %c0_i32, %c0_i32_0 : i32, i32
  }
  func.func @transform_16(%arg0: i32) -> (i32, i32) {
    %c0_i32 = arith.constant 0 : i32
    %c0_i32_0 = arith.constant 0 : i32
    %c0_i32_1 = arith.constant 0 : i32
    return %c0_i32, %c0_i32_0 : i32, i32
  }
  func.func @transform_17(%arg0: i32) -> (i32, i32) {
    %c0_i32 = arith.constant 0 : i32
    %c0_i32_0 = arith.constant 0 : i32
    %c0_i32_1 = arith.constant 0 : i32
    return %c0_i32, %c0_i32_0 : i32, i32
  }
  func.func @transform_18(%arg0: i32) -> (i32, i32) {
    %c0_i32 = arith.constant 0 : i32
    %c0_i32_0 = arith.constant 0 : i32
    %c0_i32_1 = arith.constant 0 : i32
    return %c0_i32, %c0_i32_0 : i32, i32
  }
  func.func @transform_19(%arg0: i32) -> (i32, i32) {
    %c0_i32 = arith.constant 0 : i32
    %c0_i32_0 = arith.constant 0 : i32
    %c0_i32_1 = arith.constant 0 : i32
    return %c0_i32, %c0_i32_0 : i32, i32
  }
  func.func @transform_20(%arg0: i32) -> (i32, i32) {
    %c0_i32 = arith.constant 0 : i32
    %c0_i32_0 = arith.constant 0 : i32
    %c0_i32_1 = arith.constant 0 : i32
    return %c0_i32, %c0_i32_0 : i32, i32
  }
  func.func @transform_21(%arg0: i32) -> (i32, i32) {
    %c0_i32 = arith.constant 0 : i32
    %c0_i32_0 = arith.constant 0 : i32
    %c0_i32_1 = arith.constant 0 : i32
    return %c0_i32, %c0_i32_0 : i32, i32
  }
  func.func @transform_22(%arg0: i32) -> (i32, i32) {
    %c0_i32 = arith.constant 0 : i32
    %c0_i32_0 = arith.constant 0 : i32
    %c0_i32_1 = arith.constant 0 : i32
    return %c0_i32, %c0_i32_0 : i32, i32
  }
  func.func @transform_23(%arg0: i32) -> (i32, i32) {
    %c0_i32 = arith.constant 0 : i32
    %c0_i32_0 = arith.constant 0 : i32
    %c0_i32_1 = arith.constant 0 : i32
    return %c0_i32, %c0_i32_0 : i32, i32
  }
  func.func @transform_24(%arg0: i32) -> (i32, i32) {
    %c0_i32 = arith.constant 0 : i32
    %c0_i32_0 = arith.constant 0 : i32
    %c0_i32_1 = arith.constant 0 : i32
    return %c0_i32, %c0_i32_0 : i32, i32
  }
  func.func @transform_25(%arg0: i32) -> (i32, i32) {
    %c0_i32 = arith.constant 0 : i32
    %c0_i32_0 = arith.constant 0 : i32
    %c0_i32_1 = arith.constant 0 : i32
    return %c0_i32, %c0_i32_0 : i32, i32
  }
  func.func @transform_26(%arg0: i32) -> (i32, i32) {
    %c0_i32 = arith.constant 0 : i32
    %c0_i32_0 = arith.constant 0 : i32
    %c0_i32_1 = arith.constant 0 : i32
    return %c0_i32, %c0_i32_0 : i32, i32
  }
  func.func @transform_27(%arg0: i32) -> (i32, i32, i32) {
    %c0_i32 = arith.constant 0 : i32
    %c0_i32_0 = arith.constant 0 : i32
    %c0_i32_1 = arith.constant 0 : i32
    return %c0_i32, %arg0, %c0_i32_0 : i32, i32, i32
  }
}

module attributes {stable_mosaic.version = 11 : i64} {
  func.func @_pool_head_kernel(%arg0: memref<2x64x128xf32, #tpu.memory_space<vmem>>, %arg1: memref<1x128xf32, #tpu.memory_space<vmem>>, %arg2: memref<128x128xbf16, #tpu.memory_space<vmem>>, %arg3: memref<1x128xf32, #tpu.memory_space<vmem>>, %arg4: memref<128x64xbf16, #tpu.memory_space<vmem>>, %arg5: memref<1x64xf32, #tpu.memory_space<vmem>>, %arg6: memref<64x64xbf16, #tpu.memory_space<vmem>>, %arg7: memref<1x64xf32, #tpu.memory_space<vmem>>, %arg8: memref<64x6xbf16, #tpu.memory_space<vmem>>, %arg9: memref<1x6xf32, #tpu.memory_space<vmem>>, %arg10: memref<2x6xf32, #tpu.memory_space<vmem>>) attributes {dimension_semantics = [], scalar_prefetch = 0 : i64, scratch_operands = 0 : i64, tpu.core_type = #tpu.core_type<tc>} {
    %c0 = arith.constant 0 : index
    %c0_0 = arith.constant 0 : index
    %c0_1 = arith.constant 0 : index
    %0 = vector.load %arg0[%c0, %c0_0, %c0_1] : memref<2x64x128xf32, #tpu.memory_space<vmem>>, vector<2x64x128xf32>
    %c0_2 = arith.constant 0 : index
    %c0_3 = arith.constant 0 : index
    %1 = vector.load %arg1[%c0_2, %c0_3] : memref<1x128xf32, #tpu.memory_space<vmem>>, vector<1x128xf32>
    %2 = vector.shape_cast %1 : vector<1x128xf32> to vector<1x1x128xf32>
    %3 = vector.broadcast %2 : vector<1x1x128xf32> to vector<2x64x128xf32>
    %4 = arith.mulf %0, %3 : vector<2x64x128xf32>
    %cst = arith.constant dense<0.000000e+00> : vector<2x64xf32>
    %5 = vector.multi_reduction <add>, %4, %cst [2] : vector<2x64x128xf32> to vector<2x64xf32>
    %6 = vector.shape_cast %5 : vector<2x64xf32> to vector<2x64x1xf32>
    %cst_4 = arith.constant dense<0xFF800000> : vector<2x1xf32>
    %7 = vector.multi_reduction <maximumf>, %6, %cst_4 [1] : vector<2x64x1xf32> to vector<2x1xf32>
    %8 = vector.shape_cast %7 : vector<2x1xf32> to vector<2x1x1xf32>
    %9 = vector.broadcast %8 : vector<2x1x1xf32> to vector<2x64x1xf32>
    %10 = arith.subf %6, %9 : vector<2x64x1xf32>
    %11 = math.exp %10 : vector<2x64x1xf32>
    %cst_5 = arith.constant dense<0.000000e+00> : vector<2x1xf32>
    %12 = vector.multi_reduction <add>, %11, %cst_5 [1] : vector<2x64x1xf32> to vector<2x1xf32>
    %13 = vector.shape_cast %12 : vector<2x1xf32> to vector<2x1x1xf32>
    %14 = tpu.reciprocal %13 {approx = true} : vector<2x1x1xf32> -> vector<2x1x1xf32>
    %15 = vector.broadcast %14 : vector<2x1x1xf32> to vector<2x64x1xf32>
    %16 = arith.mulf %11, %15 : vector<2x64x1xf32>
    %17 = vector.broadcast %16 : vector<2x64x1xf32> to vector<2x64x128xf32>
    %18 = arith.mulf %0, %17 : vector<2x64x128xf32>
    %cst_6 = arith.constant dense<0.000000e+00> : vector<2x128xf32>
    %19 = vector.multi_reduction <add>, %18, %cst_6 [1] : vector<2x64x128xf32> to vector<2x128xf32>
    %20 = arith.truncf %19 : vector<2x128xf32> to vector<2x128xbf16>
    %c0_7 = arith.constant 0 : index
    %c0_8 = arith.constant 0 : index
    %21 = vector.load %arg2[%c0_7, %c0_8] : memref<128x128xbf16, #tpu.memory_space<vmem>>, vector<128x128xbf16>
    %cst_9 = arith.constant dense<0.000000e+00> : vector<2x128xf32>
    %22 = tpu.matmul %20, %21, %cst_9 {dimension_numbers = #tpu.dot_dimension_numbers<[1], [0], [0], [1], [0, 0, 1, 1], [], []>} : vector<2x128xbf16>, vector<128x128xbf16>, vector<2x128xf32> -> vector<2x128xf32>
    %c0_10 = arith.constant 0 : index
    %c0_11 = arith.constant 0 : index
    %23 = vector.load %arg3[%c0_10, %c0_11] : memref<1x128xf32, #tpu.memory_space<vmem>>, vector<1x128xf32>
    %24 = vector.broadcast %23 : vector<1x128xf32> to vector<2x128xf32>
    %25 = arith.addf %22, %24 : vector<2x128xf32>
    %cst_12 = arith.constant 0.000000e+00 : f32
    %26 = vector.broadcast %cst_12 : f32 to vector<2x128xf32>
    %27 = arith.maximumf %25, %26 : vector<2x128xf32>
    %28 = arith.truncf %27 : vector<2x128xf32> to vector<2x128xbf16>
    %c0_13 = arith.constant 0 : index
    %c0_14 = arith.constant 0 : index
    %29 = vector.load %arg4[%c0_13, %c0_14] : memref<128x64xbf16, #tpu.memory_space<vmem>>, vector<128x64xbf16>
    %cst_15 = arith.constant dense<0.000000e+00> : vector<2x64xf32>
    %30 = tpu.matmul %28, %29, %cst_15 {dimension_numbers = #tpu.dot_dimension_numbers<[1], [0], [0], [1], [0, 0, 1, 1], [], []>} : vector<2x128xbf16>, vector<128x64xbf16>, vector<2x64xf32> -> vector<2x64xf32>
    %c0_16 = arith.constant 0 : index
    %c0_17 = arith.constant 0 : index
    %31 = vector.load %arg5[%c0_16, %c0_17] : memref<1x64xf32, #tpu.memory_space<vmem>>, vector<1x64xf32>
    %32 = vector.broadcast %31 : vector<1x64xf32> to vector<2x64xf32>
    %33 = arith.addf %30, %32 : vector<2x64xf32>
    %cst_18 = arith.constant 0.000000e+00 : f32
    %34 = vector.broadcast %cst_18 : f32 to vector<2x64xf32>
    %35 = arith.maximumf %33, %34 : vector<2x64xf32>
    %36 = arith.truncf %35 : vector<2x64xf32> to vector<2x64xbf16>
    %c0_19 = arith.constant 0 : index
    %c0_20 = arith.constant 0 : index
    %37 = vector.load %arg6[%c0_19, %c0_20] : memref<64x64xbf16, #tpu.memory_space<vmem>>, vector<64x64xbf16>
    %cst_21 = arith.constant dense<0.000000e+00> : vector<2x64xf32>
    %38 = tpu.matmul %36, %37, %cst_21 {dimension_numbers = #tpu.dot_dimension_numbers<[1], [0], [0], [1], [0, 0, 1, 1], [], []>} : vector<2x64xbf16>, vector<64x64xbf16>, vector<2x64xf32> -> vector<2x64xf32>
    %c0_22 = arith.constant 0 : index
    %c0_23 = arith.constant 0 : index
    %39 = vector.load %arg7[%c0_22, %c0_23] : memref<1x64xf32, #tpu.memory_space<vmem>>, vector<1x64xf32>
    %40 = vector.broadcast %39 : vector<1x64xf32> to vector<2x64xf32>
    %41 = arith.addf %38, %40 : vector<2x64xf32>
    %cst_24 = arith.constant 0.000000e+00 : f32
    %42 = vector.broadcast %cst_24 : f32 to vector<2x64xf32>
    %43 = arith.maximumf %41, %42 : vector<2x64xf32>
    %44 = arith.truncf %43 : vector<2x64xf32> to vector<2x64xbf16>
    %c0_25 = arith.constant 0 : index
    %c0_26 = arith.constant 0 : index
    %45 = vector.load %arg8[%c0_25, %c0_26] : memref<64x6xbf16, #tpu.memory_space<vmem>>, vector<64x6xbf16>
    %cst_27 = arith.constant dense<0.000000e+00> : vector<2x6xf32>
    %46 = tpu.matmul %44, %45, %cst_27 {dimension_numbers = #tpu.dot_dimension_numbers<[1], [0], [0], [1], [0, 0, 1, 1], [], []>} : vector<2x64xbf16>, vector<64x6xbf16>, vector<2x6xf32> -> vector<2x6xf32>
    %c0_28 = arith.constant 0 : index
    %c0_29 = arith.constant 0 : index
    %47 = vector.load %arg9[%c0_28, %c0_29] : memref<1x6xf32, #tpu.memory_space<vmem>>, vector<1x6xf32>
    %48 = vector.broadcast %47 : vector<1x6xf32> to vector<2x6xf32>
    %49 = arith.addf %46, %48 : vector<2x6xf32>
    %c0_30 = arith.constant 0 : index
    %c0_31 = arith.constant 0 : index
    %50 = vector.load %arg10[%c0_30, %c0_31] : memref<2x6xf32, #tpu.memory_space<vmem>>, vector<2x6xf32>
    tpu.vector_store %arg10[%c0_30, %c0_31], %49 {strides = array<i32>} : memref<2x6xf32, #tpu.memory_space<vmem>>, vector<2x6xf32>,
    return
  }
}

</mosaic_0001>

<llo_original>
// kernel: dtqn_forward.3
$region0: #{dtqn_forward.3}
  #allocation0 [shape = 'u32[]', space=smem, size = 0x4, offset = 0x4, fixed_abs, tag = 'smem constant byte address 0x4 - core index']
  #allocation1 [shape = 'u32[144,128]{1,0:T(1,128)}', space=vmem, size = 0x12000, scoped, tag = 'internal scratch']
  %s0 = inlined_call_operand.vmem [shape: bf16[2,64,16], index: 0, kind: input, shape index: {}]
  %s1 = inlined_call_operand.vmem [shape: bf16[16,128], index: 1, kind: input, shape index: {}]
  %s2 = inlined_call_operand.vmem [shape: f32[1,128], index: 2, kind: input, shape index: {}]
  %s3 = inlined_call_operand.vmem [shape: f32[64,128], index: 3, kind: input, shape index: {}]
  %s4 = inlined_call_operand.vmem [shape: f32[2,64,128], index: 4, kind: output, shape index: {}]
  %s5 = sld [smem:[#allocation0]]
  $region26: #{dtqn_forward.3} parent=0
    _
  %s7 = ssub.s32 1, %s5
  %s8 = scalar_select 0, %s7, %s5
  // Predicated region
  $region2: #{dtqn_forward.3} parent=0 // pred_check
    _
  $region3: #{dtqn_forward.3} parent=0 // pred_check_branch
    %10 = sbr.rel (0) target = $region5
  $region4: #{dtqn_forward.3} parent=0 // pred_region
    _
  $region5: #{dtqn_forward.3} parent=0 // pred_fallthru
    _
  // Predicated region
  $region6: #{dtqn_forward.3} parent=0 // pred_check
    _
  $region7: #{dtqn_forward.3} parent=0 // pred_check_branch
    %12 = sbr.rel (0) target = $region9
  $region8: #{dtqn_forward.3} parent=0 // pred_region
    _
  $region9: #{dtqn_forward.3} parent=0 // pred_fallthru
    _
  // Predicated region
  $region10: #{dtqn_forward.3} parent=0 // pred_check
    _
  $region11: #{dtqn_forward.3} parent=0 // pred_check_branch
    %14 = sbr.rel (0) target = $region13
  $region12: #{dtqn_forward.3} parent=0 // pred_region
    _
  $region13: #{dtqn_forward.3} parent=0 // pred_fallthru
    _
  // Predicated region
  $region14: #{dtqn_forward.3} parent=0 // pred_check
    _
  $region15: #{dtqn_forward.3} parent=0 // pred_check_branch
    %16 = sbr.rel (0) target = $region17
  $region16: #{dtqn_forward.3} parent=0 // pred_region
    _
  $region17: #{dtqn_forward.3} parent=0 // pred_fallthru
    _
  %v18 = vld [vmem:[%s0] sm:$0xf]
  %v19 = vld [vmem:[%s0 + $0x4] sm:$0xf]
  %v20 = vld [vmem:[%s0 + $0x8] sm:$0xf]
  %v21 = vld [vmem:[%s0 + $0xc] sm:$0xf]
  %v22 = vld [vmem:[%s0 + $0x10] sm:$0xf]
  %v23 = vld [vmem:[%s0 + $0x14] sm:$0xf]
  %v24 = vld [vmem:[%s0 + $0x18] sm:$0xf]
  %v25 = vld [vmem:[%s0 + $0x1c] sm:$0xf]
  %v26 = vld [vmem:[%s0 + $0x20] sm:$0xf]
  %v27 = vld [vmem:[%s0 + $0x24] sm:$0xf]
  %v28 = vld [vmem:[%s0 + $0x28] sm:$0xf]
  %v29 = vld [vmem:[%s0 + $0x2c] sm:$0xf]
  %v30 = vld [vmem:[%s0 + $0x30] sm:$0xf]
  %v31 = vld [vmem:[%s0 + $0x34] sm:$0xf]
  %v32 = vld [vmem:[%s0 + $0x38] sm:$0xf]
  %v33 = vld [vmem:[%s0 + $0x3c] sm:$0xf]
  %v34 = vld [vmem:[%s1] sm:$0xf]
  %v35 = vld [vmem:[%s1 + $0x4] sm:$0xf]
  %v52 = vunpack.c.l.b16 %v18
  %v53 = vunpack.c.l.b16 %v19
  %v54 = vunpack.c.l.b16 %v20
  %v55 = vunpack.c.l.b16 %v21
  %v56 = vunpack.c.l.b16 %v22
  %v57 = vunpack.c.l.b16 %v23
  %v58 = vunpack.c.l.b16 %v24
  %v59 = vunpack.c.l.b16 %v25
  %v60 = vunpack.c.l.b16 %v26
  %v61 = vunpack.c.l.b16 %v27
  %v62 = vunpack.c.l.b16 %v28
  %v63 = vunpack.c.l.b16 %v29
  %v64 = vunpack.c.l.b16 %v30
  %v65 = vunpack.c.l.b16 %v31
  %v66 = vunpack.c.l.b16 %v32
  %v67 = vunpack.c.l.b16 %v33
  %v68 = vpack.c.b16 %v53, %v52
  %v69 = vpack.c.b16 %v55, %v54
  %v70 = vpack.c.b16 %v57, %v56
  %v71 = vpack.c.b16 %v59, %v58
  %v72 = vpack.c.b16 %v61, %v60
  %v73 = vpack.c.b16 %v63, %v62
  %v74 = vpack.c.b16 %v65, %v64
  %v75 = vpack.c.b16 %v67, %v66
  %v78 = vunpack.c.l.b16 %v34
  %v79 = vunpack.c.l.b16 %v35
  %v80 = vpack.c.b16 %v79, %v78
  %vm82 = vcmask 130048
  %v84 = vsel %vm82, %v68, 0
  %v87 = vsel %vm82, %v69, 0
  %v90 = vsel %vm82, %v70, 0
  %v93 = vsel %vm82, %v71, 0
  %v96 = vsel %vm82, %v72, 0
  %v99 = vsel %vm82, %v73, 0
  %v102 = vsel %vm82, %v74, 0
  %v105 = vsel %vm82, %v75, 0
  %107 = vmatprep.subr.bf16.mxu0 0
  %108 = vmatpush1.bf16.msra.mxu0 %v80
  %109 = vmatprep.subr.bf16.mxu0 0
  %110 = vmatpush1.bf16.msra.mxu0 0
  %111 = vmatprep.subr.bf16.mxu0 0
  %112 = vmatpush1.bf16.msra.mxu0 0
  %113 = vmatprep.subr.bf16.mxu0 0
  %114 = vmatpush1.bf16.msra.mxu0 0
  %115 = vmatprep.subr.bf16.mxu0 0
  %116 = vmatpush1.bf16.msra.mxu0 0
  %117 = vmatprep.subr.bf16.mxu0 0
  %118 = vmatpush1.bf16.msra.mxu0 0
  %119 = vmatprep.subr.bf16.mxu0 0
  %120 = vmatpush1.bf16.msra.mxu0 0
  %121 = vmatprep.subr.bf16.mxu0 0
  %122 = vmatpush1.bf16.msra.mxu0 0
  %123 = vmatprep.subr.bf16.mxu0 0
  %124 = vmatpush1.bf16.msra.mxu0 0
  %125 = vmatprep.subr.bf16.mxu0 0
  %126 = vmatpush1.bf16.msra.mxu0 0
  %127 = vmatprep.subr.bf16.mxu0 0
  %128 = vmatpush1.bf16.msra.mxu0 0
  %129 = vmatprep.subr.bf16.mxu0 0
  %130 = vmatpush1.bf16.msra.mxu0 0
  %131 = vmatprep.subr.bf16.mxu0 0
  %132 = vmatpush1.bf16.msra.mxu0 0
  %133 = vmatprep.subr.bf16.mxu0 0
  %134 = vmatpush1.bf16.msra.mxu0 0
  %135 = vmatprep.subr.bf16.mxu0 0
  %136 = vmatpush1.bf16.msra.mxu0 0
  %137 = vmatprep.subr.bf16.mxu0 0
  %138 = vmatpush1.bf16.msra.mxu0 0
  %139 = vmatprep.mubr.bf16.mxu0 0
  %140 = vmatmul.mubr.bf16.gmra.mrb[0].mxu0 %v84
  %v141 = vpop.f32.mrb[0].mxu0
  %v142 = vadd.f32 0.0, %v141
  %v143 = vpop.f32.mrb[0].mxu0
  %v144 = vpop.f32.mrb[0].mxu0
  %v145 = vadd.f32 0.0, %v144
  %v146 = vpop.f32.mrb[0].mxu0
  %147 = vmatprep.mubr.bf16.mxu0 0
  %148 = vmatmul.mubr.bf16.gmra.mrb[0].mxu0 %v87
  %v149 = vpop.f32.mrb[0].mxu0
  %v150 = vadd.f32 0.0, %v149
  %v151 = vpop.f32.mrb[0].mxu0
  %v152 = vpop.f32.mrb[0].mxu0
  %v153 = vadd.f32 0.0, %v152
  %v154 = vpop.f32.mrb[0].mxu0
  %155 = vmatprep.mubr.bf16.mxu0 0
  %156 = vmatmul.mubr.bf16.gmra.mrb[0].mxu0 %v90
  %v157 = vpop.f32.mrb[0].mxu0
  %v158 = vadd.f32 0.0, %v157
  %v159 = vpop.f32.mrb[0].mxu0
  %v160 = vpop.f32.mrb[0].mxu0
  %v161 = vadd.f32 0.0, %v160
  %v162 = vpop.f32.mrb[0].mxu0
  %163 = vmatprep.mubr.bf16.mxu0 0
  %164 = vmatmul.mubr.bf16.gmra.mrb[0].mxu0 %v93
  %v165 = vpop.f32.mrb[0].mxu0
  %v166 = vadd.f32 0.0, %v165
  %v167 = vpop.f32.mrb[0].mxu0
  %v168 = vpop.f32.mrb[0].mxu0
  %v169 = vadd.f32 0.0, %v168
  %v170 = vpop.f32.mrb[0].mxu0
  %171 = vmatprep.mubr.bf16.mxu0 0
  %172 = vmatmul.mubr.bf16.gmra.mrb[0].mxu0 %v96
  %v173 = vpop.f32.mrb[0].mxu0
  %v174 = vadd.f32 0.0, %v173
  %v175 = vpop.f32.mrb[0].mxu0
  %v176 = vpop.f32.mrb[0].mxu0
  %v177 = vadd.f32 0.0, %v176
  %v178 = vpop.f32.mrb[0].mxu0
  %179 = vmatprep.mubr.bf16.mxu0 0
  %180 = vmatmul.mubr.bf16.gmra.mrb[0].mxu0 %v99
  %v181 = vpop.f32.mrb[0].mxu0
  %v182 = vadd.f32 0.0, %v181
  %v183 = vpop.f32.mrb[0].mxu0
  %v184 = vpop.f32.mrb[0].mxu0
  %v185 = vadd.f32 0.0, %v184
  %v186 = vpop.f32.mrb[0].mxu0
  %187 = vmatprep.mubr.bf16.mxu0 0
  %188 = vmatmul.mubr.bf16.gmra.mrb[0].mxu0 %v102
  %v189 = vpop.f32.mrb[0].mxu0
  %v190 = vadd.f32 0.0, %v189
  %v191 = vpop.f32.mrb[0].mxu0
  %v192 = vpop.f32.mrb[0].mxu0
  %v193 = vadd.f32 0.0, %v192
  %v194 = vpop.f32.mrb[0].mxu0
  %195 = vmatprep.mubr.bf16.mxu0 0
  %196 = vmatmul.mubr.bf16.gmra.mrb[0].mxu0 %v105
  %v197 = vpop.f32.mrb[0].mxu0
  %v198 = vadd.f32 0.0, %v197
  %v199 = vpop.f32.mrb[0].mxu0
  %v200 = vpop.f32.mrb[0].mxu0
  %v201 = vadd.f32 0.0, %v200
  %v202 = vpop.f32.mrb[0].mxu0
  %203 = vdwg.mxu0
  %v204 = vld [vmem:[%s2] sm:$0x1]
  %v206 = vlaneseq
  %v207 = vshrl.u32 %v206, 7
  %v208 = vsub.s32 0, %v207
  %v209 = vrot.slane %v204, %v208
  %v211 = vadd.f32 %v142, %v209
  %v212 = vadd.f32 %v145, %v209
  %v213 = vadd.f32 %v150, %v209
  %v214 = vadd.f32 %v153, %v209
  %v215 = vadd.f32 %v158, %v209
  %v216 = vadd.f32 %v161, %v209
  %v217 = vadd.f32 %v166, %v209
  %v218 = vadd.f32 %v169, %v209
  %v219 = vadd.f32 %v174, %v209
  %v220 = vadd.f32 %v177, %v209
  %v221 = vadd.f32 %v182, %v209
  %v222 = vadd.f32 %v185, %v209
  %v223 = vadd.f32 %v190, %v209
  %v224 = vadd.f32 %v193, %v209
  %v225 = vadd.f32 %v198, %v209
  %v226 = vadd.f32 %v201, %v209
  %v227 = vld [vmem:[%s3] sm:$0xff]
  %v228 = vld [vmem:[%s3 + $0x8] sm:$0xff]
  %v229 = vld [vmem:[%s3 + $0x10] sm:$0xff]
  %v230 = vld [vmem:[%s3 + $0x18] sm:$0xff]
  %v231 = vld [vmem:[%s3 + $0x20] sm:$0xff]
  %v232 = vld [vmem:[%s3 + $0x28] sm:$0xff]
  %v233 = vld [vmem:[%s3 + $0x30] sm:$0xff]
  %v234 = vld [vmem:[%s3 + $0x38] sm:$0xff]
  %v235 = vadd.f32 %v211, %v227
  %v236 = vadd.f32 %v212, %v228
  %v237 = vadd.f32 %v213, %v229
  %v238 = vadd.f32 %v214, %v230
  %v239 = vadd.f32 %v215, %v231
  %v240 = vadd.f32 %v216, %v232
  %v241 = vadd.f32 %v217, %v233
  %v242 = vadd.f32 %v218, %v234
  %v243 = vadd.f32 %v219, %v227
  %v244 = vadd.f32 %v220, %v228
  %v245 = vadd.f32 %v221, %v229
  %v246 = vadd.f32 %v222, %v230
  %v247 = vadd.f32 %v223, %v231
  %v248 = vadd.f32 %v224, %v232
  %v249 = vadd.f32 %v225, %v233
  %v250 = vadd.f32 %v226, %v234
  %251 = vst [vmem:[%s4] sm:$0xff] %v235
  %252 = vst [vmem:[%s4 + $0x8] sm:$0xff] %v236
  %253 = vst [vmem:[%s4 + $0x10] sm:$0xff] %v237
  %254 = vst [vmem:[%s4 + $0x18] sm:$0xff] %v238
  %255 = vst [vmem:[%s4 + $0x20] sm:$0xff] %v239
  %256 = vst [vmem:[%s4 + $0x28] sm:$0xff] %v240
  %257 = vst [vmem:[%s4 + $0x30] sm:$0xff] %v241
  %258 = vst [vmem:[%s4 + $0x38] sm:$0xff] %v242
  %259 = vst [vmem:[%s4 + $0x40] sm:$0xff] %v243
  %260 = vst [vmem:[%s4 + $0x48] sm:$0xff] %v244
  %261 = vst [vmem:[%s4 + $0x50] sm:$0xff] %v245
  %262 = vst [vmem:[%s4 + $0x58] sm:$0xff] %v246
  %263 = vst [vmem:[%s4 + $0x60] sm:$0xff] %v247
  %264 = vst [vmem:[%s4 + $0x68] sm:$0xff] %v248
  %265 = vst [vmem:[%s4 + $0x70] sm:$0xff] %v249
  %266 = vst [vmem:[%s4 + $0x78] sm:$0xff] %v250
  // Predicated region
  $region18: #{dtqn_forward.3} parent=0 // pred_check
    _
  $region19: #{dtqn_forward.3} parent=0 // pred_check_branch
    %268 = sbr.rel (0) target = $region21
  $region20: #{dtqn_forward.3} parent=0 // pred_region
    _
  $region21: #{dtqn_forward.3} parent=0 // pred_fallthru
    _
  // Predicated region
  $region22: #{dtqn_forward.3} parent=0 // pred_check
    _
  $region23: #{dtqn_forward.3} parent=0 // pred_check_branch
    %270 = sbr.rel (0) target = $region25
  $region24: #{dtqn_forward.3} parent=0 // pred_region
    _
  $region25: #{dtqn_forward.3} parent=0 // pred_fallthru
    _

// kernel: dtqn_forward.5
$region0: #{dtqn_forward.5}
  #allocation0 [shape = 'u32[]', space=smem, size = 0x4, offset = 0x4, fixed_abs, tag = 'smem constant byte address 0x4 - core index']
  #allocation1 [shape = 'u32[144,128]{1,0:T(1,128)}', space=vmem, size = 0x12000, scoped, tag = 'internal scratch']
  %s0 = inlined_call_operand.vmem [shape: f32[2,64,128], index: 0, kind: input, shape index: {}]
  %s1 = inlined_call_operand.vmem [shape: f32[1,128], index: 1, kind: input, shape index: {}]
  %s2 = inlined_call_operand.vmem [shape: bf16[128,128], index: 2, kind: input, shape index: {}]
  %s3 = inlined_call_operand.vmem [shape: f32[1,128], index: 3, kind: input, shape index: {}]
  %s4 = inlined_call_operand.vmem [shape: bf16[128,64], index: 4, kind: input, shape index: {}]
  %s5 = inlined_call_operand.vmem [shape: f32[1,64], index: 5, kind: input, shape index: {}]
  %s6 = inlined_call_operand.vmem [shape: bf16[64,64], index: 6, kind: input, shape index: {}]
  %s7 = inlined_call_operand.vmem [shape: f32[1,64], index: 7, kind: input, shape index: {}]
  %s8 = inlined_call_operand.vmem [shape: bf16[64,6], index: 8, kind: input, shape index: {}]
  %s9 = inlined_call_operand.vmem [shape: f32[1,6], index: 9, kind: input, shape index: {}]
  %s10 = inlined_call_operand.hbm [shape: f32[2,6], index: 10, kind: output, shape index: {}]
  %s11 = sld [smem:[#allocation0]]
  $region50: #{dtqn_forward.5} parent=0
    _
  %s13 = ssub.s32 1, %s11
  %s14 = scalar_select 0, %s13, %s11
  $region1: #{dtqn_forward.5} parent=0
    #allocation2 [shape = 'u8[1024]{0}', space=vmem, size = 0x400, scoped, tag = 'output window, operand 0, single buffered']
    #allocation3 [shape = 's32[1]{0}', space=sflag, size = 0x4, scoped, tag = 'scoped memory for dtqn_forward.5']
    %15 = vsyncpa [#allocation3], 0
    // Predicated region
    $region2: #{dtqn_forward.5} parent=1 // pred_check
      _
    $region3: #{dtqn_forward.5} parent=1 // pred_check_branch
      %17 = sbr.rel (0) target = $region5
    $region4: #{dtqn_forward.5} parent=1 // pred_region
      _
    $region5: #{dtqn_forward.5} parent=1 // pred_fallthru
      _
    // Predicated region
    $region6: #{dtqn_forward.5} parent=1 // pred_check
      _
    $region7: #{dtqn_forward.5} parent=1 // pred_check_branch
      %19 = sbr.rel (0) target = $region9
    $region8: #{dtqn_forward.5} parent=1 // pred_region
      _
    $region9: #{dtqn_forward.5} parent=1 // pred_fallthru
      _
    // Predicated region
    $region10: #{dtqn_forward.5} parent=1 // pred_check
      _
    $region11: #{dtqn_forward.5} parent=1 // pred_check_branch
      %21 = sbr.rel (0) target = $region13
    $region12: #{dtqn_forward.5} parent=1 // pred_region
      _
    $region13: #{dtqn_forward.5} parent=1 // pred_fallthru
      _
    // Predicated region
    $region14: #{dtqn_forward.5} parent=1 // pred_check
      _
    $region15: #{dtqn_forward.5} parent=1 // pred_check_branch
      %23 = sbr.rel (0) target = $region17
    $region16: #{dtqn_forward.5} parent=1 // pred_region
      _
    $region17: #{dtqn_forward.5} parent=1 // pred_fallthru
      _
    // Predicated region
    $region18: #{dtqn_forward.5} parent=1 // pred_check
      _
    $region19: #{dtqn_forward.5} parent=1 // pred_check_branch
      %25 = sbr.rel (0) target = $region21
    $region20: #{dtqn_forward.5} parent=1 // pred_region
      _
    $region21: #{dtqn_forward.5} parent=1 // pred_fallthru
      _
    // Predicated region
    $region22: #{dtqn_forward.5} parent=1 // pred_check
      _
    $region23: #{dtqn_forward.5} parent=1 // pred_check_branch
      %27 = sbr.rel (0) target = $region25
    $region24: #{dtqn_forward.5} parent=1 // pred_region
      _
    $region25: #{dtqn_forward.5} parent=1 // pred_fallthru
      _
    // Predicated region
    $region26: #{dtqn_forward.5} parent=1 // pred_check
      _
    $region27: #{dtqn_forward.5} parent=1 // pred_check_branch
      %29 = sbr.rel (0) target = $region29
    $region28: #{dtqn_forward.5} parent=1 // pred_region
      _
    $region29: #{dtqn_forward.5} parent=1 // pred_fallthru
      _
    // Predicated region
    $region30: #{dtqn_forward.5} parent=1 // pred_check
      _
    $region31: #{dtqn_forward.5} parent=1 // pred_check_branch
      %31 = sbr.rel (0) target = $region33
    $region32: #{dtqn_forward.5} parent=1 // pred_region
      _
    $region33: #{dtqn_forward.5} parent=1 // pred_fallthru
      _
    // Predicated region
    $region34: #{dtqn_forward.5} parent=1 // pred_check
      _
    $region35: #{dtqn_forward.5} parent=1 // pred_check_branch
      %33 = sbr.rel (0) target = $region37
    $region36: #{dtqn_forward.5} parent=1 // pred_region
      _
    $region37: #{dtqn_forward.5} parent=1 // pred_fallthru
      _
    // Predicated region
    $region38: #{dtqn_forward.5} parent=1 // pred_check
      _
    $region39: #{dtqn_forward.5} parent=1 // pred_check_branch
      %35 = sbr.rel (0) target = $region41
    $region40: #{dtqn_forward.5} parent=1 // pred_region
      _
    $region41: #{dtqn_forward.5} parent=1 // pred_fallthru
      _
    %v37 = vld [vmem:[%s0] sm:$0xff]
    %v38 = vld [vmem:[%s0 + $0x8] sm:$0xff]
    %v39 = vld [vmem:[%s0 + $0x10] sm:$0xff]
    %v40 = vld [vmem:[%s0 + $0x18] sm:$0xff]
    %v41 = vld [vmem:[%s0 + $0x20] sm:$0xff]
    %v42 = vld [vmem:[%s0 + $0x28] sm:$0xff]
    %v43 = vld [vmem:[%s0 + $0x30] sm:$0xff]
    %v44 = vld [vmem:[%s0 + $0x38] sm:$0xff]
    %v45 = vld [vmem:[%s0 + $0x40] sm:$0xff]
    %v46 = vld [vmem:[%s0 + $0x48] sm:$0xff]
    %v47 = vld [vmem:[%s0 + $0x50] sm:$0xff]
    %v48 = vld [vmem:[%s0 + $0x58] sm:$0xff]
    %v49 = vld [vmem:[%s0 + $0x60] sm:$0xff]
    %v50 = vld [vmem:[%s0 + $0x68] sm:$0xff]
    %v51 = vld [vmem:[%s0 + $0x70] sm:$0xff]
    %v52 = vld [vmem:[%s0 + $0x78] sm:$0xff]
    %v53 = vld [vmem:[%s1] sm:$0x1]
    %v55 = vlaneseq
    %v56 = vshrl.u32 %v55, 7
    %v57 = vsub.s32 0, %v56
    %v58 = vrot.slane %v53, %v57
    %v60 = vmul.f32 %v37, %v58
    %v61 = vmul.f32 %v38, %v58
    %v62 = vmul.f32 %v39, %v58
    %v63 = vmul.f32 %v40, %v58
    %v64 = vmul.f32 %v41, %v58
    %v65 = vmul.f32 %v42, %v58
    %v66 = vmul.f32 %v43, %v58
    %v67 = vmul.f32 %v44, %v58
    %v68 = vmul.f32 %v45, %v58
    %v69 = vmul.f32 %v46, %v58
    %v70 = vmul.f32 %v47, %v58
    %v71 = vmul.f32 %v48, %v58
    %v72 = vmul.f32 %v49, %v58
    %v73 = vmul.f32 %v50, %v58
    %v74 = vmul.f32 %v51, %v58
    %v75 = vmul.f32 %v52, %v58
    %76 = vadd.xlane.f32.xlu0 %v60
    %v77 = vpop.xlane.xlu0 %76
    %78 = vadd.xlane.f32.xlu0 %v61
    %v79 = vpop.xlane.xlu0 %78
    %80 = vadd.xlane.f32.xlu0 %v62
    %v81 = vpop.xlane.xlu0 %80
    %82 = vadd.xlane.f32.xlu0 %v63
    %v83 = vpop.xlane.xlu0 %82
    %84 = vadd.xlane.f32.xlu0 %v64
    %v85 = vpop.xlane.xlu0 %84
    %86 = vadd.xlane.f32.xlu0 %v65
    %v87 = vpop.xlane.xlu0 %86
    %88 = vadd.xlane.f32.xlu0 %v66
    %v89 = vpop.xlane.xlu0 %88
    %90 = vadd.xlane.f32.xlu0 %v67
    %v91 = vpop.xlane.xlu0 %90
    %92 = vadd.xlane.f32.xlu0 %v68
    %v93 = vpop.xlane.xlu0 %92
    %94 = vadd.xlane.f32.xlu0 %v69
    %v95 = vpop.xlane.xlu0 %94
    %96 = vadd.xlane.f32.xlu0 %v70
    %v97 = vpop.xlane.xlu0 %96
    %98 = vadd.xlane.f32.xlu0 %v71
    %v99 = vpop.xlane.xlu0 %98
    %100 = vadd.xlane.f32.xlu0 %v72
    %v101 = vpop.xlane.xlu0 %100
    %102 = vadd.xlane.f32.xlu0 %v73
    %v103 = vpop.xlane.xlu0 %102
    %104 = vadd.xlane.f32.xlu0 %v74
    %v105 = vpop.xlane.xlu0 %104
    %106 = vadd.xlane.f32.xlu0 %v75
    %v107 = vpop.xlane.xlu0 %106
    %v108 = vmax.f32 %v77, %v81
    %v109 = vmax.f32 %v79, %v83
    %v110 = vmax.f32 %v108, %v85
    %v111 = vmax.f32 %v109, %v87
    %v112 = vmax.f32 %v110, %v89
    %v113 = vmax.f32 %v111, %v91
    %v114 = vmax.f32 %v112, %v113
    %v115 = vrot.slane %v114, 4
    %v116 = vmax.f32 %v114, %v115
    %v117 = vrot.slane %v116, 2
    %v118 = vmax.f32 %v116, %v117
    %v119 = vrot.slane %v118, 1
    %v120 = vmax.f32 %v118, %v119
    %v121 = vmax.f32 %v93, %v97
    %v122 = vmax.f32 %v95, %v99
    %v123 = vmax.f32 %v121, %v101
    %v124 = vmax.f32 %v122, %v103
    %v125 = vmax.f32 %v123, %v105
    %v126 = vmax.f32 %v124, %v107
    %v127 = vmax.f32 %v125, %v126
    %v128 = vrot.slane %v127, 4
    %v129 = vmax.f32 %v127, %v128
    %v130 = vrot.slane %v129, 2
    %v131 = vmax.f32 %v129, %v130
    %v132 = vrot.slane %v131, 1
    %v133 = vmax.f32 %v131, %v132
    %v134 = vsub.f32 %v77, %v120
    %v135 = vsub.f32 %v79, %v120
    %v136 = vsub.f32 %v81, %v120
    %v137 = vsub.f32 %v83, %v120
    %v138 = vsub.f32 %v85, %v120
    %v139 = vsub.f32 %v87, %v120
    %v140 = vsub.f32 %v89, %v120
    %v141 = vsub.f32 %v91, %v120
    %v142 = vsub.f32 %v93, %v133
    %v143 = vsub.f32 %v95, %v133
    %v144 = vsub.f32 %v97, %v133
    %v145 = vsub.f32 %v99, %v133
    %v146 = vsub.f32 %v101, %v133
    %v147 = vsub.f32 %v103, %v133
    %v148 = vsub.f32 %v105, %v133
    %v149 = vsub.f32 %v107, %v133
    %v150 = vmul.f32 %v134, 1.442695
    %v151 = vpow.pop %v150
    %v152 = vmul.f32 %v135, 1.442695
    %v153 = vpow.pop %v152
    %v154 = vmul.f32 %v136, 1.442695
    %v155 = vpow.pop %v154
    %v156 = vmul.f32 %v137, 1.442695
    %v157 = vpow.pop %v156
    %v158 = vmul.f32 %v138, 1.442695
    %v159 = vpow.pop %v158
    %v160 = vmul.f32 %v139, 1.442695
    %v161 = vpow.pop %v160
    %v162 = vmul.f32 %v140, 1.442695
    %v163 = vpow.pop %v162
    %v164 = vmul.f32 %v141, 1.442695
    %v165 = vpow.pop %v164
    %v166 = vmul.f32 %v142, 1.442695
    %v167 = vpow.pop %v166
    %v168 = vmul.f32 %v143, 1.442695
    %v169 = vpow.pop %v168
    %v170 = vmul.f32 %v144, 1.442695
    %v171 = vpow.pop %v170
    %v172 = vmul.f32 %v145, 1.442695
    %v173 = vpow.pop %v172
    %v174 = vmul.f32 %v146, 1.442695
    %v175 = vpow.pop %v174
    %v176 = vmul.f32 %v147, 1.442695
    %v177 = vpow.pop %v176
    %v178 = vmul.f32 %v148, 1.442695
    %v179 = vpow.pop %v178
    %v180 = vmul.f32 %v149, 1.442695
    %v181 = vpow.pop %v180
    %v182 = vadd.f32 %v151, %v153
    %v183 = vadd.f32 %v182, %v155
    %v184 = vadd.f32 %v183, %v157
    %v185 = vadd.f32 %v184, %v159
    %v186 = vadd.f32 %v185, %v161
    %v187 = vadd.f32 %v186, %v163
    %v188 = vadd.f32 %v187, %v165
    %v189 = vrot.slane %v188, 4
    %v190 = vadd.f32 %v188, %v189
    %v191 = vrot.slane %v190, 2
    %v192 = vadd.f32 %v190, %v191
    %v193 = vrot.slane %v192, 1
    %v194 = vadd.f32 %v192, %v193
    %v195 = vadd.f32 %v167, %v169
    %v196 = vadd.f32 %v195, %v171
    %v197 = vadd.f32 %v196, %v173
    %v198 = vadd.f32 %v197, %v175
    %v199 = vadd.f32 %v198, %v177
    %v200 = vadd.f32 %v199, %v179
    %v201 = vadd.f32 %v200, %v181
    %v202 = vrot.slane %v201, 4
    %v203 = vadd.f32 %v201, %v202
    %v204 = vrot.slane %v203, 2
    %v205 = vadd.f32 %v203, %v204
    %v206 = vrot.slane %v205, 1
    %v207 = vadd.f32 %v205, %v206
    %v208 = vrcp.pop %v194
    %v209 = vrcp.pop %v207
    %v210 = vmul.f32 %v151, %v208
    %v211 = vmul.f32 %v153, %v208
    %v212 = vmul.f32 %v155, %v208
    %v213 = vmul.f32 %v157, %v208
    %v214 = vmul.f32 %v159, %v208
    %v215 = vmul.f32 %v161, %v208
    %v216 = vmul.f32 %v163, %v208
    %v217 = vmul.f32 %v165, %v208
    %v218 = vmul.f32 %v167, %v209
    %v219 = vmul.f32 %v169, %v209
    %v220 = vmul.f32 %v171, %v209
    %v221 = vmul.f32 %v173, %v209
    %v222 = vmul.f32 %v175, %v209
    %v223 = vmul.f32 %v177, %v209
    %v224 = vmul.f32 %v179, %v209
    %v225 = vmul.f32 %v181, %v209
    %v226 = vmul.f32 %v37, %v210
    %v227 = vmul.f32 %v38, %v211
    %v228 = vmul.f32 %v39, %v212
    %v229 = vmul.f32 %v40, %v213
    %v230 = vmul.f32 %v41, %v214
    %v231 = vmul.f32 %v42, %v215
    %v232 = vmul.f32 %v43, %v216
    %v233 = vmul.f32 %v44, %v217
    %v234 = vmul.f32 %v45, %v218
    %v235 = vmul.f32 %v46, %v219
    %v236 = vmul.f32 %v47, %v220
    %v237 = vmul.f32 %v48, %v221
    %v238 = vmul.f32 %v49, %v222
    %v239 = vmul.f32 %v50, %v223
    %v240 = vmul.f32 %v51, %v224
    %v241 = vmul.f32 %v52, %v225
    %v242 = vadd.f32 %v226, %v227
    %v243 = vadd.f32 %v242, %v228
    %v244 = vadd.f32 %v243, %v229
    %v245 = vadd.f32 %v244, %v230
    %v246 = vadd.f32 %v245, %v231
    %v247 = vadd.f32 %v246, %v232
    %v248 = vadd.f32 %v247, %v233
    %v249 = vrot.slane %v248, 4
    %v250 = vadd.f32 %v248, %v249
    %v251 = vrot.slane %v250, 2
    %v252 = vadd.f32 %v250, %v251
    %v253 = vrot.slane %v252, 1
    %v254 = vadd.f32 %v252, %v253
    %v255 = vadd.f32 %v234, %v235
    %v256 = vadd.f32 %v255, %v236
    %v257 = vadd.f32 %v256, %v237
    %v258 = vadd.f32 %v257, %v238
    %v259 = vadd.f32 %v258, %v239
    %v260 = vadd.f32 %v259, %v240
    %v261 = vadd.f32 %v260, %v241
    %v262 = vrot.slane %v261, 4
    %v263 = vadd.f32 %v261, %v262
    %v264 = vrot.slane %v263, 2
    %v265 = vadd.f32 %v263, %v264
    %v266 = vrot.slane %v265, 1
    %v267 = vadd.f32 %v265, %v266
    %v268 = vpack.c.bf16 %v254, %v254
    %v269 = vpack.c.bf16 %v267, %v267
    %v270 = vld [vmem:[%s2] sm:$0xf]
    %v271 = vld [vmem:[%s2 + $0x4] sm:$0xf]
    %v272 = vld [vmem:[%s2 + $0x8] sm:$0xf]
    %v273 = vld [vmem:[%s2 + $0xc] sm:$0xf]
    %v274 = vld [vmem:[%s2 + $0x10] sm:$0xf]
    %v275 = vld [vmem:[%s2 + $0x14] sm:$0xf]
    %v276 = vld [vmem:[%s2 + $0x18] sm:$0xf]
    %v277 = vld [vmem:[%s2 + $0x1c] sm:$0xf]
    %v278 = vld [vmem:[%s2 + $0x20] sm:$0xf]
    %v279 = vld [vmem:[%s2 + $0x24] sm:$0xf]
    %v280 = vld [vmem:[%s2 + $0x28] sm:$0xf]
    %v281 = vld [vmem:[%s2 + $0x2c] sm:$0xf]
    %v282 = vld [vmem:[%s2 + $0x30] sm:$0xf]
    %v283 = vld [vmem:[%s2 + $0x34] sm:$0xf]
    %v284 = vld [vmem:[%s2 + $0x38] sm:$0xf]
    %v285 = vld [vmem:[%s2 + $0x3c] sm:$0xf]
    %v286 = vld [vmem:[%s3] sm:$0x1]
    %v288 = vlaneseq
    %v289 = vshrl.u32 %v288, 7
    %v290 = vsub.s32 0, %v289
    %v291 = vrot.slane %v286, %v290
    %v295 = vunpack.c.l.b16 %v268
    %v296 = vunpack.c.l.b16 %v269
    %vm297 = vcmask 1041409
    %v298 = vsel %vm297, %v296, %v295
    %v299 = vpack.c.b16 %v298, %v298
    %v317 = vunpack.c.l.b16 %v270
    %v318 = vunpack.c.l.b16 %v271
    %v319 = vunpack.c.l.b16 %v272
    %v320 = vunpack.c.l.b16 %v273
    %v321 = vunpack.c.l.b16 %v274
    %v322 = vunpack.c.l.b16 %v275
    %v323 = vunpack.c.l.b16 %v276
    %v324 = vunpack.c.l.b16 %v277
    %v325 = vunpack.c.l.b16 %v278
    %v326 = vunpack.c.l.b16 %v279
    %v327 = vunpack.c.l.b16 %v280
    %v328 = vunpack.c.l.b16 %v281
    %v329 = vunpack.c.l.b16 %v282
    %v330 = vunpack.c.l.b16 %v283
    %v331 = vunpack.c.l.b16 %v284
    %v332 = vunpack.c.l.b16 %v285
    %v333 = vpack.c.b16 %v318, %v317
    %v334 = vpack.c.b16 %v320, %v319
    %v335 = vpack.c.b16 %v322, %v321
    %v336 = vpack.c.b16 %v324, %v323
    %v337 = vpack.c.b16 %v326, %v325
    %v338 = vpack.c.b16 %v328, %v327
    %v339 = vpack.c.b16 %v330, %v329
    %v340 = vpack.c.b16 %v332, %v331
    %349 = vmatprep.subr.bf16.mxu0 0
    %350 = vmatpush1.bf16.msra.mxu0 %v333
    %351 = vmatprep.subr.bf16.mxu0 0
    %352 = vmatpush1.bf16.msra.mxu0 %v334
    %353 = vmatprep.subr.bf16.mxu0 0
    %354 = vmatpush1.bf16.msra.mxu0 %v335
    %355 = vmatprep.subr.bf16.mxu0 0
    %356 = vmatpush1.bf16.msra.mxu0 %v336
    %357 = vmatprep.subr.bf16.mxu0 0
    %358 = vmatpush1.bf16.msra.mxu0 %v337
    %359 = vmatprep.subr.bf16.mxu0 0
    %360 = vmatpush1.bf16.msra.mxu0 %v338
    %361 = vmatprep.subr.bf16.mxu0 0
    %362 = vmatpush1.bf16.msra.mxu0 %v339
    %363 = vmatprep.subr.bf16.mxu0 0
    %364 = vmatpush1.bf16.msra.mxu0 %v340
    %365 = vmatprep.subr.bf16.mxu0 0
    %366 = vmatpush1.bf16.msra.mxu0 0
    %367 = vmatprep.subr.bf16.mxu0 0
    %368 = vmatpush1.bf16.msra.mxu0 0
    %369 = vmatprep.subr.bf16.mxu0 0
    %370 = vmatpush1.bf16.msra.mxu0 0
    %371 = vmatprep.subr.bf16.mxu0 0
    %372 = vmatpush1.bf16.msra.mxu0 0
    %373 = vmatprep.subr.bf16.mxu0 0
    %374 = vmatpush1.bf16.msra.mxu0 0
    %375 = vmatprep.subr.bf16.mxu0 0
    %376 = vmatpush1.bf16.msra.mxu0 0
    %377 = vmatprep.subr.bf16.mxu0 0
    %378 = vmatpush1.bf16.msra.mxu0 0
    %379 = vmatprep.subr.bf16.mxu0 0
    %380 = vmatpush1.bf16.msra.mxu0 0
    %381 = vmatprep.mubr.bf16.mxu0 0
    %382 = vmatmul.mubr.bf16.gmra.mrb[0].mxu0 %v299
    %v383 = vpop.f32.mrb[0].mxu0
    %v384 = vadd.f32 %v291, %v383
    %v385 = vpop.f32.mrb[0].mxu0
    %v386 = vpop.f32.mrb[0].mxu0
    %v387 = vpop.f32.mrb[0].mxu0
    %388 = vdwg.mxu0
    %v389 = vmax.f32 %v384, 0.0
    %v390 = vpack.c.bf16 %v389, %v389
    %v391 = vld [vmem:[%s4] sm:$0xf]
    %v392 = vld [vmem:[%s4 + $0x4] sm:$0xf]
    %v393 = vld [vmem:[%s4 + $0x8] sm:$0xf]
    %v394 = vld [vmem:[%s4 + $0xc] sm:$0xf]
    %v395 = vld [vmem:[%s4 + $0x10] sm:$0xf]
    %v396 = vld [vmem:[%s4 + $0x14] sm:$0xf]
    %v397 = vld [vmem:[%s4 + $0x18] sm:$0xf]
    %v398 = vld [vmem:[%s4 + $0x1c] sm:$0xf]
    %v399 = vld [vmem:[%s4 + $0x20] sm:$0xf]
    %v400 = vld [vmem:[%s4 + $0x24] sm:$0xf]
    %v401 = vld [vmem:[%s4 + $0x28] sm:$0xf]
    %v402 = vld [vmem:[%s4 + $0x2c] sm:$0xf]
    %v403 = vld [vmem:[%s4 + $0x30] sm:$0xf]
    %v404 = vld [vmem:[%s4 + $0x34] sm:$0xf]
    %v405 = vld [vmem:[%s4 + $0x38] sm:$0xf]
    %v406 = vld [vmem:[%s4 + $0x3c] sm:$0xf]
    %v407 = vld [vmem:[%s5] sm:$0x1]
    %v409 = vlaneseq
    %v410 = vshrl.u32 %v409, 7
    %v411 = vsub.s32 0, %v410
    %v412 = vrot.slane %v407, %v411
    %v430 = vunpack.c.l.b16 %v391
    %v431 = vunpack.c.l.b16 %v392
    %v432 = vunpack.c.l.b16 %v393
    %v433 = vunpack.c.l.b16 %v394
    %v434 = vunpack.c.l.b16 %v395
    %v435 = vunpack.c.l.b16 %v396
    %v436 = vunpack.c.l.b16 %v397
    %v437 = vunpack.c.l.b16 %v398
    %v438 = vunpack.c.l.b16 %v399
    %v439 = vunpack.c.l.b16 %v400
    %v440 = vunpack.c.l.b16 %v401
    %v441 = vunpack.c.l.b16 %v402
    %v442 = vunpack.c.l.b16 %v403
    %v443 = vunpack.c.l.b16 %v404
    %v444 = vunpack.c.l.b16 %v405
    %v445 = vunpack.c.l.b16 %v406
    %v446 = vpack.c.b16 %v431, %v430
    %v447 = vpack.c.b16 %v433, %v432
    %v448 = vpack.c.b16 %v435, %v434
    %v449 = vpack.c.b16 %v437, %v436
    %v450 = vpack.c.b16 %v439, %v438
    %v451 = vpack.c.b16 %v441, %v440
    %v452 = vpack.c.b16 %v443, %v442
    %v453 = vpack.c.b16 %v445, %v444
    %462 = vmatprep.subr.bf16.mxu0 0
    %463 = vmatpush1.bf16.msra.mxu0 %v446
    %464 = vmatprep.subr.bf16.mxu0 0
    %465 = vmatpush1.bf16.msra.mxu0 %v447
    %466 = vmatprep.subr.bf16.mxu0 0
    %467 = vmatpush1.bf16.msra.mxu0 %v448
    %468 = vmatprep.subr.bf16.mxu0 0
    %469 = vmatpush1.bf16.msra.mxu0 %v449
    %470 = vmatprep.subr.bf16.mxu0 0
    %471 = vmatpush1.bf16.msra.mxu0 %v450
    %472 = vmatprep.subr.bf16.mxu0 0
    %473 = vmatpush1.bf16.msra.mxu0 %v451
    %474 = vmatprep.subr.bf16.mxu0 0
    %475 = vmatpush1.bf16.msra.mxu0 %v452
    %476 = vmatprep.subr.bf16.mxu0 0
    %477 = vmatpush1.bf16.msra.mxu0 %v453
    %478 = vmatprep.subr.bf16.mxu0 0
    %479 = vmatpush1.bf16.msra.mxu0 0
    %480 = vmatprep.subr.bf16.mxu0 0
    %481 = vmatpush1.bf16.msra.mxu0 0
    %482 = vmatprep.subr.bf16.mxu0 0
    %483 = vmatpush1.bf16.msra.mxu0 0
    %484 = vmatprep.subr.bf16.mxu0 0
    %485 = vmatpush1.bf16.msra.mxu0 0
    %486 = vmatprep.subr.bf16.mxu0 0
    %487 = vmatpush1.bf16.msra.mxu0 0
    %488 = vmatprep.subr.bf16.mxu0 0
    %489 = vmatpush1.bf16.msra.mxu0 0
    %490 = vmatprep.subr.bf16.mxu0 0
    %491 = vmatpush1.bf16.msra.mxu0 0
    %492 = vmatprep.subr.bf16.mxu0 0
    %493 = vmatpush1.bf16.msra.mxu0 0
    %494 = vmatprep.mubr.bf16.mxu0 0
    %495 = vmatmul.mubr.bf16.gmra.mrb[0].mxu0 %v390
    %v496 = vpop.f32.mrb[0].mxu0
    %v497 = vadd.f32 %v412, %v496
    %v498 = vpop.f32.mrb[0].mxu0
    %v499 = vpop.f32.mrb[0].mxu0
    %v500 = vpop.f32.mrb[0].mxu0
    %501 = vdwg.mxu0
    %v502 = vmax.f32 %v497, 0.0
    %v503 = vpack.c.bf16 %v502, %v502
    %v504 = vld [vmem:[%s6] sm:$0xf]
    %v505 = vld [vmem:[%s6 + $0x4] sm:$0xf]
    %v506 = vld [vmem:[%s6 + $0x8] sm:$0xf]
    %v507 = vld [vmem:[%s6 + $0xc] sm:$0xf]
    %v508 = vld [vmem:[%s6 + $0x10] sm:$0xf]
    %v509 = vld [vmem:[%s6 + $0x14] sm:$0xf]
    %v510 = vld [vmem:[%s6 + $0x18] sm:$0xf]
    %v511 = vld [vmem:[%s6 + $0x1c] sm:$0xf]
    %v512 = vld [vmem:[%s7] sm:$0x1]
    %v514 = vlaneseq
    %v515 = vshrl.u32 %v514, 7
    %v516 = vsub.s32 0, %v515
    %v517 = vrot.slane %v512, %v516
    %v527 = vunpack.c.l.b16 %v504
    %v528 = vunpack.c.l.b16 %v505
    %v529 = vunpack.c.l.b16 %v506
    %v530 = vunpack.c.l.b16 %v507
    %v531 = vunpack.c.l.b16 %v508
    %v532 = vunpack.c.l.b16 %v509
    %v533 = vunpack.c.l.b16 %v510
    %v534 = vunpack.c.l.b16 %v511
    %v535 = vpack.c.b16 %v528, %v527
    %v536 = vpack.c.b16 %v530, %v529
    %v537 = vpack.c.b16 %v532, %v531
    %v538 = vpack.c.b16 %v534, %v533
    %vm543 = vcmask 523264
    %v545 = vsel %vm543, %v503, 0
    %547 = vmatprep.subr.bf16.mxu0 0
    %548 = vmatpush1.bf16.msra.mxu0 %v535
    %549 = vmatprep.subr.bf16.mxu0 0
    %550 = vmatpush1.bf16.msra.mxu0 %v536
    %551 = vmatprep.subr.bf16.mxu0 0
    %552 = vmatpush1.bf16.msra.mxu0 %v537
    %553 = vmatprep.subr.bf16.mxu0 0
    %554 = vmatpush1.bf16.msra.mxu0 %v538
    %555 = vmatprep.subr.bf16.mxu0 0
    %556 = vmatpush1.bf16.msra.mxu0 0
    %557 = vmatprep.subr.bf16.mxu0 0
    %558 = vmatpush1.bf16.msra.mxu0 0
    %559 = vmatprep.subr.bf16.mxu0 0
    %560 = vmatpush1.bf16.msra.mxu0 0
    %561 = vmatprep.subr.bf16.mxu0 0
    %562 = vmatpush1.bf16.msra.mxu0 0
    %563 = vmatprep.subr.bf16.mxu0 0
    %564 = vmatpush1.bf16.msra.mxu0 0
    %565 = vmatprep.subr.bf16.mxu0 0
    %566 = vmatpush1.bf16.msra.mxu0 0
    %567 = vmatprep.subr.bf16.mxu0 0
    %568 = vmatpush1.bf16.msra.mxu0 0
    %569 = vmatprep.subr.bf16.mxu0 0
    %570 = vmatpush1.bf16.msra.mxu0 0
    %571 = vmatprep.subr.bf16.mxu0 0
    %572 = vmatpush1.bf16.msra.mxu0 0
    %573 = vmatprep.subr.bf16.mxu0 0
    %574 = vmatpush1.bf16.msra.mxu0 0
    %575 = vmatprep.subr.bf16.mxu0 0
    %576 = vmatpush1.bf16.msra.mxu0 0
    %577 = vmatprep.subr.bf16.mxu0 0
    %578 = vmatpush1.bf16.msra.mxu0 0
    %579 = vmatprep.mubr.bf16.mxu0 0
    %580 = vmatmul.mubr.bf16.gmra.mrb[0].mxu0 %v545
    %v581 = vpop.f32.mrb[0].mxu0
    %v582 = vadd.f32 %v517, %v581
    %v583 = vpop.f32.mrb[0].mxu0
    %v584 = vpop.f32.mrb[0].mxu0
    %v585 = vpop.f32.mrb[0].mxu0
    %586 = vdwg.mxu0
    %v587 = vmax.f32 %v582, 0.0
    %v588 = vpack.c.bf16 %v587, %v587
    %v589 = vld [vmem:[%s8] sm:$0xf]
    %v590 = vld [vmem:[%s8 + $0x4] sm:$0xf]
    %v591 = vld [vmem:[%s8 + $0x8] sm:$0xf]
    %v592 = vld [vmem:[%s8 + $0xc] sm:$0xf]
    %v593 = vld [vmem:[%s8 + $0x10] sm:$0xf]
    %v594 = vld [vmem:[%s8 + $0x14] sm:$0xf]
    %v595 = vld [vmem:[%s8 + $0x18] sm:$0xf]
    %v596 = vld [vmem:[%s8 + $0x1c] sm:$0xf]
    %v597 = vld [vmem:[%s9] sm:$0x1]
    %v599 = vlaneseq
    %v600 = vshrl.u32 %v599, 7
    %v601 = vsub.s32 0, %v600
    %v602 = vrot.slane %v597, %v601
    %v612 = vunpack.c.l.b16 %v589
    %v613 = vunpack.c.l.b16 %v590
    %v614 = vunpack.c.l.b16 %v591
    %v615 = vunpack.c.l.b16 %v592
    %v616 = vunpack.c.l.b16 %v593
    %v617 = vunpack.c.l.b16 %v594
    %v618 = vunpack.c.l.b16 %v595
    %v619 = vunpack.c.l.b16 %v596
    %v620 = vpack.c.b16 %v613, %v612
    %v621 = vpack.c.b16 %v615, %v614
    %v622 = vpack.c.b16 %v617, %v616
    %v623 = vpack.c.b16 %v619, %v618
    %v629 = vsel %vm543, %v588, 0
    %631 = vmatprep.subr.bf16.mxu0 0
    %632 = vmatpush1.bf16.msra.mxu0 %v620
    %633 = vmatprep.subr.bf16.mxu0 0
    %634 = vmatpush1.bf16.msra.mxu0 %v621
    %635 = vmatprep.subr.bf16.mxu0 0
    %636 = vmatpush1.bf16.msra.mxu0 %v622
    %637 = vmatprep.subr.bf16.mxu0 0
    %638 = vmatpush1.bf16.msra.mxu0 %v623
    %639 = vmatprep.subr.bf16.mxu0 0
    %640 = vmatpush1.bf16.msra.mxu0 0
    %641 = vmatprep.subr.bf16.mxu0 0
    %642 = vmatpush1.bf16.msra.mxu0 0
    %643 = vmatprep.subr.bf16.mxu0 0
    %644 = vmatpush1.bf16.msra.mxu0 0
    %645 = vmatprep.subr.bf16.mxu0 0
    %646 = vmatpush1.bf16.msra.mxu0 0
    %647 = vmatprep.subr.bf16.mxu0 0
    %648 = vmatpush1.bf16.msra.mxu0 0
    %649 = vmatprep.subr.bf16.mxu0 0
    %650 = vmatpush1.bf16.msra.mxu0 0
    %651 = vmatprep.subr.bf16.mxu0 0
    %652 = vmatpush1.bf16.msra.mxu0 0
    %653 = vmatprep.subr.bf16.mxu0 0
    %654 = vmatpush1.bf16.msra.mxu0 0
    %655 = vmatprep.subr.bf16.mxu0 0
    %656 = vmatpush1.bf16.msra.mxu0 0
    %657 = vmatprep.subr.bf16.mxu0 0
    %658 = vmatpush1.bf16.msra.mxu0 0
    %659 = vmatprep.subr.bf16.mxu0 0
    %660 = vmatpush1.bf16.msra.mxu0 0
    %661 = vmatprep.subr.bf16.mxu0 0
    %662 = vmatpush1.bf16.msra.mxu0 0
    %663 = vmatprep.mubr.bf16.mxu0 0
    %664 = vmatmul.mubr.bf16.gmra.mrb[0].mxu0 %v629
    %v665 = vpop.f32.mrb[0].mxu0
    %v666 = vadd.f32 %v602, %v665
    %v667 = vpop.f32.mrb[0].mxu0
    %v668 = vpop.f32.mrb[0].mxu0
    %v669 = vpop.f32.mrb[0].mxu0
    %670 = vdwg.mxu0
    %vm671 = vcmask 41984
    %672 = vst.msk [vmem:[#allocation2] sm:$0x3] %vm671, %v666
    // Predicated region
    $region42: #{dtqn_forward.5} parent=1 // pred_check
      _
    $region43: #{dtqn_forward.5} parent=1 // pred_check_branch
      %674 = sbr.rel (0) target = $region45
    $region44: #{dtqn_forward.5} parent=1 // pred_region
      %s676 = ssub.s32 32, 32
      %677 = vsyncadd [#allocation3], %s676
      %s679 = sshll.u32 [#allocation2], 4
      %s680 = int_to_ptr.vmem [resolvable:$true] %s679
      %682 = dma.vmem_to_hbm [thread:$0]  %s680, 32, %s10, [#allocation3]
    $region45: #{dtqn_forward.5} parent=1 // pred_fallthru
      _
    // Predicated region
    $region46: #{dtqn_forward.5} parent=1 // pred_check
      _
    $region47: #{dtqn_forward.5} parent=1 // pred_check_branch
      %684 = sbr.rel (0) target = $region49
    $region48: #{dtqn_forward.5} parent=1 // pred_region
      %685 = dma.done [#allocation3], 32
    $region49: #{dtqn_forward.5} parent=1 // pred_fallthru
      _
    %686 = vsyncpa [#allocation3], 1

// kernel: dtqn_forward.4
$region0: #{dtqn_forward.4}
  #allocation0 [shape = 'u32[]', space=smem, size = 0x4, offset = 0x4, fixed_abs, tag = 'smem constant byte address 0x4 - core index']
  #allocation1 [shape = 'u32[144,128]{1,0:T(1,128)}', space=vmem, size = 0x12000, scoped, tag = 'internal scratch']
  %s0 = inlined_call_operand.vmem [shape: f32[2,64,128], index: 0, kind: input, shape index: {}]
  %s1 = inlined_call_operand.vmem [shape: f32[1,128], index: 1, kind: input, shape index: {}]
  %s2 = inlined_call_operand.vmem [shape: f32[1,128], index: 2, kind: input, shape index: {}]
  %s3 = inlined_call_operand.vmem [shape: bf16[128,128], index: 3, kind: input, shape index: {}]
  %s4 = inlined_call_operand.vmem [shape: f32[1,128], index: 4, kind: input, shape index: {}]
  %s5 = inlined_call_operand.vmem [shape: bf16[128,128], index: 5, kind: input, shape index: {}]
  %s6 = inlined_call_operand.vmem [shape: f32[1,128], index: 6, kind: input, shape index: {}]
  %s7 = inlined_call_operand.vmem [shape: bf16[128,128], index: 7, kind: input, shape index: {}]
  %s8 = inlined_call_operand.vmem [shape: f32[1,128], index: 8, kind: input, shape index: {}]
  %s9 = inlined_call_operand.vmem [shape: bf16[128,8], index: 9, kind: input, shape index: {}]
  %s10 = inlined_call_operand.vmem [shape: bf16[8,128], index: 10, kind: input, shape index: {}]
  %s11 = inlined_call_operand.vmem [shape: bf16[128,128], index: 11, kind: input, shape index: {}]
  %s12 = inlined_call_operand.vmem [shape: f32[1,128], index: 12, kind: input, shape index: {}]
  %s13 = inlined_call_operand.vmem [shape: bf16[128,128], index: 13, kind: input, shape index: {}]
  %s14 = inlined_call_operand.vmem [shape: bf16[128,128], index: 14, kind: input, shape index: {}]
  %s15 = inlined_call_operand.vmem [shape: f32[1,128], index: 15, kind: input, shape index: {}]
  %s16 = inlined_call_operand.vmem [shape: f32[1,128], index: 16, kind: input, shape index: {}]
  %s17 = inlined_call_operand.vmem [shape: f32[1,128], index: 17, kind: input, shape index: {}]
  %s18 = inlined_call_operand.vmem [shape: bf16[128,256], index: 18, kind: input, shape index: {}]
  %s19 = inlined_call_operand.vmem [shape: f32[1,256], index: 19, kind: input, shape index: {}]
  %s20 = inlined_call_operand.vmem [shape: bf16[256,128], index: 20, kind: input, shape index: {}]
  %s21 = inlined_call_operand.vmem [shape: f32[1,128], index: 21, kind: input, shape index: {}]
  %s22 = inlined_call_operand.vmem [shape: bf16[128,128], index: 22, kind: input, shape index: {}]
  %s23 = inlined_call_operand.vmem [shape: bf16[128,128], index: 23, kind: input, shape index: {}]
  %s24 = inlined_call_operand.vmem [shape: f32[1,128], index: 24, kind: input, shape index: {}]
  %s25 = inlined_call_operand.vmem [shape: f32[1,128], index: 25, kind: input, shape index: {}]
  %s26 = inlined_call_operand.vmem [shape: f32[1,128], index: 26, kind: input, shape index: {}]
  %s27 = inlined_call_operand.vmem [shape: f32[2,64,128], index: 27, kind: output, shape index: {}]
  %s28 = sld [smem:[#allocation0]]
  $region213: #{dtqn_forward.4} parent=0
    _
  %s30 = ssub.s32 1, %s28
  %s31 = scalar_select 0, %s30, %s28
  $region1: #{dtqn_forward.4} parent=0
    #allocation2 [shape = 'u8[65536]{0}', space=vmem, size = 0x10000, scoped, tag = 'input window, operand 0']
    #allocation3 [shape = 'u8[65536]{0}', space=vmem, size = 0x10000, scoped, tag = 'output window, operand 0']
    loop: start=0, step=1, limit=4
    $region2: #{dtqn_forward.4} parent=1 // loop_pre_header
      _
    $region3: #{dtqn_forward.4} parent=1 // loop_header
      %s33 = sphi 0, %s37
      %p34 = scmp.ge.s32.totalorder %s33, 4
      %s43 = sphi 0, %s45
      %s46 = sphi 0, %s43
      %s47 = sphi 0, %s46
      %s63 = sphi 0, %s47
      %s67 = sphi 0, %s67
      %s69 = sphi 0, %s67
      %s70 = sphi 0, %s69
      %s84 = sphi 0, %s70
      %s88 = sphi 0, %s88
      %s90 = sphi 0, %s88
      %s91 = sphi 0, %s90
      %s105 = sphi 0, %s91
      %s109 = sphi 0, %s109
      %s111 = sphi 0, %s109
      %s112 = sphi 0, %s111
      %s126 = sphi 0, %s112
      %s130 = sphi 0, %s130
      %s132 = sphi 0, %s130
      %s133 = sphi 0, %s132
      %s147 = sphi 0, %s133
      %s151 = sphi 0, %s151
      %s153 = sphi 0, %s151
      %s154 = sphi 0, %s153
      %s168 = sphi 0, %s154
      %s172 = sphi 0, %s172
      %s174 = sphi 0, %s172
      %s175 = sphi 0, %s174
      %s189 = sphi 0, %s175
      %s193 = sphi 0, %s193
      %s195 = sphi 0, %s193
      %s196 = sphi 0, %s195
      %s210 = sphi 0, %s196
      %s214 = sphi 0, %s214
      %s216 = sphi 0, %s214
      %s217 = sphi 0, %s216
      %s231 = sphi 0, %s217
      %s235 = sphi 0, %s235
      %s237 = sphi 0, %s235
      %s238 = sphi 0, %s237
      %s252 = sphi 0, %s238
      %s256 = sphi 0, %s256
      %s258 = sphi 0, %s256
      %s259 = sphi 0, %s258
      %s273 = sphi 0, %s259
      %s277 = sphi 0, %s277
      %s279 = sphi 0, %s277
      %s280 = sphi 0, %s279
      %s294 = sphi 0, %s280
      %s298 = sphi 0, %s298
      %s300 = sphi 0, %s298
      %s301 = sphi 0, %s300
      %s315 = sphi 0, %s301
      %s319 = sphi 0, %s319
      %s321 = sphi 0, %s319
      %s322 = sphi 0, %s321
      %s336 = sphi 0, %s322
      %s340 = sphi 0, %s340
      %s342 = sphi 0, %s340
      %s343 = sphi 0, %s342
      %s357 = sphi 0, %s343
      %s361 = sphi 0, %s361
      %s363 = sphi 0, %s361
      %s364 = sphi 0, %s363
      %s378 = sphi 0, %s364
      %s382 = sphi 0, %s382
      %s384 = sphi 0, %s382
      %s385 = sphi 0, %s384
      %s399 = sphi 0, %s385
      %s403 = sphi 0, %s403
      %s405 = sphi 0, %s403
      %s406 = sphi 0, %s405
      %s420 = sphi 0, %s406
      %s424 = sphi 0, %s424
      %s426 = sphi 0, %s424
      %s427 = sphi 0, %s426
      %s441 = sphi 0, %s427
      %s445 = sphi 0, %s445
      %s447 = sphi 0, %s445
      %s448 = sphi 0, %s447
      %s462 = sphi 0, %s448
      %s466 = sphi 0, %s466
      %s468 = sphi 0, %s466
      %s469 = sphi 0, %s468
      %s483 = sphi 0, %s469
      %s487 = sphi 0, %s487
      %s489 = sphi 0, %s487
      %s490 = sphi 0, %s489
      %s504 = sphi 0, %s490
      %s508 = sphi 0, %s508
      %s510 = sphi 0, %s508
      %s511 = sphi 0, %s510
      %s525 = sphi 0, %s511
      %s529 = sphi 0, %s529
      %s531 = sphi 0, %s529
      %s532 = sphi 0, %s531
      %s546 = sphi 0, %s532
      %s550 = sphi 0, %s550
      %s552 = sphi 0, %s550
      %s553 = sphi 0, %s552
      %s567 = sphi 0, %s553
      %s571 = sphi 0, %s571
      %s573 = sphi 0, %s571
      %s574 = sphi 0, %s573
      %s588 = sphi 0, %s574
      %s592 = sphi 0, %s592
      %s594 = sphi 0, %s592
      %s595 = sphi 0, %s594
      %s609 = sphi 0, %s595
      %s615 = sphi 0, %s617
      %s618 = sphi 0, %s615
      %s619 = sphi 0, %s618
      %s635 = sphi 0, %s619
    $region4: #{dtqn_forward.4} parent=1 // loop_header_branch
      %36 = sbr.rel (%p34) target = $region8
    $region5: #{dtqn_forward.4} parent=1 // loop_body
      %s38 = ssub.s32 %s33, 1
      %s39 = ssub.s32 %s33, 2
      %s40 = sadd.s32 %s33, 1
      %s41 = ssub.s32 %s33, %s40
      %p42 = scmp.eq.s32.totalorder %s41, 0
      %s44 = sadd.s32 %s43, 1
      %s45 = scalar_select %p42, %s43, %s44
      %p48 = pneg %p42
      %p49 = scmp.eq.s32.totalorder %s33, 1
      %p50 = por %p48, %p49
      %p51 = scmp.ne.s32.totalorder %s43, %s46
      %p52 = scmp.eq.s32.totalorder %s33, 0
      %p53 = por %p51, %p52
      %p54 = scmp.ne.s32.totalorder %s43, %s46
      %p55 = scmp.eq.s32.totalorder %s38, 1
      %p56 = por %p54, %p55
      %p57 = scmp.ne.s32.totalorder %s46, %s47
      %p58 = scmp.eq.s32.totalorder %s38, 0
      %p59 = por %p57, %p58
      %p60 = scmp.ne.s32.totalorder %s46, %s47
      %p61 = scmp.eq.s32.totalorder %s39, 1
      %p62 = por %p60, %p61
      %p64 = scmp.ne.s32.totalorder %s47, %s63
      %p65 = scmp.eq.s32.totalorder %s39, 0
      %p66 = por %p64, %p65
      %s68 = sadd.s32 %s67, 1
      %p71 = scmp.eq.s32.totalorder %s33, 1
      %p72 = scmp.ne.s32.totalorder %s67, %s69
      %p73 = scmp.eq.s32.totalorder %s33, 0
      %p74 = por %p72, %p73
      %p75 = scmp.ne.s32.totalorder %s67, %s69
      %p76 = scmp.eq.s32.totalorder %s38, 1
      %p77 = por %p75, %p76
      %p78 = scmp.ne.s32.totalorder %s69, %s70
      %p79 = scmp.eq.s32.totalorder %s38, 0
      %p80 = por %p78, %p79
      %p81 = scmp.ne.s32.totalorder %s69, %s70
      %p82 = scmp.eq.s32.totalorder %s39, 1
      %p83 = por %p81, %p82
      %p85 = scmp.ne.s32.totalorder %s70, %s84
      %p86 = scmp.eq.s32.totalorder %s39, 0
      %p87 = por %p85, %p86
      %s89 = sadd.s32 %s88, 1
      %p92 = scmp.eq.s32.totalorder %s33, 1
      %p93 = scmp.ne.s32.totalorder %s88, %s90
      %p94 = scmp.eq.s32.totalorder %s33, 0
      %p95 = por %p93, %p94
      %p96 = scmp.ne.s32.totalorder %s88, %s90
      %p97 = scmp.eq.s32.totalorder %s38, 1
      %p98 = por %p96, %p97
      %p99 = scmp.ne.s32.totalorder %s90, %s91
      %p100 = scmp.eq.s32.totalorder %s38, 0
      %p101 = por %p99, %p100
      %p102 = scmp.ne.s32.totalorder %s90, %s91
      %p103 = scmp.eq.s32.totalorder %s39, 1
      %p104 = por %p102, %p103
      %p106 = scmp.ne.s32.totalorder %s91, %s105
      %p107 = scmp.eq.s32.totalorder %s39, 0
      %p108 = por %p106, %p107
      %s110 = sadd.s32 %s109, 1
      %p113 = scmp.eq.s32.totalorder %s33, 1
      %p114 = scmp.ne.s32.totalorder %s109, %s111
      %p115 = scmp.eq.s32.totalorder %s33, 0
      %p116 = por %p114, %p115
      %p117 = scmp.ne.s32.totalorder %s109, %s111
      %p118 = scmp.eq.s32.totalorder %s38, 1
      %p119 = por %p117, %p118
      %p120 = scmp.ne.s32.totalorder %s111, %s112
      %p121 = scmp.eq.s32.totalorder %s38, 0
      %p122 = por %p120, %p121
      %p123 = scmp.ne.s32.totalorder %s111, %s112
      %p124 = scmp.eq.s32.totalorder %s39, 1
      %p125 = por %p123, %p124
      %p127 = scmp.ne.s32.totalorder %s112, %s126
      %p128 = scmp.eq.s32.totalorder %s39, 0
      %p129 = por %p127, %p128
      %s131 = sadd.s32 %s130, 1
      %p134 = scmp.eq.s32.totalorder %s33, 1
      %p135 = scmp.ne.s32.totalorder %s130, %s132
      %p136 = scmp.eq.s32.totalorder %s33, 0
      %p137 = por %p135, %p136
      %p138 = scmp.ne.s32.totalorder %s130, %s132
      %p139 = scmp.eq.s32.totalorder %s38, 1
      %p140 = por %p138, %p139
      %p141 = scmp.ne.s32.totalorder %s132, %s133
      %p142 = scmp.eq.s32.totalorder %s38, 0
      %p143 = por %p141, %p142
      %p144 = scmp.ne.s32.totalorder %s132, %s133
      %p145 = scmp.eq.s32.totalorder %s39, 1
      %p146 = por %p144, %p145
      %p148 = scmp.ne.s32.totalorder %s133, %s147
      %p149 = scmp.eq.s32.totalorder %s39, 0
      %p150 = por %p148, %p149
      %s152 = sadd.s32 %s151, 1
      %p155 = scmp.eq.s32.totalorder %s33, 1
      %p156 = scmp.ne.s32.totalorder %s151, %s153
      %p157 = scmp.eq.s32.totalorder %s33, 0
      %p158 = por %p156, %p157
      %p159 = scmp.ne.s32.totalorder %s151, %s153
      %p160 = scmp.eq.s32.totalorder %s38, 1
      %p161 = por %p159, %p160
      %p162 = scmp.ne.s32.totalorder %s153, %s154
      %p163 = scmp.eq.s32.totalorder %s38, 0
      %p164 = por %p162, %p163
      %p165 = scmp.ne.s32.totalorder %s153, %s154
      %p166 = scmp.eq.s32.totalorder %s39, 1
      %p167 = por %p165, %p166
      %p169 = scmp.ne.s32.totalorder %s154, %s168
      %p170 = scmp.eq.s32.totalorder %s39, 0
      %p171 = por %p169, %p170
      %s173 = sadd.s32 %s172, 1
      %p176 = scmp.eq.s32.totalorder %s33, 1
      %p177 = scmp.ne.s32.totalorder %s172, %s174
      %p178 = scmp.eq.s32.totalorder %s33, 0
      %p179 = por %p177, %p178
      %p180 = scmp.ne.s32.totalorder %s172, %s174
      %p181 = scmp.eq.s32.totalorder %s38, 1
      %p182 = por %p180, %p181
      %p183 = scmp.ne.s32.totalorder %s174, %s175
      %p184 = scmp.eq.s32.totalorder %s38, 0
      %p185 = por %p183, %p184
      %p186 = scmp.ne.s32.totalorder %s174, %s175
      %p187 = scmp.eq.s32.totalorder %s39, 1
      %p188 = por %p186, %p187
      %p190 = scmp.ne.s32.totalorder %s175, %s189
      %p191 = scmp.eq.s32.totalorder %s39, 0
      %p192 = por %p190, %p191
      %s194 = sadd.s32 %s193, 1
      %p197 = scmp.eq.s32.totalorder %s33, 1
      %p198 = scmp.ne.s32.totalorder %s193, %s195
      %p199 = scmp.eq.s32.totalorder %s33, 0
      %p200 = por %p198, %p199
      %p201 = scmp.ne.s32.totalorder %s193, %s195
      %p202 = scmp.eq.s32.totalorder %s38, 1
      %p203 = por %p201, %p202
      %p204 = scmp.ne.s32.totalorder %s195, %s196
      %p205 = scmp.eq.s32.totalorder %s38, 0
      %p206 = por %p204, %p205
      %p207 = scmp.ne.s32.totalorder %s195, %s196
      %p208 = scmp.eq.s32.totalorder %s39, 1
      %p209 = por %p207, %p208
      %p211 = scmp.ne.s32.totalorder %s196, %s210
      %p212 = scmp.eq.s32.totalorder %s39, 0
      %p213 = por %p211, %p212
      %s215 = sadd.s32 %s214, 1
      %p218 = scmp.eq.s32.totalorder %s33, 1
      %p219 = scmp.ne.s32.totalorder %s214, %s216
      %p220 = scmp.eq.s32.totalorder %s33, 0
      %p221 = por %p219, %p220
      %p222 = scmp.ne.s32.totalorder %s214, %s216
      %p223 = scmp.eq.s32.totalorder %s38, 1
      %p224 = por %p222, %p223
      %p225 = scmp.ne.s32.totalorder %s216, %s217
      %p226 = scmp.eq.s32.totalorder %s38, 0
      %p227 = por %p225, %p226
      %p228 = scmp.ne.s32.totalorder %s216, %s217
      %p229 = scmp.eq.s32.totalorder %s39, 1
      %p230 = por %p228, %p229
      %p232 = scmp.ne.s32.totalorder %s217, %s231
      %p233 = scmp.eq.s32.totalorder %s39, 0
      %p234 = por %p232, %p233
      %s236 = sadd.s32 %s235, 1
      %p239 = scmp.eq.s32.totalorder %s33, 1
      %p240 = scmp.ne.s32.totalorder %s235, %s237
      %p241 = scmp.eq.s32.totalorder %s33, 0
      %p242 = por %p240, %p241
      %p243 = scmp.ne.s32.totalorder %s235, %s237
      %p244 = scmp.eq.s32.totalorder %s38, 1
      %p245 = por %p243, %p244
      %p246 = scmp.ne.s32.totalorder %s237, %s238
      %p247 = scmp.eq.s32.totalorder %s38, 0
      %p248 = por %p246, %p247
      %p249 = scmp.ne.s32.totalorder %s237, %s238
      %p250 = scmp.eq.s32.totalorder %s39, 1
      %p251 = por %p249, %p250
      %p253 = scmp.ne.s32.totalorder %s238, %s252
      %p254 = scmp.eq.s32.totalorder %s39, 0
      %p255 = por %p253, %p254
      %s257 = sadd.s32 %s256, 1
      %p260 = scmp.eq.s32.totalorder %s33, 1
      %p261 = scmp.ne.s32.totalorder %s256, %s258
      %p262 = scmp.eq.s32.totalorder %s33, 0
      %p263 = por %p261, %p262
      %p264 = scmp.ne.s32.totalorder %s256, %s258
      %p265 = scmp.eq.s32.totalorder %s38, 1
      %p266 = por %p264, %p265
      %p267 = scmp.ne.s32.totalorder %s258, %s259
      %p268 = scmp.eq.s32.totalorder %s38, 0
      %p269 = por %p267, %p268
      %p270 = scmp.ne.s32.totalorder %s258, %s259
      %p271 = scmp.eq.s32.totalorder %s39, 1
      %p272 = por %p270, %p271
      %p274 = scmp.ne.s32.totalorder %s259, %s273
      %p275 = scmp.eq.s32.totalorder %s39, 0
      %p276 = por %p274, %p275
      %s278 = sadd.s32 %s277, 1
      %p281 = scmp.eq.s32.totalorder %s33, 1
      %p282 = scmp.ne.s32.totalorder %s277, %s279
      %p283 = scmp.eq.s32.totalorder %s33, 0
      %p284 = por %p282, %p283
      %p285 = scmp.ne.s32.totalorder %s277, %s279
      %p286 = scmp.eq.s32.totalorder %s38, 1
      %p287 = por %p285, %p286
      %p288 = scmp.ne.s32.totalorder %s279, %s280
      %p289 = scmp.eq.s32.totalorder %s38, 0
      %p290 = por %p288, %p289
      %p291 = scmp.ne.s32.totalorder %s279, %s280
      %p292 = scmp.eq.s32.totalorder %s39, 1
      %p293 = por %p291, %p292
      %p295 = scmp.ne.s32.totalorder %s280, %s294
      %p296 = scmp.eq.s32.totalorder %s39, 0
      %p297 = por %p295, %p296
      %s299 = sadd.s32 %s298, 1
      %p302 = scmp.eq.s32.totalorder %s33, 1
      %p303 = scmp.ne.s32.totalorder %s298, %s300
      %p304 = scmp.eq.s32.totalorder %s33, 0
      %p305 = por %p303, %p304
      %p306 = scmp.ne.s32.totalorder %s298, %s300
      %p307 = scmp.eq.s32.totalorder %s38, 1
      %p308 = por %p306, %p307
      %p309 = scmp.ne.s32.totalorder %s300, %s301
      %p310 = scmp.eq.s32.totalorder %s38, 0
      %p311 = por %p309, %p310
      %p312 = scmp.ne.s32.totalorder %s300, %s301
      %p313 = scmp.eq.s32.totalorder %s39, 1
      %p314 = por %p312, %p313
      %p316 = scmp.ne.s32.totalorder %s301, %s315
      %p317 = scmp.eq.s32.totalorder %s39, 0
      %p318 = por %p316, %p317
      %s320 = sadd.s32 %s319, 1
      %p323 = scmp.eq.s32.totalorder %s33, 1
      %p324 = scmp.ne.s32.totalorder %s319, %s321
      %p325 = scmp.eq.s32.totalorder %s33, 0
      %p326 = por %p324, %p325
      %p327 = scmp.ne.s32.totalorder %s319, %s321
      %p328 = scmp.eq.s32.totalorder %s38, 1
      %p329 = por %p327, %p328
      %p330 = scmp.ne.s32.totalorder %s321, %s322
      %p331 = scmp.eq.s32.totalorder %s38, 0
      %p332 = por %p330, %p331
      %p333 = scmp.ne.s32.totalorder %s321, %s322
      %p334 = scmp.eq.s32.totalorder %s39, 1
      %p335 = por %p333, %p334
      %p337 = scmp.ne.s32.totalorder %s322, %s336
      %p338 = scmp.eq.s32.totalorder %s39, 0
      %p339 = por %p337, %p338
      %s341 = sadd.s32 %s340, 1
      %p344 = scmp.eq.s32.totalorder %s33, 1
      %p345 = scmp.ne.s32.totalorder %s340, %s342
      %p346 = scmp.eq.s32.totalorder %s33, 0
      %p347 = por %p345, %p346
      %p348 = scmp.ne.s32.totalorder %s340, %s342
      %p349 = scmp.eq.s32.totalorder %s38, 1
      %p350 = por %p348, %p349
      %p351 = scmp.ne.s32.totalorder %s342, %s343
      %p352 = scmp.eq.s32.totalorder %s38, 0
      %p353 = por %p351, %p352
      %p354 = scmp.ne.s32.totalorder %s342, %s343
      %p355 = scmp.eq.s32.totalorder %s39, 1
      %p356 = por %p354, %p355
      %p358 = scmp.ne.s32.totalorder %s343, %s357
      %p359 = scmp.eq.s32.totalorder %s39, 0
      %p360 = por %p358, %p359
      %s362 = sadd.s32 %s361, 1
      %p365 = scmp.eq.s32.totalorder %s33, 1
      %p366 = scmp.ne.s32.totalorder %s361, %s363
      %p367 = scmp.eq.s32.totalorder %s33, 0
      %p368 = por %p366, %p367
      %p369 = scmp.ne.s32.totalorder %s361, %s363
      %p370 = scmp.eq.s32.totalorder %s38, 1
      %p371 = por %p369, %p370
      %p372 = scmp.ne.s32.totalorder %s363, %s364
      %p373 = scmp.eq.s32.totalorder %s38, 0
      %p374 = por %p372, %p373
      %p375 = scmp.ne.s32.totalorder %s363, %s364
      %p376 = scmp.eq.s32.totalorder %s39, 1
      %p377 = por %p375, %p376
      %p379 = scmp.ne.s32.totalorder %s364, %s378
      %p380 = scmp.eq.s32.totalorder %s39, 0
      %p381 = por %p379, %p380
      %s383 = sadd.s32 %s382, 1
      %p386 = scmp.eq.s32.totalorder %s33, 1
      %p387 = scmp.ne.s32.totalorder %s382, %s384
      %p388 = scmp.eq.s32.totalorder %s33, 0
      %p389 = por %p387, %p388
      %p390 = scmp.ne.s32.totalorder %s382, %s384
      %p391 = scmp.eq.s32.totalorder %s38, 1
      %p392 = por %p390, %p391
      %p393 = scmp.ne.s32.totalorder %s384, %s385
      %p394 = scmp.eq.s32.totalorder %s38, 0
      %p395 = por %p393, %p394
      %p396 = scmp.ne.s32.totalorder %s384, %s385
      %p397 = scmp.eq.s32.totalorder %s39, 1
      %p398 = por %p396, %p397
      %p400 = scmp.ne.s32.totalorder %s385, %s399
      %p401 = scmp.eq.s32.totalorder %s39, 0
      %p402 = por %p400, %p401
      %s404 = sadd.s32 %s403, 1
      %p407 = scmp.eq.s32.totalorder %s33, 1
      %p408 = scmp.ne.s32.totalorder %s403, %s405
      %p409 = scmp.eq.s32.totalorder %s33, 0
      %p410 = por %p408, %p409
      %p411 = scmp.ne.s32.totalorder %s403, %s405
      %p412 = scmp.eq.s32.totalorder %s38, 1
      %p413 = por %p411, %p412
      %p414 = scmp.ne.s32.totalorder %s405, %s406
      %p415 = scmp.eq.s32.totalorder %s38, 0
      %p416 = por %p414, %p415
      %p417 = scmp.ne.s32.totalorder %s405, %s406
      %p418 = scmp.eq.s32.totalorder %s39, 1
      %p419 = por %p417, %p418
      %p421 = scmp.ne.s32.totalorder %s406, %s420
      %p422 = scmp.eq.s32.totalorder %s39, 0
      %p423 = por %p421, %p422
      %s425 = sadd.s32 %s424, 1
      %p428 = scmp.eq.s32.totalorder %s33, 1
      %p429 = scmp.ne.s32.totalorder %s424, %s426
      %p430 = scmp.eq.s32.totalorder %s33, 0
      %p431 = por %p429, %p430
      %p432 = scmp.ne.s32.totalorder %s424, %s426
      %p433 = scmp.eq.s32.totalorder %s38, 1
      %p434 = por %p432, %p433
      %p435 = scmp.ne.s32.totalorder %s426, %s427
      %p436 = scmp.eq.s32.totalorder %s38, 0
      %p437 = por %p435, %p436
      %p438 = scmp.ne.s32.totalorder %s426, %s427
      %p439 = scmp.eq.s32.totalorder %s39, 1
      %p440 = por %p438, %p439
      %p442 = scmp.ne.s32.totalorder %s427, %s441
      %p443 = scmp.eq.s32.totalorder %s39, 0
      %p444 = por %p442, %p443
      %s446 = sadd.s32 %s445, 1
      %p449 = scmp.eq.s32.totalorder %s33, 1
      %p450 = scmp.ne.s32.totalorder %s445, %s447
      %p451 = scmp.eq.s32.totalorder %s33, 0
      %p452 = por %p450, %p451
      %p453 = scmp.ne.s32.totalorder %s445, %s447
      %p454 = scmp.eq.s32.totalorder %s38, 1
      %p455 = por %p453, %p454
      %p456 = scmp.ne.s32.totalorder %s447, %s448
      %p457 = scmp.eq.s32.totalorder %s38, 0
      %p458 = por %p456, %p457
      %p459 = scmp.ne.s32.totalorder %s447, %s448
      %p460 = scmp.eq.s32.totalorder %s39, 1
      %p461 = por %p459, %p460
      %p463 = scmp.ne.s32.totalorder %s448, %s462
      %p464 = scmp.eq.s32.totalorder %s39, 0
      %p465 = por %p463, %p464
      %s467 = sadd.s32 %s466, 1
      %p470 = scmp.eq.s32.totalorder %s33, 1
      %p471 = scmp.ne.s32.totalorder %s466, %s468
      %p472 = scmp.eq.s32.totalorder %s33, 0
      %p473 = por %p471, %p472
      %p474 = scmp.ne.s32.totalorder %s466, %s468
      %p475 = scmp.eq.s32.totalorder %s38, 1
      %p476 = por %p474, %p475
      %p477 = scmp.ne.s32.totalorder %s468, %s469
      %p478 = scmp.eq.s32.totalorder %s38, 0
      %p479 = por %p477, %p478
      %p480 = scmp.ne.s32.totalorder %s468, %s469
      %p481 = scmp.eq.s32.totalorder %s39, 1
      %p482 = por %p480, %p481
      %p484 = scmp.ne.s32.totalorder %s469, %s483
      %p485 = scmp.eq.s32.totalorder %s39, 0
      %p486 = por %p484, %p485
      %s488 = sadd.s32 %s487, 1
      %p491 = scmp.eq.s32.totalorder %s33, 1
      %p492 = scmp.ne.s32.totalorder %s487, %s489
      %p493 = scmp.eq.s32.totalorder %s33, 0
      %p494 = por %p492, %p493
      %p495 = scmp.ne.s32.totalorder %s487, %s489
      %p496 = scmp.eq.s32.totalorder %s38, 1
      %p497 = por %p495, %p496
      %p498 = scmp.ne.s32.totalorder %s489, %s490
      %p499 = scmp.eq.s32.totalorder %s38, 0
      %p500 = por %p498, %p499
      %p501 = scmp.ne.s32.totalorder %s489, %s490
      %p502 = scmp.eq.s32.totalorder %s39, 1
      %p503 = por %p501, %p502
      %p505 = scmp.ne.s32.totalorder %s490, %s504
      %p506 = scmp.eq.s32.totalorder %s39, 0
      %p507 = por %p505, %p506
      %s509 = sadd.s32 %s508, 1
      %p512 = scmp.eq.s32.totalorder %s33, 1
      %p513 = scmp.ne.s32.totalorder %s508, %s510
      %p514 = scmp.eq.s32.totalorder %s33, 0
      %p515 = por %p513, %p514
      %p516 = scmp.ne.s32.totalorder %s508, %s510
      %p517 = scmp.eq.s32.totalorder %s38, 1
      %p518 = por %p516, %p517
      %p519 = scmp.ne.s32.totalorder %s510, %s511
      %p520 = scmp.eq.s32.totalorder %s38, 0
      %p521 = por %p519, %p520
      %p522 = scmp.ne.s32.totalorder %s510, %s511
      %p523 = scmp.eq.s32.totalorder %s39, 1
      %p524 = por %p522, %p523
      %p526 = scmp.ne.s32.totalorder %s511, %s525
      %p527 = scmp.eq.s32.totalorder %s39, 0
      %p528 = por %p526, %p527
      %s530 = sadd.s32 %s529, 1
      %p533 = scmp.eq.s32.totalorder %s33, 1
      %p534 = scmp.ne.s32.totalorder %s529, %s531
      %p535 = scmp.eq.s32.totalorder %s33, 0
      %p536 = por %p534, %p535
      %p537 = scmp.ne.s32.totalorder %s529, %s531
      %p538 = scmp.eq.s32.totalorder %s38, 1
      %p539 = por %p537, %p538
      %p540 = scmp.ne.s32.totalorder %s531, %s532
      %p541 = scmp.eq.s32.totalorder %s38, 0
      %p542 = por %p540, %p541
      %p543 = scmp.ne.s32.totalorder %s531, %s532
      %p544 = scmp.eq.s32.totalorder %s39, 1
      %p545 = por %p543, %p544
      %p547 = scmp.ne.s32.totalorder %s532, %s546
      %p548 = scmp.eq.s32.totalorder %s39, 0
      %p549 = por %p547, %p548
      %s551 = sadd.s32 %s550, 1
      %p554 = scmp.eq.s32.totalorder %s33, 1
      %p555 = scmp.ne.s32.totalorder %s550, %s552
      %p556 = scmp.eq.s32.totalorder %s33, 0
      %p557 = por %p555, %p556
      %p558 = scmp.ne.s32.totalorder %s550, %s552
      %p559 = scmp.eq.s32.totalorder %s38, 1
      %p560 = por %p558, %p559
      %p561 = scmp.ne.s32.totalorder %s552, %s553
      %p562 = scmp.eq.s32.totalorder %s38, 0
      %p563 = por %p561, %p562
      %p564 = scmp.ne.s32.totalorder %s552, %s553
      %p565 = scmp.eq.s32.totalorder %s39, 1
      %p566 = por %p564, %p565
      %p568 = scmp.ne.s32.totalorder %s553, %s567
      %p569 = scmp.eq.s32.totalorder %s39, 0
      %p570 = por %p568, %p569
      %s572 = sadd.s32 %s571, 1
      %p575 = scmp.eq.s32.totalorder %s33, 1
      %p576 = scmp.ne.s32.totalorder %s571, %s573
      %p577 = scmp.eq.s32.totalorder %s33, 0
      %p578 = por %p576, %p577
      %p579 = scmp.ne.s32.totalorder %s571, %s573
      %p580 = scmp.eq.s32.totalorder %s38, 1
      %p581 = por %p579, %p580
      %p582 = scmp.ne.s32.totalorder %s573, %s574
      %p583 = scmp.eq.s32.totalorder %s38, 0
      %p584 = por %p582, %p583
      %p585 = scmp.ne.s32.totalorder %s573, %s574
      %p586 = scmp.eq.s32.totalorder %s39, 1
      %p587 = por %p585, %p586
      %p589 = scmp.ne.s32.totalorder %s574, %s588
      %p590 = scmp.eq.s32.totalorder %s39, 0
      %p591 = por %p589, %p590
      %s593 = sadd.s32 %s592, 1
      %p596 = scmp.eq.s32.totalorder %s33, 1
      %p597 = scmp.ne.s32.totalorder %s592, %s594
      %p598 = scmp.eq.s32.totalorder %s33, 0
      %p599 = por %p597, %p598
      %p600 = scmp.ne.s32.totalorder %s592, %s594
      %p601 = scmp.eq.s32.totalorder %s38, 1
      %p602 = por %p600, %p601
      %p603 = scmp.ne.s32.totalorder %s594, %s595
      %p604 = scmp.eq.s32.totalorder %s38, 0
      %p605 = por %p603, %p604
      %p606 = scmp.ne.s32.totalorder %s594, %s595
      %p607 = scmp.eq.s32.totalorder %s39, 1
      %p608 = por %p606, %p607
      %p610 = scmp.ne.s32.totalorder %s595, %s609
      %p611 = scmp.eq.s32.totalorder %s39, 0
      %p612 = por %p610, %p611
      %s613 = ssub.s32 %s33, %s40
      %p614 = scmp.eq.s32.totalorder %s613, 0
      %s616 = sadd.s32 %s615, 1
      %s617 = scalar_select %p614, %s615, %s616
      %p620 = pneg %p614
      %p621 = scmp.eq.s32.totalorder %s33, 1
      %p622 = por %p620, %p621
      %p623 = scmp.ne.s32.totalorder %s615, %s618
      %p624 = scmp.eq.s32.totalorder %s33, 0
      %p625 = por %p623, %p624
      %p626 = scmp.ne.s32.totalorder %s615, %s618
      %p627 = scmp.eq.s32.totalorder %s38, 1
      %p628 = por %p626, %p627
      %p629 = scmp.ne.s32.totalorder %s618, %s619
      %p630 = scmp.eq.s32.totalorder %s38, 0
      %p631 = por %p629, %p630
      %p632 = scmp.ne.s32.totalorder %s618, %s619
      %p633 = scmp.eq.s32.totalorder %s39, 1
      %p634 = por %p632, %p633
      %p636 = scmp.ne.s32.totalorder %s619, %s635
      %p637 = scmp.eq.s32.totalorder %s39, 0
      %p638 = por %p636, %p637
      %p639 = scmp.le.s32.totalorder 1, %s33
      %p640 = scmp.lt.s32.totalorder %s33, 3
      %p641 = pnand %p639, %p640
      %p642 = pneg %p641
      // Predicated region
      $region9: #{dtqn_forward.4} parent=5 // pred_check
        _
      $region10: #{dtqn_forward.4} parent=5 // pred_check_branch
        %644 = sbr.rel (%p641) target = $region12
      $region11: #{dtqn_forward.4} parent=5 // pred_region
        %s645 = ssub.s32 %s33, 1
        // Predicated region
        $region13: #{dtqn_forward.4} parent=11 // pred_check
          %p646 = pneg %p80
        $region14: #{dtqn_forward.4} parent=11 // pred_check_branch
          %648 = sbr.rel (%p646) target = $region16
        $region15: #{dtqn_forward.4} parent=11 // pred_region
          _
        $region16: #{dtqn_forward.4} parent=11 // pred_fallthru
          _
        // Predicated region
        $region17: #{dtqn_forward.4} parent=11 // pred_check
          %p649 = pneg %p101
        $region18: #{dtqn_forward.4} parent=11 // pred_check_branch
          %651 = sbr.rel (%p649) target = $region20
        $region19: #{dtqn_forward.4} parent=11 // pred_region
          _
        $region20: #{dtqn_forward.4} parent=11 // pred_fallthru
          _
        // Predicated region
        $region21: #{dtqn_forward.4} parent=11 // pred_check
          %p652 = pneg %p122
        $region22: #{dtqn_forward.4} parent=11 // pred_check_branch
          %654 = sbr.rel (%p652) target = $region24
        $region23: #{dtqn_forward.4} parent=11 // pred_region
          _
        $region24: #{dtqn_forward.4} parent=11 // pred_fallthru
          _
        // Predicated region
        $region25: #{dtqn_forward.4} parent=11 // pred_check
          %p655 = pneg %p143
        $region26: #{dtqn_forward.4} parent=11 // pred_check_branch
          %657 = sbr.rel (%p655) target = $region28
        $region27: #{dtqn_forward.4} parent=11 // pred_region
          _
        $region28: #{dtqn_forward.4} parent=11 // pred_fallthru
          _
        // Predicated region
        $region29: #{dtqn_forward.4} parent=11 // pred_check
          %p658 = pneg %p164
        $region30: #{dtqn_forward.4} parent=11 // pred_check_branch
          %660 = sbr.rel (%p658) target = $region32
        $region31: #{dtqn_forward.4} parent=11 // pred_region
          _
        $region32: #{dtqn_forward.4} parent=11 // pred_fallthru
          _
        // Predicated region
        $region33: #{dtqn_forward.4} parent=11 // pred_check
          %p661 = pneg %p185
        $region34: #{dtqn_forward.4} parent=11 // pred_check_branch
          %663 = sbr.rel (%p661) target = $region36
        $region35: #{dtqn_forward.4} parent=11 // pred_region
          _
        $region36: #{dtqn_forward.4} parent=11 // pred_fallthru
          _
        // Predicated region
        $region37: #{dtqn_forward.4} parent=11 // pred_check
          %p664 = pneg %p206
        $region38: #{dtqn_forward.4} parent=11 // pred_check_branch
          %666 = sbr.rel (%p664) target = $region40
        $region39: #{dtqn_forward.4} parent=11 // pred_region
          _
        $region40: #{dtqn_forward.4} parent=11 // pred_fallthru
          _
        // Predicated region
        $region41: #{dtqn_forward.4} parent=11 // pred_check
          %p667 = pneg %p227
        $region42: #{dtqn_forward.4} parent=11 // pred_check_branch
          %669 = sbr.rel (%p667) target = $region44
        $region43: #{dtqn_forward.4} parent=11 // pred_region
          _
        $region44: #{dtqn_forward.4} parent=11 // pred_fallthru
          _
        // Predicated region
        $region45: #{dtqn_forward.4} parent=11 // pred_check
          %p670 = pneg %p248
        $region46: #{dtqn_forward.4} parent=11 // pred_check_branch
          %672 = sbr.rel (%p670) target = $region48
        $region47: #{dtqn_forward.4} parent=11 // pred_region
          _
        $region48: #{dtqn_forward.4} parent=11 // pred_fallthru
          _
        // Predicated region
        $region49: #{dtqn_forward.4} parent=11 // pred_check
          %p673 = pneg %p269
        $region50: #{dtqn_forward.4} parent=11 // pred_check_branch
          %675 = sbr.rel (%p673) target = $region52
        $region51: #{dtqn_forward.4} parent=11 // pred_region
          _
        $region52: #{dtqn_forward.4} parent=11 // pred_fallthru
          _
        // Predicated region
        $region53: #{dtqn_forward.4} parent=11 // pred_check
          %p676 = pneg %p290
        $region54: #{dtqn_forward.4} parent=11 // pred_check_branch
          %678 = sbr.rel (%p676) target = $region56
        $region55: #{dtqn_forward.4} parent=11 // pred_region
          _
        $region56: #{dtqn_forward.4} parent=11 // pred_fallthru
          _
        // Predicated region
        $region57: #{dtqn_forward.4} parent=11 // pred_check
          %p679 = pneg %p311
        $region58: #{dtqn_forward.4} parent=11 // pred_check_branch
          %681 = sbr.rel (%p679) target = $region60
        $region59: #{dtqn_forward.4} parent=11 // pred_region
          _
        $region60: #{dtqn_forward.4} parent=11 // pred_fallthru
          _
        // Predicated region
        $region61: #{dtqn_forward.4} parent=11 // pred_check
          %p682 = pneg %p332
        $region62: #{dtqn_forward.4} parent=11 // pred_check_branch
          %684 = sbr.rel (%p682) target = $region64
        $region63: #{dtqn_forward.4} parent=11 // pred_region
          _
        $region64: #{dtqn_forward.4} parent=11 // pred_fallthru
          _
        // Predicated region
        $region65: #{dtqn_forward.4} parent=11 // pred_check
          %p685 = pneg %p353
        $region66: #{dtqn_forward.4} parent=11 // pred_check_branch
          %687 = sbr.rel (%p685) target = $region68
        $region67: #{dtqn_forward.4} parent=11 // pred_region
          _
        $region68: #{dtqn_forward.4} parent=11 // pred_fallthru
          _
        // Predicated region
        $region69: #{dtqn_forward.4} parent=11 // pred_check
          %p688 = pneg %p374
        $region70: #{dtqn_forward.4} parent=11 // pred_check_branch
          %690 = sbr.rel (%p688) target = $region72
        $region71: #{dtqn_forward.4} parent=11 // pred_region
          _
        $region72: #{dtqn_forward.4} parent=11 // pred_fallthru
          _
        // Predicated region
        $region73: #{dtqn_forward.4} parent=11 // pred_check
          %p691 = pneg %p395
        $region74: #{dtqn_forward.4} parent=11 // pred_check_branch
          %693 = sbr.rel (%p691) target = $region76
        $region75: #{dtqn_forward.4} parent=11 // pred_region
          _
        $region76: #{dtqn_forward.4} parent=11 // pred_fallthru
          _
        // Predicated region
        $region77: #{dtqn_forward.4} parent=11 // pred_check
          %p694 = pneg %p416
        $region78: #{dtqn_forward.4} parent=11 // pred_check_branch
          %696 = sbr.rel (%p694) target = $region80
        $region79: #{dtqn_forward.4} parent=11 // pred_region
          _
        $region80: #{dtqn_forward.4} parent=11 // pred_fallthru
          _
        // Predicated region
        $region81: #{dtqn_forward.4} parent=11 // pred_check
          %p697 = pneg %p437
        $region82: #{dtqn_forward.4} parent=11 // pred_check_branch
          %699 = sbr.rel (%p697) target = $region84
        $region83: #{dtqn_forward.4} parent=11 // pred_region
          _
        $region84: #{dtqn_forward.4} parent=11 // pred_fallthru
          _
        // Predicated region
        $region85: #{dtqn_forward.4} parent=11 // pred_check
          %p700 = pneg %p458
        $region86: #{dtqn_forward.4} parent=11 // pred_check_branch
          %702 = sbr.rel (%p700) target = $region88
        $region87: #{dtqn_forward.4} parent=11 // pred_region
          _
        $region88: #{dtqn_forward.4} parent=11 // pred_fallthru
          _
        // Predicated region
        $region89: #{dtqn_forward.4} parent=11 // pred_check
          %p703 = pneg %p479
        $region90: #{dtqn_forward.4} parent=11 // pred_check_branch
          %705 = sbr.rel (%p703) target = $region92
        $region91: #{dtqn_forward.4} parent=11 // pred_region
          _
        $region92: #{dtqn_forward.4} parent=11 // pred_fallthru
          _
        // Predicated region
        $region93: #{dtqn_forward.4} parent=11 // pred_check
          %p706 = pneg %p500
        $region94: #{dtqn_forward.4} parent=11 // pred_check_branch
          %708 = sbr.rel (%p706) target = $region96
        $region95: #{dtqn_forward.4} parent=11 // pred_region
          _
        $region96: #{dtqn_forward.4} parent=11 // pred_fallthru
          _
        // Predicated region
        $region97: #{dtqn_forward.4} parent=11 // pred_check
          %p709 = pneg %p521
        $region98: #{dtqn_forward.4} parent=11 // pred_check_branch
          %711 = sbr.rel (%p709) target = $region100
        $region99: #{dtqn_forward.4} parent=11 // pred_region
          _
        $region100: #{dtqn_forward.4} parent=11 // pred_fallthru
          _
        // Predicated region
        $region101: #{dtqn_forward.4} parent=11 // pred_check
          %p712 = pneg %p542
        $region102: #{dtqn_forward.4} parent=11 // pred_check_branch
          %714 = sbr.rel (%p712) target = $region104
        $region103: #{dtqn_forward.4} parent=11 // pred_region
          _
        $region104: #{dtqn_forward.4} parent=11 // pred_fallthru
          _
        // Predicated region
        $region105: #{dtqn_forward.4} parent=11 // pred_check
          %p715 = pneg %p563
        $region106: #{dtqn_forward.4} parent=11 // pred_check_branch
          %717 = sbr.rel (%p715) target = $region108
        $region107: #{dtqn_forward.4} parent=11 // pred_region
          _
        $region108: #{dtqn_forward.4} parent=11 // pred_fallthru
          _
        // Predicated region
        $region109: #{dtqn_forward.4} parent=11 // pred_check
          %p718 = pneg %p584
        $region110: #{dtqn_forward.4} parent=11 // pred_check_branch
          %720 = sbr.rel (%p718) target = $region112
        $region111: #{dtqn_forward.4} parent=11 // pred_region
          _
        $region112: #{dtqn_forward.4} parent=11 // pred_fallthru
          _
        // Predicated region
        $region113: #{dtqn_forward.4} parent=11 // pred_check
          %p721 = pneg %p605
        $region114: #{dtqn_forward.4} parent=11 // pred_check_branch
          %723 = sbr.rel (%p721) target = $region116
        $region115: #{dtqn_forward.4} parent=11 // pred_region
          _
        $region116: #{dtqn_forward.4} parent=11 // pred_fallthru
          _
      $region12: #{dtqn_forward.4} parent=5 // pred_fallthru
        _
      %p724 = scmp.lt.s32.totalorder %s33, 2
      // Predicated region
      $region117: #{dtqn_forward.4} parent=5 // pred_check
        %p725 = pneg %p724
      $region118: #{dtqn_forward.4} parent=5 // pred_check_branch
        %727 = sbr.rel (%p725) target = $region120
      $region119: #{dtqn_forward.4} parent=5 // pred_region
        // Predicated region
        $region121: #{dtqn_forward.4} parent=119 // pred_check
          %p728 = pneg %p53
        $region122: #{dtqn_forward.4} parent=119 // pred_check_branch
          %730 = sbr.rel (%p728) target = $region124
        $region123: #{dtqn_forward.4} parent=119 // pred_region
          %s731 = sand.u32 %s43, 1
          %s732 = sand.u32 %s43, 1
          %s733 = smul.addr %s732, 64
          %s734 = scalar_lea.vmem [#allocation2], %s733
          %s735 = smul.u32 4, %s33
          %s736 = smul.addr %s735, 8
          %s737 = scalar_lea.vmem %s0, %s736
          // Predicated region
          $region125: #{dtqn_forward.4} parent=123 // pred_check
            _
          $region126: #{dtqn_forward.4} parent=123 // pred_check_branch
            %739 = sbr.rel (0) target = $region128
          $region127: #{dtqn_forward.4} parent=123 // pred_region
            // Predicated region
            $region129: #{dtqn_forward.4} parent=127 // pred_check
              _
            $region130: #{dtqn_forward.4} parent=127 // pred_check_branch
              %741 = sbr.rel (0) target = $region132
            $region131: #{dtqn_forward.4} parent=127 // pred_region
              // Predicated region
              $region144: #{dtqn_forward.4} parent=131 // pred_check
                _
              $region145: #{dtqn_forward.4} parent=131 // pred_check_branch
                %770 = sbr.rel (0) target = $region147
              $region146: #{dtqn_forward.4} parent=131 // pred_region
                loop: start=0, step=1, limit=1
                $region148: #{dtqn_forward.4} parent=146 // loop_pre_header
                  _
                $region149: #{dtqn_forward.4} parent=146 // loop_header
                  %s772 = sphi 0, %s776
                  %p773 = scmp.ge.s32.totalorder %s772, 1
                  %s777 = sphi %s737, %s737
                  %s778 = sphi %s734, %s734
                $region150: #{dtqn_forward.4} parent=146 // loop_header_branch
                  %775 = sbr.rel (%p773) target = $region154
                $region151: #{dtqn_forward.4} parent=146 // loop_body
                  %v779 = vld [vmem:[%s777] sm:$0xff]
                  %780 = vst [vmem:[%s778] sm:$0xff] %v779
                  %v781 = vld [vmem:[%s777 + $0x8] sm:$0xff]
                  %782 = vst [vmem:[%s778 + $0x8] sm:$0xff] %v781
                  %v783 = vld [vmem:[%s777 + $0x10] sm:$0xff]
                  %784 = vst [vmem:[%s778 + $0x10] sm:$0xff] %v783
                  %v785 = vld [vmem:[%s777 + $0x18] sm:$0xff]
                  %786 = vst [vmem:[%s778 + $0x18] sm:$0xff] %v785
                  %v787 = vld [vmem:[%s777 + $0x40] sm:$0xff]
                  %788 = vst [vmem:[%s778 + $0x20] sm:$0xff] %v787
                  %v789 = vld [vmem:[%s777 + $0x48] sm:$0xff]
                  %790 = vst [vmem:[%s778 + $0x28] sm:$0xff] %v789
                  %v791 = vld [vmem:[%s777 + $0x50] sm:$0xff]
                  %792 = vst [vmem:[%s778 + $0x30] sm:$0xff] %v791
                  %v793 = vld [vmem:[%s777 + $0x58] sm:$0xff]
                  %794 = vst [vmem:[%s778 + $0x38] sm:$0xff] %v793
                $region152: #{dtqn_forward.4} parent=146 // loop_footer
                  %s776 = sadd.s32 1, %s772
                $region153: #{dtqn_forward.4} parent=146 // loop_footer_branch
                  %771 = sbr.rel target = $region149
                $region154: #{dtqn_forward.4} parent=146 // loop_exit
                  _
              $region147: #{dtqn_forward.4} parent=131 // pred_fallthru
                _
              // Predicated region
              $region155: #{dtqn_forward.4} parent=131 // pred_check
                _
              $region156: #{dtqn_forward.4} parent=131 // pred_check_branch
                %796 = sbr.rel target = $region158
              $region157: #{dtqn_forward.4} parent=131 // pred_region
                _
              $region158: #{dtqn_forward.4} parent=131 // pred_fallthru
                _
            $region132: #{dtqn_forward.4} parent=127 // pred_fallthru
              _
            // Predicated region
            $region133: #{dtqn_forward.4} parent=127 // pred_check
              _
            $region134: #{dtqn_forward.4} parent=127 // pred_check_branch
              %743 = sbr.rel target = $region136
            $region135: #{dtqn_forward.4} parent=127 // pred_region
              loop: start=0, step=1, limit=1
              $region137: #{dtqn_forward.4} parent=135 // loop_pre_header
                _
              $region138: #{dtqn_forward.4} parent=135 // loop_header
                %s746 = sphi 0, %s750
                %p747 = scmp.ge.s32.totalorder %s746, 1
                %s751 = sphi %s737, %s737
                %s752 = sphi %s734, %s734
              $region139: #{dtqn_forward.4} parent=135 // loop_header_branch
                %749 = sbr.rel (%p747) target = $region143
              $region140: #{dtqn_forward.4} parent=135 // loop_body
                %v753 = vld [vmem:[%s751] sm:$0xff]
                %754 = vst [vmem:[%s752] sm:$0xff] %v753
                %v755 = vld [vmem:[%s751 + $0x8] sm:$0xff]
                %756 = vst [vmem:[%s752 + $0x8] sm:$0xff] %v755
                %v757 = vld [vmem:[%s751 + $0x10] sm:$0xff]
                %758 = vst [vmem:[%s752 + $0x10] sm:$0xff] %v757
                %v759 = vld [vmem:[%s751 + $0x18] sm:$0xff]
                %760 = vst [vmem:[%s752 + $0x18] sm:$0xff] %v759
                %v761 = vld [vmem:[%s751 + $0x40] sm:$0xff]
                %762 = vst [vmem:[%s752 + $0x20] sm:$0xff] %v761
                %v763 = vld [vmem:[%s751 + $0x48] sm:$0xff]
                %764 = vst [vmem:[%s752 + $0x28] sm:$0xff] %v763
                %v765 = vld [vmem:[%s751 + $0x50] sm:$0xff]
                %766 = vst [vmem:[%s752 + $0x30] sm:$0xff] %v765
                %v767 = vld [vmem:[%s751 + $0x58] sm:$0xff]
                %768 = vst [vmem:[%s752 + $0x38] sm:$0xff] %v767
              $region141: #{dtqn_forward.4} parent=135 // loop_footer
                %s750 = sadd.s32 1, %s746
              $region142: #{dtqn_forward.4} parent=135 // loop_footer_branch
                %745 = sbr.rel target = $region138
              $region143: #{dtqn_forward.4} parent=135 // loop_exit
                _
            $region136: #{dtqn_forward.4} parent=127 // pred_fallthru
              _
          $region128: #{dtqn_forward.4} parent=123 // pred_fallthru
            _
          %797 = vnop
        $region124: #{dtqn_forward.4} parent=119 // pred_fallthru
          _
      $region120: #{dtqn_forward.4} parent=5 // pred_fallthru
        _
      %p798 = scmp.le.s32.totalorder 1, %s33
      %p799 = scmp.lt.s32.totalorder %s33, 3
      %p800 = pnand %p798, %p799
      %p801 = pneg %p800
      // Predicated region
      $region159: #{dtqn_forward.4} parent=5 // pred_check
        _
      $region160: #{dtqn_forward.4} parent=5 // pred_check_branch
        %803 = sbr.rel (%p800) target = $region162
      $region161: #{dtqn_forward.4} parent=5 // pred_region
        %s804 = ssub.s32 %s33, 1
        %s805 = sand.u32 %s46, 1
        %s806 = sand.u32 %s46, 1
        %s807 = smul.addr %s806, 64
        %s808 = scalar_lea.vmem [#allocation2], %s807
        // Predicated region
        $region163: #{dtqn_forward.4} parent=161 // pred_check
          %p809 = pneg %p59
        $region164: #{dtqn_forward.4} parent=161 // pred_check_branch
          %811 = sbr.rel (%p809) target = $region166
        $region165: #{dtqn_forward.4} parent=161 // pred_region
          _
        $region166: #{dtqn_forward.4} parent=161 // pred_fallthru
          _
        %s812 = sand.u32 %s46, 1
        %s813 = sand.u32 %s46, 1
        %s814 = smul.addr %s813, 64
        %s815 = scalar_lea.vmem [#allocation2], %s814
        %p816 = pneg %p59
        %p817 = pneg %p56
        %p818 = pneg %p80
        %p819 = pneg %p77
        %p820 = pneg %p101
        %p821 = pneg %p98
        %p822 = pneg %p122
        %p823 = pneg %p119
        %p824 = pneg %p143
        %p825 = pneg %p140
        %p826 = pneg %p164
        %p827 = pneg %p161
        %p828 = pneg %p185
        %p829 = pneg %p182
        %p830 = pneg %p206
        %p831 = pneg %p203
        %p832 = pneg %p227
        %p833 = pneg %p224
        %p834 = pneg %p248
        %p835 = pneg %p245
        %p836 = pneg %p269
        %p837 = pneg %p266
        %p838 = pneg %p290
        %p839 = pneg %p287
        %p840 = pneg %p311
        %p841 = pneg %p308
        %p842 = pneg %p332
        %p843 = pneg %p329
        %p844 = pneg %p353
        %p845 = pneg %p350
        %p846 = pneg %p374
        %p847 = pneg %p371
        %p848 = pneg %p395
        %p849 = pneg %p392
        %p850 = pneg %p416
        %p851 = pneg %p413
        %p852 = pneg %p437
        %p853 = pneg %p434
        %p854 = pneg %p458
        %p855 = pneg %p455
        %p856 = pneg %p479
        %p857 = pneg %p476
        %p858 = pneg %p500
        %p859 = pneg %p497
        %p860 = pneg %p521
        %p861 = pneg %p518
        %p862 = pneg %p542
        %p863 = pneg %p539
        %p864 = pneg %p563
        %p865 = pneg %p560
        %p866 = pneg %p584
        %p867 = pneg %p581
        %p868 = pneg %p605
        %p869 = pneg %p602
        %p870 = pneg %p631
        %p871 = pneg %p628
        %s872 = sand.u32 %s618, 1
        %s873 = sand.u32 %s618, 1
        %s874 = smul.addr %s873, 64
        %s875 = scalar_lea.vmem [#allocation3], %s874
        %s876 = smul.u32 4, %s38
        %s877 = smul.u32 4, %s38
        %v879 = vld [vmem:[%s808] sm:$0xff]
        %v880 = vld [vmem:[%s808 + $0x8] sm:$0xff]
        %v881 = vld [vmem:[%s808 + $0x10] sm:$0xff]
        %v882 = vld [vmem:[%s808 + $0x18] sm:$0xff]
        %v883 = vld [vmem:[%s808 + $0x20] sm:$0xff]
        %v884 = vld [vmem:[%s808 + $0x28] sm:$0xff]
        %v885 = vld [vmem:[%s808 + $0x30] sm:$0xff]
        %v886 = vld [vmem:[%s808 + $0x38] sm:$0xff]
        %v887 = vld [vmem:[%s1] sm:$0x1]
        %v888 = vld [vmem:[%s2] sm:$0x1]
        %889 = vadd.xlane.f32.xlu0 %v879
        %v890 = vpop.xlane.xlu0 %889
        %891 = vadd.xlane.f32.xlu0 %v880
        %v892 = vpop.xlane.xlu0 %891
        %893 = vadd.xlane.f32.xlu0 %v881
        %v894 = vpop.xlane.xlu0 %893
        %895 = vadd.xlane.f32.xlu0 %v882
        %v896 = vpop.xlane.xlu0 %895
        %897 = vadd.xlane.f32.xlu0 %v883
        %v898 = vpop.xlane.xlu0 %897
        %899 = vadd.xlane.f32.xlu0 %v884
        %v900 = vpop.xlane.xlu0 %899
        %901 = vadd.xlane.f32.xlu0 %v885
        %v902 = vpop.xlane.xlu0 %901
        %903 = vadd.xlane.f32.xlu0 %v886
        %v904 = vpop.xlane.xlu0 %903
        %v905 = vrcp.pop 128.0
        %v906 = vmul.f32 %v890, %v905
        %v907 = vmul.f32 %v892, %v905
        %v908 = vmul.f32 %v894, %v905
        %v909 = vmul.f32 %v896, %v905
        %v910 = vmul.f32 %v898, %v905
        %v911 = vmul.f32 %v900, %v905
        %v912 = vmul.f32 %v902, %v905
        %v913 = vmul.f32 %v904, %v905
        %v914 = vsub.f32 %v879, %v906
        %v915 = vsub.f32 %v880, %v907
        %v916 = vsub.f32 %v881, %v908
        %v917 = vsub.f32 %v882, %v909
        %v918 = vsub.f32 %v883, %v910
        %v919 = vsub.f32 %v884, %v911
        %v920 = vsub.f32 %v885, %v912
        %v921 = vsub.f32 %v886, %v913
        %v922 = vmul.f32 %v914, %v914
        %v923 = vmul.f32 %v915, %v915
        %v924 = vmul.f32 %v916, %v916
        %v925 = vmul.f32 %v917, %v917
        %v926 = vmul.f32 %v918, %v918
        %v927 = vmul.f32 %v919, %v919
        %v928 = vmul.f32 %v920, %v920
        %v929 = vmul.f32 %v921, %v921
        %930 = vadd.xlane.f32.xlu0 %v922
        %v931 = vpop.xlane.xlu0 %930
        %932 = vadd.xlane.f32.xlu0 %v923
        %v933 = vpop.xlane.xlu0 %932
        %934 = vadd.xlane.f32.xlu0 %v924
        %v935 = vpop.xlane.xlu0 %934
        %936 = vadd.xlane.f32.xlu0 %v925
        %v937 = vpop.xlane.xlu0 %936
        %938 = vadd.xlane.f32.xlu0 %v926
        %v939 = vpop.xlane.xlu0 %938
        %940 = vadd.xlane.f32.xlu0 %v927
        %v941 = vpop.xlane.xlu0 %940
        %942 = vadd.xlane.f32.xlu0 %v928
        %v943 = vpop.xlane.xlu0 %942
        %944 = vadd.xlane.f32.xlu0 %v929
        %v945 = vpop.xlane.xlu0 %944
        %v946 = vmul.f32 %v931, %v905
        %v947 = vmul.f32 %v933, %v905
        %v948 = vmul.f32 %v935, %v905
        %v949 = vmul.f32 %v937, %v905
        %v950 = vmul.f32 %v939, %v905
        %v951 = vmul.f32 %v941, %v905
        %v952 = vmul.f32 %v943, %v905
        %v953 = vmul.f32 %v945, %v905
        %v954 = vadd.f32 %v946, 1e-05
        %v955 = vadd.f32 %v947, 1e-05
        %v956 = vadd.f32 %v948, 1e-05
        %v957 = vadd.f32 %v949, 1e-05
        %v958 = vadd.f32 %v950, 1e-05
        %v959 = vadd.f32 %v951, 1e-05
        %v960 = vadd.f32 %v952, 1e-05
        %v961 = vadd.f32 %v953, 1e-05
        %v962 = vrsqrt.pop %v954
        %v963 = vrsqrt.pop %v955
        %v964 = vrsqrt.pop %v956
        %v965 = vrsqrt.pop %v957
        %v966 = vrsqrt.pop %v958
        %v967 = vrsqrt.pop %v959
        %v968 = vrsqrt.pop %v960
        %v969 = vrsqrt.pop %v961
        %v970 = vmul.f32 %v914, %v962
        %v971 = vmul.f32 %v915, %v963
        %v972 = vmul.f32 %v916, %v964
        %v973 = vmul.f32 %v917, %v965
        %v974 = vmul.f32 %v918, %v966
        %v975 = vmul.f32 %v919, %v967
        %v976 = vmul.f32 %v920, %v968
        %v977 = vmul.f32 %v921, %v969
        %v979 = vlaneseq
        %v980 = vshrl.u32 %v979, 7
        %v981 = vsub.s32 0, %v980
        %v982 = vrot.slane %v887, %v981
        %v984 = vmul.f32 %v970, %v982
        %v985 = vmul.f32 %v971, %v982
        %v986 = vmul.f32 %v972, %v982
        %v987 = vmul.f32 %v973, %v982
        %v988 = vmul.f32 %v974, %v982
        %v989 = vmul.f32 %v975, %v982
        %v990 = vmul.f32 %v976, %v982
        %v991 = vmul.f32 %v977, %v982
        %v993 = vlaneseq
        %v994 = vshrl.u32 %v993, 7
        %v995 = vsub.s32 0, %v994
        %v996 = vrot.slane %v888, %v995
        %v998 = vadd.f32 %v984, %v996
        %v999 = vadd.f32 %v985, %v996
        %v1000 = vadd.f32 %v986, %v996
        %v1001 = vadd.f32 %v987, %v996
        %v1002 = vadd.f32 %v988, %v996
        %v1003 = vadd.f32 %v989, %v996
        %v1004 = vadd.f32 %v990, %v996
        %v1005 = vadd.f32 %v991, %v996
        %v1006 = vpack.c.bf16 %v999, %v998
        %v1007 = vpack.c.bf16 %v1001, %v1000
        %v1008 = vpack.c.bf16 %v1003, %v1002
        %v1009 = vpack.c.bf16 %v1005, %v1004
        %v1010 = vld [vmem:[%s3] sm:$0xf]
        %v1011 = vld [vmem:[%s3 + $0x4] sm:$0xf]
        %v1012 = vld [vmem:[%s3 + $0x8] sm:$0xf]
        %v1013 = vld [vmem:[%s3 + $0xc] sm:$0xf]
        %v1014 = vld [vmem:[%s3 + $0x10] sm:$0xf]
        %v1015 = vld [vmem:[%s3 + $0x14] sm:$0xf]
        %v1016 = vld [vmem:[%s3 + $0x18] sm:$0xf]
        %v1017 = vld [vmem:[%s3 + $0x1c] sm:$0xf]
        %v1018 = vld [vmem:[%s3 + $0x20] sm:$0xf]
        %v1019 = vld [vmem:[%s3 + $0x24] sm:$0xf]
        %v1020 = vld [vmem:[%s3 + $0x28] sm:$0xf]
        %v1021 = vld [vmem:[%s3 + $0x2c] sm:$0xf]
        %v1022 = vld [vmem:[%s3 + $0x30] sm:$0xf]
        %v1023 = vld [vmem:[%s3 + $0x34] sm:$0xf]
        %v1024 = vld [vmem:[%s3 + $0x38] sm:$0xf]
        %v1025 = vld [vmem:[%s3 + $0x3c] sm:$0xf]
        %v1026 = vld [vmem:[%s4] sm:$0x1]
        %v1028 = vlaneseq
        %v1029 = vshrl.u32 %v1028, 7
        %v1030 = vsub.s32 0, %v1029
        %v1031 = vrot.slane %v1026, %v1030
        %v1049 = vunpack.c.l.b16 %v1010
        %v1050 = vunpack.c.l.b16 %v1011
        %v1051 = vunpack.c.l.b16 %v1012
        %v1052 = vunpack.c.l.b16 %v1013
        %v1053 = vunpack.c.l.b16 %v1014
        %v1054 = vunpack.c.l.b16 %v1015
        %v1055 = vunpack.c.l.b16 %v1016
        %v1056 = vunpack.c.l.b16 %v1017
        %v1057 = vunpack.c.l.b16 %v1018
        %v1058 = vunpack.c.l.b16 %v1019
        %v1059 = vunpack.c.l.b16 %v1020
        %v1060 = vunpack.c.l.b16 %v1021
        %v1061 = vunpack.c.l.b16 %v1022
        %v1062 = vunpack.c.l.b16 %v1023
        %v1063 = vunpack.c.l.b16 %v1024
        %v1064 = vunpack.c.l.b16 %v1025
        %v1065 = vpack.c.b16 %v1050, %v1049
        %v1066 = vpack.c.b16 %v1052, %v1051
        %v1067 = vpack.c.b16 %v1054, %v1053
        %v1068 = vpack.c.b16 %v1056, %v1055
        %v1069 = vpack.c.b16 %v1058, %v1057
        %v1070 = vpack.c.b16 %v1060, %v1059
        %v1071 = vpack.c.b16 %v1062, %v1061
        %v1072 = vpack.c.b16 %v1064, %v1063
        %1081 = vmatprep.subr.bf16.mxu0 0
        %1082 = vmatpush1.bf16.msra.mxu0 %v1065
        %1083 = vmatprep.subr.bf16.mxu0 0
        %1084 = vmatpush1.bf16.msra.mxu0 %v1066
        %1085 = vmatprep.subr.bf16.mxu0 0
        %1086 = vmatpush1.bf16.msra.mxu0 %v1067
        %1087 = vmatprep.subr.bf16.mxu0 0
        %1088 = vmatpush1.bf16.msra.mxu0 %v1068
        %1089 = vmatprep.subr.bf16.mxu0 0
        %1090 = vmatpush1.bf16.msra.mxu0 %v1069
        %1091 = vmatprep.subr.bf16.mxu0 0
        %1092 = vmatpush1.bf16.msra.mxu0 %v1070
        %1093 = vmatprep.subr.bf16.mxu0 0
        %1094 = vmatpush1.bf16.msra.mxu0 %v1071
        %1095 = vmatprep.subr.bf16.mxu0 0
        %1096 = vmatpush1.bf16.msra.mxu0 %v1072
        %1097 = vmatprep.subr.bf16.mxu0 0
        %1098 = vmatpush1.bf16.msra.mxu0 0
        %1099 = vmatprep.subr.bf16.mxu0 0
        %1100 = vmatpush1.bf16.msra.mxu0 0
        %1101 = vmatprep.subr.bf16.mxu0 0
        %1102 = vmatpush1.bf16.msra.mxu0 0
        %1103 = vmatprep.subr.bf16.mxu0 0
        %1104 = vmatpush1.bf16.msra.mxu0 0
        %1105 = vmatprep.subr.bf16.mxu0 0
        %1106 = vmatpush1.bf16.msra.mxu0 0
        %1107 = vmatprep.subr.bf16.mxu0 0
        %1108 = vmatpush1.bf16.msra.mxu0 0
        %1109 = vmatprep.subr.bf16.mxu0 0
        %1110 = vmatpush1.bf16.msra.mxu0 0
        %1111 = vmatprep.subr.bf16.mxu0 0
        %1112 = vmatpush1.bf16.msra.mxu0 0
        %1113 = vmatprep.mubr.bf16.mxu0 0
        %1114 = vmatmul.mubr.bf16.gmra.mrb[0].mxu0 %v1006
        %v1115 = vpop.f32.mrb[0].mxu0
        %v1116 = vadd.f32 %v1031, %v1115
        %v1117 = vpop.f32.mrb[0].mxu0
        %v1118 = vpop.f32.mrb[0].mxu0
        %v1119 = vadd.f32 %v1031, %v1118
        %v1120 = vpop.f32.mrb[0].mxu0
        %1121 = vmatprep.mubr.bf16.mxu0 0
        %1122 = vmatmul.mubr.bf16.gmra.mrb[0].mxu0 %v1007
        %v1123 = vpop.f32.mrb[0].mxu0
        %v1124 = vadd.f32 %v1031, %v1123
        %v1125 = vpop.f32.mrb[0].mxu0
        %v1126 = vpop.f32.mrb[0].mxu0
        %v1127 = vadd.f32 %v1031, %v1126
        %v1128 = vpop.f32.mrb[0].mxu0
        %1129 = vmatprep.mubr.bf16.mxu0 0
        %1130 = vmatmul.mubr.bf16.gmra.mrb[0].mxu0 %v1008
        %v1131 = vpop.f32.mrb[0].mxu0
        %v1132 = vadd.f32 %v1031, %v1131
        %v1133 = vpop.f32.mrb[0].mxu0
        %v1134 = vpop.f32.mrb[0].mxu0
        %v1135 = vadd.f32 %v1031, %v1134
        %v1136 = vpop.f32.mrb[0].mxu0
        %1137 = vmatprep.mubr.bf16.mxu0 0
        %1138 = vmatmul.mubr.bf16.gmra.mrb[0].mxu0 %v1009
        %v1139 = vpop.f32.mrb[0].mxu0
        %v1140 = vadd.f32 %v1031, %v1139
        %v1141 = vpop.f32.mrb[0].mxu0
        %v1142 = vpop.f32.mrb[0].mxu0
        %v1143 = vadd.f32 %v1031, %v1142
        %v1144 = vpop.f32.mrb[0].mxu0
        %1145 = vdwg.mxu0
        %v1146 = vmul.f32 %v1116, 0.25
        %v1147 = vmul.f32 %v1119, 0.25
        %v1148 = vmul.f32 %v1124, 0.25
        %v1149 = vmul.f32 %v1127, 0.25
        %v1150 = vmul.f32 %v1132, 0.25
        %v1151 = vmul.f32 %v1135, 0.25
        %v1152 = vmul.f32 %v1140, 0.25
        %v1153 = vmul.f32 %v1143, 0.25
        %v1154 = vld [vmem:[%s5] sm:$0xf]
        %v1155 = vld [vmem:[%s5 + $0x4] sm:$0xf]
        %v1156 = vld [vmem:[%s5 + $0x8] sm:$0xf]
        %v1157 = vld [vmem:[%s5 + $0xc] sm:$0xf]
        %v1158 = vld [vmem:[%s5 + $0x10] sm:$0xf]
        %v1159 = vld [vmem:[%s5 + $0x14] sm:$0xf]
        %v1160 = vld [vmem:[%s5 + $0x18] sm:$0xf]
        %v1161 = vld [vmem:[%s5 + $0x1c] sm:$0xf]
        %v1162 = vld [vmem:[%s5 + $0x20] sm:$0xf]
        %v1163 = vld [vmem:[%s5 + $0x24] sm:$0xf]
        %v1164 = vld [vmem:[%s5 + $0x28] sm:$0xf]
        %v1165 = vld [vmem:[%s5 + $0x2c] sm:$0xf]
        %v1166 = vld [vmem:[%s5 + $0x30] sm:$0xf]
        %v1167 = vld [vmem:[%s5 + $0x34] sm:$0xf]
        %v1168 = vld [vmem:[%s5 + $0x38] sm:$0xf]
        %v1169 = vld [vmem:[%s5 + $0x3c] sm:$0xf]
        %v1170 = vld [vmem:[%s6] sm:$0x1]
        %v1172 = vlaneseq
        %v1173 = vshrl.u32 %v1172, 7
        %v1174 = vsub.s32 0, %v1173
        %v1175 = vrot.slane %v1170, %v1174
        %v1193 = vunpack.c.l.b16 %v1154
        %v1194 = vunpack.c.l.b16 %v1155
        %v1195 = vunpack.c.l.b16 %v1156
        %v1196 = vunpack.c.l.b16 %v1157
        %v1197 = vunpack.c.l.b16 %v1158
        %v1198 = vunpack.c.l.b16 %v1159
        %v1199 = vunpack.c.l.b16 %v1160
        %v1200 = vunpack.c.l.b16 %v1161
        %v1201 = vunpack.c.l.b16 %v1162
        %v1202 = vunpack.c.l.b16 %v1163
        %v1203 = vunpack.c.l.b16 %v1164
        %v1204 = vunpack.c.l.b16 %v1165
        %v1205 = vunpack.c.l.b16 %v1166
        %v1206 = vunpack.c.l.b16 %v1167
        %v1207 = vunpack.c.l.b16 %v1168
        %v1208 = vunpack.c.l.b16 %v1169
        %v1209 = vpack.c.b16 %v1194, %v1193
        %v1210 = vpack.c.b16 %v1196, %v1195
        %v1211 = vpack.c.b16 %v1198, %v1197
        %v1212 = vpack.c.b16 %v1200, %v1199
        %v1213 = vpack.c.b16 %v1202, %v1201
        %v1214 = vpack.c.b16 %v1204, %v1203
        %v1215 = vpack.c.b16 %v1206, %v1205
        %v1216 = vpack.c.b16 %v1208, %v1207
        %1225 = vmatprep.subr.bf16.mxu0 0
        %1226 = vmatpush1.bf16.msra.mxu0 %v1209
        %1227 = vmatprep.subr.bf16.mxu0 0
        %1228 = vmatpush1.bf16.msra.mxu0 %v1210
        %1229 = vmatprep.subr.bf16.mxu0 0
        %1230 = vmatpush1.bf16.msra.mxu0 %v1211
        %1231 = vmatprep.subr.bf16.mxu0 0
        %1232 = vmatpush1.bf16.msra.mxu0 %v1212
        %1233 = vmatprep.subr.bf16.mxu0 0
        %1234 = vmatpush1.bf16.msra.mxu0 %v1213
        %1235 = vmatprep.subr.bf16.mxu0 0
        %1236 = vmatpush1.bf16.msra.mxu0 %v1214
        %1237 = vmatprep.subr.bf16.mxu0 0
        %1238 = vmatpush1.bf16.msra.mxu0 %v1215
        %1239 = vmatprep.subr.bf16.mxu0 0
        %1240 = vmatpush1.bf16.msra.mxu0 %v1216
        %1241 = vmatprep.subr.bf16.mxu0 0
        %1242 = vmatpush1.bf16.msra.mxu0 0
        %1243 = vmatprep.subr.bf16.mxu0 0
        %1244 = vmatpush1.bf16.msra.mxu0 0
        %1245 = vmatprep.subr.bf16.mxu0 0
        %1246 = vmatpush1.bf16.msra.mxu0 0
        %1247 = vmatprep.subr.bf16.mxu0 0
        %1248 = vmatpush1.bf16.msra.mxu0 0
        %1249 = vmatprep.subr.bf16.mxu0 0
        %1250 = vmatpush1.bf16.msra.mxu0 0
        %1251 = vmatprep.subr.bf16.mxu0 0
        %1252 = vmatpush1.bf16.msra.mxu0 0
        %1253 = vmatprep.subr.bf16.mxu0 0
        %1254 = vmatpush1.bf16.msra.mxu0 0
        %1255 = vmatprep.subr.bf16.mxu0 0
        %1256 = vmatpush1.bf16.msra.mxu0 0
        %1257 = vmatprep.mubr.bf16.mxu0 0
        %1258 = vmatmul.mubr.bf16.gmra.mrb[0].mxu0 %v1006
        %v1259 = vpop.f32.mrb[0].mxu0
        %v1260 = vadd.f32 %v1175, %v1259
        %v1261 = vpop.f32.mrb[0].mxu0
        %v1262 = vpop.f32.mrb[0].mxu0
        %v1263 = vadd.f32 %v1175, %v1262
        %v1264 = vpop.f32.mrb[0].mxu0
        %1265 = vmatprep.mubr.bf16.mxu0 0
        %1266 = vmatmul.mubr.bf16.gmra.mrb[0].mxu0 %v1007
        %v1267 = vpop.f32.mrb[0].mxu0
        %v1268 = vadd.f32 %v1175, %v1267
        %v1269 = vpop.f32.mrb[0].mxu0
        %v1270 = vpop.f32.mrb[0].mxu0
        %v1271 = vadd.f32 %v1175, %v1270
        %v1272 = vpop.f32.mrb[0].mxu0
        %1273 = vmatprep.mubr.bf16.mxu0 0
        %1274 = vmatmul.mubr.bf16.gmra.mrb[0].mxu0 %v1008
        %v1275 = vpop.f32.mrb[0].mxu0
        %v1276 = vadd.f32 %v1175, %v1275
        %v1277 = vpop.f32.mrb[0].mxu0
        %v1278 = vpop.f32.mrb[0].mxu0
        %v1279 = vadd.f32 %v1175, %v1278
        %v1280 = vpop.f32.mrb[0].mxu0
        %1281 = vmatprep.mubr.bf16.mxu0 0
        %1282 = vmatmul.mubr.bf16.gmra.mrb[0].mxu0 %v1009
        %v1283 = vpop.f32.mrb[0].mxu0
        %v1284 = vadd.f32 %v1175, %v1283
        %v1285 = vpop.f32.mrb[0].mxu0
        %v1286 = vpop.f32.mrb[0].mxu0
        %v1287 = vadd.f32 %v1175, %v1286
        %v1288 = vpop.f32.mrb[0].mxu0
        %1289 = vdwg.mxu0
        %v1290 = vld [vmem:[%s7] sm:$0xf]
        %v1291 = vld [vmem:[%s7 + $0x4] sm:$0xf]
        %v1292 = vld [vmem:[%s7 + $0x8] sm:$0xf]
        %v1293 = vld [vmem:[%s7 + $0xc] sm:$0xf]
        %v1294 = vld [vmem:[%s7 + $0x10] sm:$0xf]
        %v1295 = vld [vmem:[%s7 + $0x14] sm:$0xf]
        %v1296 = vld [vmem:[%s7 + $0x18] sm:$0xf]
        %v1297 = vld [vmem:[%s7 + $0x1c] sm:$0xf]
        %v1298 = vld [vmem:[%s7 + $0x20] sm:$0xf]
        %v1299 = vld [vmem:[%s7 + $0x24] sm:$0xf]
        %v1300 = vld [vmem:[%s7 + $0x28] sm:$0xf]
        %v1301 = vld [vmem:[%s7 + $0x2c] sm:$0xf]
        %v1302 = vld [vmem:[%s7 + $0x30] sm:$0xf]
        %v1303 = vld [vmem:[%s7 + $0x34] sm:$0xf]
        %v1304 = vld [vmem:[%s7 + $0x38] sm:$0xf]
        %v1305 = vld [vmem:[%s7 + $0x3c] sm:$0xf]
        %v1306 = vld [vmem:[%s8] sm:$0x1]
        %v1308 = vlaneseq
        %v1309 = vshrl.u32 %v1308, 7
        %v1310 = vsub.s32 0, %v1309
        %v1311 = vrot.slane %v1306, %v1310
        %v1329 = vunpack.c.l.b16 %v1290
        %v1330 = vunpack.c.l.b16 %v1291
        %v1331 = vunpack.c.l.b16 %v1292
        %v1332 = vunpack.c.l.b16 %v1293
        %v1333 = vunpack.c.l.b16 %v1294
        %v1334 = vunpack.c.l.b16 %v1295
        %v1335 = vunpack.c.l.b16 %v1296
        %v1336 = vunpack.c.l.b16 %v1297
        %v1337 = vunpack.c.l.b16 %v1298
        %v1338 = vunpack.c.l.b16 %v1299
        %v1339 = vunpack.c.l.b16 %v1300
        %v1340 = vunpack.c.l.b16 %v1301
        %v1341 = vunpack.c.l.b16 %v1302
        %v1342 = vunpack.c.l.b16 %v1303
        %v1343 = vunpack.c.l.b16 %v1304
        %v1344 = vunpack.c.l.b16 %v1305
        %v1345 = vpack.c.b16 %v1330, %v1329
        %v1346 = vpack.c.b16 %v1332, %v1331
        %v1347 = vpack.c.b16 %v1334, %v1333
        %v1348 = vpack.c.b16 %v1336, %v1335
        %v1349 = vpack.c.b16 %v1338, %v1337
        %v1350 = vpack.c.b16 %v1340, %v1339
        %v1351 = vpack.c.b16 %v1342, %v1341
        %v1352 = vpack.c.b16 %v1344, %v1343
        %1361 = vmatprep.subr.bf16.mxu0 0
        %1362 = vmatpush1.bf16.msra.mxu0 %v1345
        %1363 = vmatprep.subr.bf16.mxu0 0
        %1364 = vmatpush1.bf16.msra.mxu0 %v1346
        %1365 = vmatprep.subr.bf16.mxu0 0
        %1366 = vmatpush1.bf16.msra.mxu0 %v1347
        %1367 = vmatprep.subr.bf16.mxu0 0
        %1368 = vmatpush1.bf16.msra.mxu0 %v1348
        %1369 = vmatprep.subr.bf16.mxu0 0
        %1370 = vmatpush1.bf16.msra.mxu0 %v1349
        %1371 = vmatprep.subr.bf16.mxu0 0
        %1372 = vmatpush1.bf16.msra.mxu0 %v1350
        %1373 = vmatprep.subr.bf16.mxu0 0
        %1374 = vmatpush1.bf16.msra.mxu0 %v1351
        %1375 = vmatprep.subr.bf16.mxu0 0
        %1376 = vmatpush1.bf16.msra.mxu0 %v1352
        %1377 = vmatprep.subr.bf16.mxu0 0
        %1378 = vmatpush1.bf16.msra.mxu0 0
        %1379 = vmatprep.subr.bf16.mxu0 0
        %1380 = vmatpush1.bf16.msra.mxu0 0
        %1381 = vmatprep.subr.bf16.mxu0 0
        %1382 = vmatpush1.bf16.msra.mxu0 0
        %1383 = vmatprep.subr.bf16.mxu0 0
        %1384 = vmatpush1.bf16.msra.mxu0 0
        %1385 = vmatprep.subr.bf16.mxu0 0
        %1386 = vmatpush1.bf16.msra.mxu0 0
        %1387 = vmatprep.subr.bf16.mxu0 0
        %1388 = vmatpush1.bf16.msra.mxu0 0
        %1389 = vmatprep.subr.bf16.mxu0 0
        %1390 = vmatpush1.bf16.msra.mxu0 0
        %1391 = vmatprep.subr.bf16.mxu0 0
        %1392 = vmatpush1.bf16.msra.mxu0 0
        %1393 = vmatprep.mubr.bf16.mxu0 0
        %1394 = vmatmul.mubr.bf16.gmra.mrb[0].mxu0 %v1006
        %v1395 = vpop.f32.mrb[0].mxu0
        %v1396 = vadd.f32 %v1311, %v1395
        %v1397 = vpop.f32.mrb[0].mxu0
        %v1398 = vpop.f32.mrb[0].mxu0
        %v1399 = vadd.f32 %v1311, %v1398
        %v1400 = vpop.f32.mrb[0].mxu0
        %1401 = vmatprep.mubr.bf16.mxu0 0
        %1402 = vmatmul.mubr.bf16.gmra.mrb[0].mxu0 %v1007
        %v1403 = vpop.f32.mrb[0].mxu0
        %v1404 = vadd.f32 %v1311, %v1403
        %v1405 = vpop.f32.mrb[0].mxu0
        %v1406 = vpop.f32.mrb[0].mxu0
        %v1407 = vadd.f32 %v1311, %v1406
        %v1408 = vpop.f32.mrb[0].mxu0
        %1409 = vmatprep.mubr.bf16.mxu0 0
        %1410 = vmatmul.mubr.bf16.gmra.mrb[0].mxu0 %v1008
        %v1411 = vpop.f32.mrb[0].mxu0
        %v1412 = vadd.f32 %v1311, %v1411
        %v1413 = vpop.f32.mrb[0].mxu0
        %v1414 = vpop.f32.mrb[0].mxu0
        %v1415 = vadd.f32 %v1311, %v1414
        %v1416 = vpop.f32.mrb[0].mxu0
        %1417 = vmatprep.mubr.bf16.mxu0 0
        %1418 = vmatmul.mubr.bf16.gmra.mrb[0].mxu0 %v1009
        %v1419 = vpop.f32.mrb[0].mxu0
        %v1420 = vadd.f32 %v1311, %v1419
        %v1421 = vpop.f32.mrb[0].mxu0
        %v1422 = vpop.f32.mrb[0].mxu0
        %v1423 = vadd.f32 %v1311, %v1422
        %v1424 = vpop.f32.mrb[0].mxu0
        %1425 = vdwg.mxu0
        %v1426 = vmul.f32 %v1146, %v1260
        %v1427 = vmul.f32 %v1147, %v1263
        %v1428 = vmul.f32 %v1148, %v1268
        %v1429 = vmul.f32 %v1149, %v1271
        %v1430 = vpack.c.bf16 %v1427, %v1426
        %v1431 = vpack.c.bf16 %v1429, %v1428
        %v1432 = vld [vmem:[%s9] sm:$0xf]
        %v1433 = vld [vmem:[%s9 + $0x4] sm:$0xf]
        %v1434 = vld [vmem:[%s9 + $0x8] sm:$0xf]
        %v1435 = vld [vmem:[%s9 + $0xc] sm:$0xf]
        %v1436 = vld [vmem:[%s9 + $0x10] sm:$0xf]
        %v1437 = vld [vmem:[%s9 + $0x14] sm:$0xf]
        %v1438 = vld [vmem:[%s9 + $0x18] sm:$0xf]
        %v1439 = vld [vmem:[%s9 + $0x1c] sm:$0xf]
        %v1440 = vld [vmem:[%s9 + $0x20] sm:$0xf]
        %v1441 = vld [vmem:[%s9 + $0x24] sm:$0xf]
        %v1442 = vld [vmem:[%s9 + $0x28] sm:$0xf]
        %v1443 = vld [vmem:[%s9 + $0x2c] sm:$0xf]
        %v1444 = vld [vmem:[%s9 + $0x30] sm:$0xf]
        %v1445 = vld [vmem:[%s9 + $0x34] sm:$0xf]
        %v1446 = vld [vmem:[%s9 + $0x38] sm:$0xf]
        %v1447 = vld [vmem:[%s9 + $0x3c] sm:$0xf]
        %v1464 = vunpack.c.l.b16 %v1432
        %v1465 = vunpack.c.l.b16 %v1433
        %v1466 = vunpack.c.l.b16 %v1434
        %v1467 = vunpack.c.l.b16 %v1435
        %v1468 = vunpack.c.l.b16 %v1436
        %v1469 = vunpack.c.l.b16 %v1437
        %v1470 = vunpack.c.l.b16 %v1438
        %v1471 = vunpack.c.l.b16 %v1439
        %v1472 = vunpack.c.l.b16 %v1440
        %v1473 = vunpack.c.l.b16 %v1441
        %v1474 = vunpack.c.l.b16 %v1442
        %v1475 = vunpack.c.l.b16 %v1443
        %v1476 = vunpack.c.l.b16 %v1444
        %v1477 = vunpack.c.l.b16 %v1445
        %v1478 = vunpack.c.l.b16 %v1446
        %v1479 = vunpack.c.l.b16 %v1447
        %v1480 = vpack.c.b16 %v1465, %v1464
        %v1481 = vpack.c.b16 %v1467, %v1466
        %v1482 = vpack.c.b16 %v1469, %v1468
        %v1483 = vpack.c.b16 %v1471, %v1470
        %v1484 = vpack.c.b16 %v1473, %v1472
        %v1485 = vpack.c.b16 %v1475, %v1474
        %v1486 = vpack.c.b16 %v1477, %v1476
        %v1487 = vpack.c.b16 %v1479, %v1478
        %1496 = vmatprep.subr.bf16.mxu0 0
        %1497 = vmatpush1.bf16.msra.mxu0 %v1480
        %1498 = vmatprep.subr.bf16.mxu0 0
        %1499 = vmatpush1.bf16.msra.mxu0 %v1481
        %1500 = vmatprep.subr.bf16.mxu0 0
        %1501 = vmatpush1.bf16.msra.mxu0 %v1482
        %1502 = vmatprep.subr.bf16.mxu0 0
        %1503 = vmatpush1.bf16.msra.mxu0 %v1483
        %1504 = vmatprep.subr.bf16.mxu0 0
        %1505 = vmatpush1.bf16.msra.mxu0 %v1484
        %1506 = vmatprep.subr.bf16.mxu0 0
        %1507 = vmatpush1.bf16.msra.mxu0 %v1485
        %1508 = vmatprep.subr.bf16.mxu0 0
        %1509 = vmatpush1.bf16.msra.mxu0 %v1486
        %1510 = vmatprep.subr.bf16.mxu0 0
        %1511 = vmatpush1.bf16.msra.mxu0 %v1487
        %1512 = vmatprep.subr.bf16.mxu0 0
        %1513 = vmatpush1.bf16.msra.mxu0 0
        %1514 = vmatprep.subr.bf16.mxu0 0
        %1515 = vmatpush1.bf16.msra.mxu0 0
        %1516 = vmatprep.subr.bf16.mxu0 0
        %1517 = vmatpush1.bf16.msra.mxu0 0
        %1518 = vmatprep.subr.bf16.mxu0 0
        %1519 = vmatpush1.bf16.msra.mxu0 0
        %1520 = vmatprep.subr.bf16.mxu0 0
        %1521 = vmatpush1.bf16.msra.mxu0 0
        %1522 = vmatprep.subr.bf16.mxu0 0
        %1523 = vmatpush1.bf16.msra.mxu0 0
        %1524 = vmatprep.subr.bf16.mxu0 0
        %1525 = vmatpush1.bf16.msra.mxu0 0
        %1526 = vmatprep.subr.bf16.mxu0 0
        %1527 = vmatpush1.bf16.msra.mxu0 0
        %1528 = vmatprep.mubr.bf16.mxu0 0
        %1529 = vmatmul.mubr.bf16.gmra.mrb[0].mxu0 %v1430
        %v1530 = vpop.f32.mrb[0].mxu0
        %v1531 = vadd.f32 0.0, %v1530
        %v1532 = vpop.f32.mrb[0].mxu0
        %v1533 = vpop.f32.mrb[0].mxu0
        %v1534 = vadd.f32 0.0, %v1533
        %v1535 = vpop.f32.mrb[0].mxu0
        %1536 = vmatprep.mubr.bf16.mxu0 0
        %1537 = vmatmul.mubr.bf16.gmra.mrb[0].mxu0 %v1431
        %v1538 = vpop.f32.mrb[0].mxu0
        %v1539 = vadd.f32 0.0, %v1538
        %v1540 = vpop.f32.mrb[0].mxu0
        %v1541 = vpop.f32.mrb[0].mxu0
        %v1542 = vadd.f32 0.0, %v1541
        %v1543 = vpop.f32.mrb[0].mxu0
        %1544 = vdwg.mxu0
        %v1545 = vmul.f32 %v1146, %v1276
        %v1546 = vmul.f32 %v1147, %v1279
        %v1547 = vmul.f32 %v1148, %v1284
        %v1548 = vmul.f32 %v1149, %v1287
        %v1549 = vpack.c.bf16 %v1546, %v1545
        %v1550 = vpack.c.bf16 %v1548, %v1547
        %1551 = vmatprep.subr.bf16.mxu0 0
        %1552 = vmatpush1.bf16.msra.mxu0 %v1480
        %1553 = vmatprep.subr.bf16.mxu0 0
        %1554 = vmatpush1.bf16.msra.mxu0 %v1481
        %1555 = vmatprep.subr.bf16.mxu0 0
        %1556 = vmatpush1.bf16.msra.mxu0 %v1482
        %1557 = vmatprep.subr.bf16.mxu0 0
        %1558 = vmatpush1.bf16.msra.mxu0 %v1483
        %1559 = vmatprep.subr.bf16.mxu0 0
        %1560 = vmatpush1.bf16.msra.mxu0 %v1484
        %1561 = vmatprep.subr.bf16.mxu0 0
        %1562 = vmatpush1.bf16.msra.mxu0 %v1485
        %1563 = vmatprep.subr.bf16.mxu0 0
        %1564 = vmatpush1.bf16.msra.mxu0 %v1486
        %1565 = vmatprep.subr.bf16.mxu0 0
        %1566 = vmatpush1.bf16.msra.mxu0 %v1487
        %1567 = vmatprep.subr.bf16.mxu0 0
        %1568 = vmatpush1.bf16.msra.mxu0 0
        %1569 = vmatprep.subr.bf16.mxu0 0
        %1570 = vmatpush1.bf16.msra.mxu0 0
        %1571 = vmatprep.subr.bf16.mxu0 0
        %1572 = vmatpush1.bf16.msra.mxu0 0
        %1573 = vmatprep.subr.bf16.mxu0 0
        %1574 = vmatpush1.bf16.msra.mxu0 0
        %1575 = vmatprep.subr.bf16.mxu0 0
        %1576 = vmatpush1.bf16.msra.mxu0 0
        %1577 = vmatprep.subr.bf16.mxu0 0
        %1578 = vmatpush1.bf16.msra.mxu0 0
        %1579 = vmatprep.subr.bf16.mxu0 0
        %1580 = vmatpush1.bf16.msra.mxu0 0
        %1581 = vmatprep.subr.bf16.mxu0 0
        %1582 = vmatpush1.bf16.msra.mxu0 0
        %1583 = vmatprep.mubr.bf16.mxu0 0
        %1584 = vmatmul.mubr.bf16.gmra.mrb[0].mxu0 %v1549
        %v1585 = vpop.f32.mrb[0].mxu0
        %v1586 = vadd.f32 0.0, %v1585
        %v1587 = vpop.f32.mrb[0].mxu0
        %v1588 = vpop.f32.mrb[0].mxu0
        %v1589 = vadd.f32 0.0, %v1588
        %v1590 = vpop.f32.mrb[0].mxu0
        %1591 = vmatprep.mubr.bf16.mxu0 0
        %1592 = vmatmul.mubr.bf16.gmra.mrb[0].mxu0 %v1550
        %v1593 = vpop.f32.mrb[0].mxu0
        %v1594 = vadd.f32 0.0, %v1593
        %v1595 = vpop.f32.mrb[0].mxu0
        %v1596 = vpop.f32.mrb[0].mxu0
        %v1597 = vadd.f32 0.0, %v1596
        %v1598 = vpop.f32.mrb[0].mxu0
        %1599 = vdwg.mxu0
        %v1600 = vmax.f32 %v1531, %v1586
        %v1601 = vmax.f32 %v1534, %v1589
        %v1602 = vmax.f32 %v1539, %v1594
        %v1603 = vmax.f32 %v1542, %v1597
        %v1604 = vsub.f32 %v1531, %v1600
        %v1605 = vsub.f32 %v1534, %v1601
        %v1606 = vsub.f32 %v1539, %v1602
        %v1607 = vsub.f32 %v1542, %v1603
        %v1608 = vmul.f32 %v1604, 1.442695
        %v1609 = vpow.pop %v1608
        %v1610 = vmul.f32 %v1605, 1.442695
        %v1611 = vpow.pop %v1610
        %v1612 = vmul.f32 %v1606, 1.442695
        %v1613 = vpow.pop %v1612
        %v1614 = vmul.f32 %v1607, 1.442695
        %v1615 = vpow.pop %v1614
        %v1616 = vsub.f32 %v1586, %v1600
        %v1617 = vsub.f32 %v1589, %v1601
        %v1618 = vsub.f32 %v1594, %v1602
        %v1619 = vsub.f32 %v1597, %v1603
        %v1620 = vmul.f32 %v1616, 1.442695
        %v1621 = vpow.pop %v1620
        %v1622 = vmul.f32 %v1617, 1.442695
        %v1623 = vpow.pop %v1622
        %v1624 = vmul.f32 %v1618, 1.442695
        %v1625 = vpow.pop %v1624
        %v1626 = vmul.f32 %v1619, 1.442695
        %v1627 = vpow.pop %v1626
        %v1628 = vadd.f32 %v1609, %v1621
        %v1629 = vadd.f32 %v1611, %v1623
        %v1630 = vadd.f32 %v1613, %v1625
        %v1631 = vadd.f32 %v1615, %v1627
        %v1632 = vrcp.pop %v1628
        %v1633 = vrcp.pop %v1629
        %v1634 = vrcp.pop %v1630
        %v1635 = vrcp.pop %v1631
        %v1636 = vmul.f32 %v1609, %v1632
        %v1637 = vmul.f32 %v1611, %v1633
        %v1638 = vmul.f32 %v1613, %v1634
        %v1639 = vmul.f32 %v1615, %v1635
        %v1640 = vpack.c.bf16 %v1637, %v1636
        %v1641 = vpack.c.bf16 %v1639, %v1638
        %v1642 = vld [vmem:[%s10] sm:$0xf]
        %vm1643 = vcmask 64512
        %v1645 = vsel %vm1643, %v1640, 0
        %v1648 = vsel %vm1643, %v1641, 0
        %vm1650 = vcmask 1043456
        %v1652 = vsel %vm1650, %v1642, 0
        %1654 = vmatprep.subr.bf16.mxu0 0
        %1655 = vmatpush1.bf16.msra.mxu0 %v1652
        %1656 = vmatprep.subr.bf16.mxu0 0
        %1657 = vmatpush1.bf16.msra.mxu0 0
        %1658 = vmatprep.subr.bf16.mxu0 0
        %1659 = vmatpush1.bf16.msra.mxu0 0
        %1660 = vmatprep.subr.bf16.mxu0 0
        %1661 = vmatpush1.bf16.msra.mxu0 0
        %1662 = vmatprep.subr.bf16.mxu0 0
        %1663 = vmatpush1.bf16.msra.mxu0 0
        %1664 = vmatprep.subr.bf16.mxu0 0
        %1665 = vmatpush1.bf16.msra.mxu0 0
        %1666 = vmatprep.subr.bf16.mxu0 0
        %1667 = vmatpush1.bf16.msra.mxu0 0
        %1668 = vmatprep.subr.bf16.mxu0 0
        %1669 = vmatpush1.bf16.msra.mxu0 0
        %1670 = vmatprep.subr.bf16.mxu0 0
        %1671 = vmatpush1.bf16.msra.mxu0 0
        %1672 = vmatprep.subr.bf16.mxu0 0
        %1673 = vmatpush1.bf16.msra.mxu0 0
        %1674 = vmatprep.subr.bf16.mxu0 0
        %1675 = vmatpush1.bf16.msra.mxu0 0
        %1676 = vmatprep.subr.bf16.mxu0 0
        %1677 = vmatpush1.bf16.msra.mxu0 0
        %1678 = vmatprep.subr.bf16.mxu0 0
        %1679 = vmatpush1.bf16.msra.mxu0 0
        %1680 = vmatprep.subr.bf16.mxu0 0
        %1681 = vmatpush1.bf16.msra.mxu0 0
        %1682 = vmatprep.subr.bf16.mxu0 0
        %1683 = vmatpush1.bf16.msra.mxu0 0
        %1684 = vmatprep.subr.bf16.mxu0 0
        %1685 = vmatpush1.bf16.msra.mxu0 0
        %1686 = vmatprep.mubr.bf16.mxu0 0
        %1687 = vmatmul.mubr.bf16.gmra.mrb[0].mxu0 %v1645
        %v1688 = vpop.f32.mrb[0].mxu0
        %v1689 = vadd.f32 0.0, %v1688
        %v1690 = vpop.f32.mrb[0].mxu0
        %v1691 = vpop.f32.mrb[0].mxu0
        %v1692 = vadd.f32 0.0, %v1691
        %v1693 = vpop.f32.mrb[0].mxu0
        %1694 = vmatprep.mubr.bf16.mxu0 0
        %1695 = vmatmul.mubr.bf16.gmra.mrb[0].mxu0 %v1648
        %v1696 = vpop.f32.mrb[0].mxu0
        %v1697 = vadd.f32 0.0, %v1696
        %v1698 = vpop.f32.mrb[0].mxu0
        %v1699 = vpop.f32.mrb[0].mxu0
        %v1700 = vadd.f32 0.0, %v1699
        %v1701 = vpop.f32.mrb[0].mxu0
        %1702 = vdwg.mxu0
        %v1703 = vmul.f32 %v1689, %v1396
        %v1704 = vmul.f32 %v1692, %v1399
        %v1705 = vmul.f32 %v1697, %v1404
        %v1706 = vmul.f32 %v1700, %v1407
        %v1707 = vadd.f32 %v1703, 0.0
        %v1708 = vadd.f32 %v1704, 0.0
        %v1709 = vadd.f32 %v1705, 0.0
        %v1710 = vadd.f32 %v1706, 0.0
        %v1711 = vmul.f32 %v1621, %v1632
        %v1712 = vmul.f32 %v1623, %v1633
        %v1713 = vmul.f32 %v1625, %v1634
        %v1714 = vmul.f32 %v1627, %v1635
        %v1715 = vpack.c.bf16 %v1712, %v1711
        %v1716 = vpack.c.bf16 %v1714, %v1713
        %v1718 = vsel %vm1643, %v1715, 0
        %v1721 = vsel %vm1643, %v1716, 0
        %1723 = vmatprep.subr.bf16.mxu0 0
        %1724 = vmatpush1.bf16.msra.mxu0 %v1652
        %1725 = vmatprep.subr.bf16.mxu0 0
        %1726 = vmatpush1.bf16.msra.mxu0 0
        %1727 = vmatprep.subr.bf16.mxu0 0
        %1728 = vmatpush1.bf16.msra.mxu0 0
        %1729 = vmatprep.subr.bf16.mxu0 0
        %1730 = vmatpush1.bf16.msra.mxu0 0
        %1731 = vmatprep.subr.bf16.mxu0 0
        %1732 = vmatpush1.bf16.msra.mxu0 0
        %1733 = vmatprep.subr.bf16.mxu0 0
        %1734 = vmatpush1.bf16.msra.mxu0 0
        %1735 = vmatprep.subr.bf16.mxu0 0
        %1736 = vmatpush1.bf16.msra.mxu0 0
        %1737 = vmatprep.subr.bf16.mxu0 0
        %1738 = vmatpush1.bf16.msra.mxu0 0
        %1739 = vmatprep.subr.bf16.mxu0 0
        %1740 = vmatpush1.bf16.msra.mxu0 0
        %1741 = vmatprep.subr.bf16.mxu0 0
        %1742 = vmatpush1.bf16.msra.mxu0 0
        %1743 = vmatprep.subr.bf16.mxu0 0
        %1744 = vmatpush1.bf16.msra.mxu0 0
        %1745 = vmatprep.subr.bf16.mxu0 0
        %1746 = vmatpush1.bf16.msra.mxu0 0
        %1747 = vmatprep.subr.bf16.mxu0 0
        %1748 = vmatpush1.bf16.msra.mxu0 0
        %1749 = vmatprep.subr.bf16.mxu0 0
        %1750 = vmatpush1.bf16.msra.mxu0 0
        %1751 = vmatprep.subr.bf16.mxu0 0
        %1752 = vmatpush1.bf16.msra.mxu0 0
        %1753 = vmatprep.subr.bf16.mxu0 0
        %1754 = vmatpush1.bf16.msra.mxu0 0
        %1755 = vmatprep.mubr.bf16.mxu0 0
        %1756 = vmatmul.mubr.bf16.gmra.mrb[0].mxu0 %v1718
        %v1757 = vpop.f32.mrb[0].mxu0
        %v1758 = vadd.f32 0.0, %v1757
        %v1759 = vpop.f32.mrb[0].mxu0
        %v1760 = vpop.f32.mrb[0].mxu0
        %v1761 = vadd.f32 0.0, %v1760
        %v1762 = vpop.f32.mrb[0].mxu0
        %1763 = vmatprep.mubr.bf16.mxu0 0
        %1764 = vmatmul.mubr.bf16.gmra.mrb[0].mxu0 %v1721
        %v1765 = vpop.f32.mrb[0].mxu0
        %v1766 = vadd.f32 0.0, %v1765
        %v1767 = vpop.f32.mrb[0].mxu0
        %v1768 = vpop.f32.mrb[0].mxu0
        %v1769 = vadd.f32 0.0, %v1768
        %v1770 = vpop.f32.mrb[0].mxu0
        %1771 = vdwg.mxu0
        %v1772 = vmul.f32 %v1758, %v1412
        %v1773 = vmul.f32 %v1761, %v1415
        %v1774 = vmul.f32 %v1766, %v1420
        %v1775 = vmul.f32 %v1769, %v1423
        %v1776 = vadd.f32 %v1707, %v1772
        %v1777 = vadd.f32 %v1708, %v1773
        %v1778 = vadd.f32 %v1709, %v1774
        %v1779 = vadd.f32 %v1710, %v1775
        %v1780 = vmul.f32 %v1150, %v1260
        %v1781 = vmul.f32 %v1151, %v1263
        %v1782 = vmul.f32 %v1152, %v1268
        %v1783 = vmul.f32 %v1153, %v1271
        %v1784 = vpack.c.bf16 %v1781, %v1780
        %v1785 = vpack.c.bf16 %v1783, %v1782
        %1786 = vmatprep.subr.bf16.mxu0 0
        %1787 = vmatpush1.bf16.msra.mxu0 %v1480
        %1788 = vmatprep.subr.bf16.mxu0 0
        %1789 = vmatpush1.bf16.msra.mxu0 %v1481
        %1790 = vmatprep.subr.bf16.mxu0 0
        %1791 = vmatpush1.bf16.msra.mxu0 %v1482
        %1792 = vmatprep.subr.bf16.mxu0 0
        %1793 = vmatpush1.bf16.msra.mxu0 %v1483
        %1794 = vmatprep.subr.bf16.mxu0 0
        %1795 = vmatpush1.bf16.msra.mxu0 %v1484
        %1796 = vmatprep.subr.bf16.mxu0 0
        %1797 = vmatpush1.bf16.msra.mxu0 %v1485
        %1798 = vmatprep.subr.bf16.mxu0 0
        %1799 = vmatpush1.bf16.msra.mxu0 %v1486
        %1800 = vmatprep.subr.bf16.mxu0 0
        %1801 = vmatpush1.bf16.msra.mxu0 %v1487
        %1802 = vmatprep.subr.bf16.mxu0 0
        %1803 = vmatpush1.bf16.msra.mxu0 0
        %1804 = vmatprep.subr.bf16.mxu0 0
        %1805 = vmatpush1.bf16.msra.mxu0 0
        %1806 = vmatprep.subr.bf16.mxu0 0
        %1807 = vmatpush1.bf16.msra.mxu0 0
        %1808 = vmatprep.subr.bf16.mxu0 0
        %1809 = vmatpush1.bf16.msra.mxu0 0
        %1810 = vmatprep.subr.bf16.mxu0 0
        %1811 = vmatpush1.bf16.msra.mxu0 0
        %1812 = vmatprep.subr.bf16.mxu0 0
        %1813 = vmatpush1.bf16.msra.mxu0 0
        %1814 = vmatprep.subr.bf16.mxu0 0
        %1815 = vmatpush1.bf16.msra.mxu0 0
        %1816 = vmatprep.subr.bf16.mxu0 0
        %1817 = vmatpush1.bf16.msra.mxu0 0
        %1818 = vmatprep.mubr.bf16.mxu0 0
        %1819 = vmatmul.mubr.bf16.gmra.mrb[0].mxu0 %v1784
        %v1820 = vpop.f32.mrb[0].mxu0
        %v1821 = vadd.f32 0.0, %v1820
        %v1822 = vpop.f32.mrb[0].mxu0
        %v1823 = vpop.f32.mrb[0].mxu0
        %v1824 = vadd.f32 0.0, %v1823
        %v1825 = vpop.f32.mrb[0].mxu0
        %1826 = vmatprep.mubr.bf16.mxu0 0
        %1827 = vmatmul.mubr.bf16.gmra.mrb[0].mxu0 %v1785
        %v1828 = vpop.f32.mrb[0].mxu0
        %v1829 = vadd.f32 0.0, %v1828
        %v1830 = vpop.f32.mrb[0].mxu0
        %v1831 = vpop.f32.mrb[0].mxu0
        %v1832 = vadd.f32 0.0, %v1831
        %v1833 = vpop.f32.mrb[0].mxu0
        %1834 = vdwg.mxu0
        %v1835 = vmul.f32 %v1150, %v1276
        %v1836 = vmul.f32 %v1151, %v1279
        %v1837 = vmul.f32 %v1152, %v1284
        %v1838 = vmul.f32 %v1153, %v1287
        %v1839 = vpack.c.bf16 %v1836, %v1835
        %v1840 = vpack.c.bf16 %v1838, %v1837
        %1841 = vmatprep.subr.bf16.mxu0 0
        %1842 = vmatpush1.bf16.msra.mxu0 %v1480
        %1843 = vmatprep.subr.bf16.mxu0 0
        %1844 = vmatpush1.bf16.msra.mxu0 %v1481
        %1845 = vmatprep.subr.bf16.mxu0 0
        %1846 = vmatpush1.bf16.msra.mxu0 %v1482
        %1847 = vmatprep.subr.bf16.mxu0 0
        %1848 = vmatpush1.bf16.msra.mxu0 %v1483
        %1849 = vmatprep.subr.bf16.mxu0 0
        %1850 = vmatpush1.bf16.msra.mxu0 %v1484
        %1851 = vmatprep.subr.bf16.mxu0 0
        %1852 = vmatpush1.bf16.msra.mxu0 %v1485
        %1853 = vmatprep.subr.bf16.mxu0 0
        %1854 = vmatpush1.bf16.msra.mxu0 %v1486
        %1855 = vmatprep.subr.bf16.mxu0 0
        %1856 = vmatpush1.bf16.msra.mxu0 %v1487
        %1857 = vmatprep.subr.bf16.mxu0 0
        %1858 = vmatpush1.bf16.msra.mxu0 0
        %1859 = vmatprep.subr.bf16.mxu0 0
        %1860 = vmatpush1.bf16.msra.mxu0 0
        %1861 = vmatprep.subr.bf16.mxu0 0
        %1862 = vmatpush1.bf16.msra.mxu0 0
        %1863 = vmatprep.subr.bf16.mxu0 0
        %1864 = vmatpush1.bf16.msra.mxu0 0
        %1865 = vmatprep.subr.bf16.mxu0 0
        %1866 = vmatpush1.bf16.msra.mxu0 0
        %1867 = vmatprep.subr.bf16.mxu0 0
        %1868 = vmatpush1.bf16.msra.mxu0 0
        %1869 = vmatprep.subr.bf16.mxu0 0
        %1870 = vmatpush1.bf16.msra.mxu0 0
        %1871 = vmatprep.subr.bf16.mxu0 0
        %1872 = vmatpush1.bf16.msra.mxu0 0
        %1873 = vmatprep.mubr.bf16.mxu0 0
        %1874 = vmatmul.mubr.bf16.gmra.mrb[0].mxu0 %v1839
        %v1875 = vpop.f32.mrb[0].mxu0
        %v1876 = vadd.f32 0.0, %v1875
        %v1877 = vpop.f32.mrb[0].mxu0
        %v1878 = vpop.f32.mrb[0].mxu0
        %v1879 = vadd.f32 0.0, %v1878
        %v1880 = vpop.f32.mrb[0].mxu0
        %1881 = vmatprep.mubr.bf16.mxu0 0
        %1882 = vmatmul.mubr.bf16.gmra.mrb[0].mxu0 %v1840
        %v1883 = vpop.f32.mrb[0].mxu0
        %v1884 = vadd.f32 0.0, %v1883
        %v1885 = vpop.f32.mrb[0].mxu0
        %v1886 = vpop.f32.mrb[0].mxu0
        %v1887 = vadd.f32 0.0, %v1886
        %v1888 = vpop.f32.mrb[0].mxu0
        %1889 = vdwg.mxu0
        %v1890 = vmax.f32 %v1821, %v1876
        %v1891 = vmax.f32 %v1824, %v1879
        %v1892 = vmax.f32 %v1829, %v1884
        %v1893 = vmax.f32 %v1832, %v1887
        %v1894 = vsub.f32 %v1821, %v1890
        %v1895 = vsub.f32 %v1824, %v1891
        %v1896 = vsub.f32 %v1829, %v1892
        %v1897 = vsub.f32 %v1832, %v1893
        %v1898 = vmul.f32 %v1894, 1.442695
        %v1899 = vpow.pop %v1898
        %v1900 = vmul.f32 %v1895, 1.442695
        %v1901 = vpow.pop %v1900
        %v1902 = vmul.f32 %v1896, 1.442695
        %v1903 = vpow.pop %v1902
        %v1904 = vmul.f32 %v1897, 1.442695
        %v1905 = vpow.pop %v1904
        %v1906 = vsub.f32 %v1876, %v1890
        %v1907 = vsub.f32 %v1879, %v1891
        %v1908 = vsub.f32 %v1884, %v1892
        %v1909 = vsub.f32 %v1887, %v1893
        %v1910 = vmul.f32 %v1906, 1.442695
        %v1911 = vpow.pop %v1910
        %v1912 = vmul.f32 %v1907, 1.442695
        %v1913 = vpow.pop %v1912
        %v1914 = vmul.f32 %v1908, 1.442695
        %v1915 = vpow.pop %v1914
        %v1916 = vmul.f32 %v1909, 1.442695
        %v1917 = vpow.pop %v1916
        %v1918 = vadd.f32 %v1899, %v1911
        %v1919 = vadd.f32 %v1901, %v1913
        %v1920 = vadd.f32 %v1903, %v1915
        %v1921 = vadd.f32 %v1905, %v1917
        %v1922 = vrcp.pop %v1918
        %v1923 = vrcp.pop %v1919
        %v1924 = vrcp.pop %v1920
        %v1925 = vrcp.pop %v1921
        %v1926 = vmul.f32 %v1899, %v1922
        %v1927 = vmul.f32 %v1901, %v1923
        %v1928 = vmul.f32 %v1903, %v1924
        %v1929 = vmul.f32 %v1905, %v1925
        %v1930 = vpack.c.bf16 %v1927, %v1926
        %v1931 = vpack.c.bf16 %v1929, %v1928
        %v1933 = vsel %vm1643, %v1930, 0
        %v1936 = vsel %vm1643, %v1931, 0
        %1938 = vmatprep.subr.bf16.mxu0 0
        %1939 = vmatpush1.bf16.msra.mxu0 %v1652
        %1940 = vmatprep.subr.bf16.mxu0 0
        %1941 = vmatpush1.bf16.msra.mxu0 0
        %1942 = vmatprep.subr.bf16.mxu0 0
        %1943 = vmatpush1.bf16.msra.mxu0 0
        %1944 = vmatprep.subr.bf16.mxu0 0
        %1945 = vmatpush1.bf16.msra.mxu0 0
        %1946 = vmatprep.subr.bf16.mxu0 0
        %1947 = vmatpush1.bf16.msra.mxu0 0
        %1948 = vmatprep.subr.bf16.mxu0 0
        %1949 = vmatpush1.bf16.msra.mxu0 0
        %1950 = vmatprep.subr.bf16.mxu0 0
        %1951 = vmatpush1.bf16.msra.mxu0 0
        %1952 = vmatprep.subr.bf16.mxu0 0
        %1953 = vmatpush1.bf16.msra.mxu0 0
        %1954 = vmatprep.subr.bf16.mxu0 0
        %1955 = vmatpush1.bf16.msra.mxu0 0
        %1956 = vmatprep.subr.bf16.mxu0 0
        %1957 = vmatpush1.bf16.msra.mxu0 0
        %1958 = vmatprep.subr.bf16.mxu0 0
        %1959 = vmatpush1.bf16.msra.mxu0 0
        %1960 = vmatprep.subr.bf16.mxu0 0
        %1961 = vmatpush1.bf16.msra.mxu0 0
        %1962 = vmatprep.subr.bf16.mxu0 0
        %1963 = vmatpush1.bf16.msra.mxu0 0
        %1964 = vmatprep.subr.bf16.mxu0 0
        %1965 = vmatpush1.bf16.msra.mxu0 0
        %1966 = vmatprep.subr.bf16.mxu0 0
        %1967 = vmatpush1.bf16.msra.mxu0 0
        %1968 = vmatprep.subr.bf16.mxu0 0
        %1969 = vmatpush1.bf16.msra.mxu0 0
        %1970 = vmatprep.mubr.bf16.mxu0 0
        %1971 = vmatmul.mubr.bf16.gmra.mrb[0].mxu0 %v1933
        %v1972 = vpop.f32.mrb[0].mxu0
        %v1973 = vadd.f32 0.0, %v1972
        %v1974 = vpop.f32.mrb[0].mxu0
        %v1975 = vpop.f32.mrb[0].mxu0
        %v1976 = vadd.f32 0.0, %v1975
        %v1977 = vpop.f32.mrb[0].mxu0
        %1978 = vmatprep.mubr.bf16.mxu0 0
        %1979 = vmatmul.mubr.bf16.gmra.mrb[0].mxu0 %v1936
        %v1980 = vpop.f32.mrb[0].mxu0
        %v1981 = vadd.f32 0.0, %v1980
        %v1982 = vpop.f32.mrb[0].mxu0
        %v1983 = vpop.f32.mrb[0].mxu0
        %v1984 = vadd.f32 0.0, %v1983
        %v1985 = vpop.f32.mrb[0].mxu0
        %1986 = vdwg.mxu0
        %v1987 = vmul.f32 %v1973, %v1396
        %v1988 = vmul.f32 %v1976, %v1399
        %v1989 = vmul.f32 %v1981, %v1404
        %v1990 = vmul.f32 %v1984, %v1407
        %v1991 = vadd.f32 %v1987, 0.0
        %v1992 = vadd.f32 %v1988, 0.0
        %v1993 = vadd.f32 %v1989, 0.0
        %v1994 = vadd.f32 %v1990, 0.0
        %v1995 = vmul.f32 %v1911, %v1922
        %v1996 = vmul.f32 %v1913, %v1923
        %v1997 = vmul.f32 %v1915, %v1924
        %v1998 = vmul.f32 %v1917, %v1925
        %v1999 = vpack.c.bf16 %v1996, %v1995
        %v2000 = vpack.c.bf16 %v1998, %v1997
        %v2002 = vsel %vm1643, %v1999, 0
        %v2005 = vsel %vm1643, %v2000, 0
        %2007 = vmatprep.subr.bf16.mxu0 0
        %2008 = vmatpush1.bf16.msra.mxu0 %v1652
        %2009 = vmatprep.subr.bf16.mxu0 0
        %2010 = vmatpush1.bf16.msra.mxu0 0
        %2011 = vmatprep.subr.bf16.mxu0 0
        %2012 = vmatpush1.bf16.msra.mxu0 0
        %2013 = vmatprep.subr.bf16.mxu0 0
        %2014 = vmatpush1.bf16.msra.mxu0 0
        %2015 = vmatprep.subr.bf16.mxu0 0
        %2016 = vmatpush1.bf16.msra.mxu0 0
        %2017 = vmatprep.subr.bf16.mxu0 0
        %2018 = vmatpush1.bf16.msra.mxu0 0
        %2019 = vmatprep.subr.bf16.mxu0 0
        %2020 = vmatpush1.bf16.msra.mxu0 0
        %2021 = vmatprep.subr.bf16.mxu0 0
        %2022 = vmatpush1.bf16.msra.mxu0 0
        %2023 = vmatprep.subr.bf16.mxu0 0
        %2024 = vmatpush1.bf16.msra.mxu0 0
        %2025 = vmatprep.subr.bf16.mxu0 0
        %2026 = vmatpush1.bf16.msra.mxu0 0
        %2027 = vmatprep.subr.bf16.mxu0 0
        %2028 = vmatpush1.bf16.msra.mxu0 0
        %2029 = vmatprep.subr.bf16.mxu0 0
        %2030 = vmatpush1.bf16.msra.mxu0 0
        %2031 = vmatprep.subr.bf16.mxu0 0
        %2032 = vmatpush1.bf16.msra.mxu0 0
        %2033 = vmatprep.subr.bf16.mxu0 0
        %2034 = vmatpush1.bf16.msra.mxu0 0
        %2035 = vmatprep.subr.bf16.mxu0 0
        %2036 = vmatpush1.bf16.msra.mxu0 0
        %2037 = vmatprep.subr.bf16.mxu0 0
        %2038 = vmatpush1.bf16.msra.mxu0 0
        %2039 = vmatprep.mubr.bf16.mxu0 0
        %2040 = vmatmul.mubr.bf16.gmra.mrb[0].mxu0 %v2002
        %v2041 = vpop.f32.mrb[0].mxu0
        %v2042 = vadd.f32 0.0, %v2041
        %v2043 = vpop.f32.mrb[0].mxu0
        %v2044 = vpop.f32.mrb[0].mxu0
        %v2045 = vadd.f32 0.0, %v2044
        %v2046 = vpop.f32.mrb[0].mxu0
        %2047 = vmatprep.mubr.bf16.mxu0 0
        %2048 = vmatmul.mubr.bf16.gmra.mrb[0].mxu0 %v2005
        %v2049 = vpop.f32.mrb[0].mxu0
        %v2050 = vadd.f32 0.0, %v2049
        %v2051 = vpop.f32.mrb[0].mxu0
        %v2052 = vpop.f32.mrb[0].mxu0
        %v2053 = vadd.f32 0.0, %v2052
        %v2054 = vpop.f32.mrb[0].mxu0
        %2055 = vdwg.mxu0
        %v2056 = vmul.f32 %v2042, %v1412
        %v2057 = vmul.f32 %v2045, %v1415
        %v2058 = vmul.f32 %v2050, %v1420
        %v2059 = vmul.f32 %v2053, %v1423
        %v2060 = vadd.f32 %v1991, %v2056
        %v2061 = vadd.f32 %v1992, %v2057
        %v2062 = vadd.f32 %v1993, %v2058
        %v2063 = vadd.f32 %v1994, %v2059
        %v2064 = vpack.c.bf16 %v1777, %v1776
        %v2065 = vpack.c.bf16 %v1779, %v1778
        %v2066 = vpack.c.bf16 %v2061, %v2060
        %v2067 = vpack.c.bf16 %v2063, %v2062
        %v2068 = vld [vmem:[%s11] sm:$0xf]
        %v2069 = vld [vmem:[%s11 + $0x4] sm:$0xf]
        %v2070 = vld [vmem:[%s11 + $0x8] sm:$0xf]
        %v2071 = vld [vmem:[%s11 + $0xc] sm:$0xf]
        %v2072 = vld [vmem:[%s11 + $0x10] sm:$0xf]
        %v2073 = vld [vmem:[%s11 + $0x14] sm:$0xf]
        %v2074 = vld [vmem:[%s11 + $0x18] sm:$0xf]
        %v2075 = vld [vmem:[%s11 + $0x1c] sm:$0xf]
        %v2076 = vld [vmem:[%s11 + $0x20] sm:$0xf]
        %v2077 = vld [vmem:[%s11 + $0x24] sm:$0xf]
        %v2078 = vld [vmem:[%s11 + $0x28] sm:$0xf]
        %v2079 = vld [vmem:[%s11 + $0x2c] sm:$0xf]
        %v2080 = vld [vmem:[%s11 + $0x30] sm:$0xf]
        %v2081 = vld [vmem:[%s11 + $0x34] sm:$0xf]
        %v2082 = vld [vmem:[%s11 + $0x38] sm:$0xf]
        %v2083 = vld [vmem:[%s11 + $0x3c] sm:$0xf]
        %v2084 = vld [vmem:[%s12] sm:$0x1]
        %v2086 = vlaneseq
        %v2087 = vshrl.u32 %v2086, 7
        %v2088 = vsub.s32 0, %v2087
        %v2089 = vrot.slane %v2084, %v2088
        %v2107 = vunpack.c.l.b16 %v2068
        %v2108 = vunpack.c.l.b16 %v2069
        %v2109 = vunpack.c.l.b16 %v2070
        %v2110 = vunpack.c.l.b16 %v2071
        %v2111 = vunpack.c.l.b16 %v2072
        %v2112 = vunpack.c.l.b16 %v2073
        %v2113 = vunpack.c.l.b16 %v2074
        %v2114 = vunpack.c.l.b16 %v2075
        %v2115 = vunpack.c.l.b16 %v2076
        %v2116 = vunpack.c.l.b16 %v2077
        %v2117 = vunpack.c.l.b16 %v2078
        %v2118 = vunpack.c.l.b16 %v2079
        %v2119 = vunpack.c.l.b16 %v2080
        %v2120 = vunpack.c.l.b16 %v2081
        %v2121 = vunpack.c.l.b16 %v2082
        %v2122 = vunpack.c.l.b16 %v2083
        %v2123 = vpack.c.b16 %v2108, %v2107
        %v2124 = vpack.c.b16 %v2110, %v2109
        %v2125 = vpack.c.b16 %v2112, %v2111
        %v2126 = vpack.c.b16 %v2114, %v2113
        %v2127 = vpack.c.b16 %v2116, %v2115
        %v2128 = vpack.c.b16 %v2118, %v2117
        %v2129 = vpack.c.b16 %v2120, %v2119
        %v2130 = vpack.c.b16 %v2122, %v2121
        %2139 = vmatprep.subr.bf16.mxu0 0
        %2140 = vmatpush1.bf16.msra.mxu0 %v2123
        %2141 = vmatprep.subr.bf16.mxu0 0
        %2142 = vmatpush1.bf16.msra.mxu0 %v2124
        %2143 = vmatprep.subr.bf16.mxu0 0
        %2144 = vmatpush1.bf16.msra.mxu0 %v2125
        %2145 = vmatprep.subr.bf16.mxu0 0
        %2146 = vmatpush1.bf16.msra.mxu0 %v2126
        %2147 = vmatprep.subr.bf16.mxu0 0
        %2148 = vmatpush1.bf16.msra.mxu0 %v2127
        %2149 = vmatprep.subr.bf16.mxu0 0
        %2150 = vmatpush1.bf16.msra.mxu0 %v2128
        %2151 = vmatprep.subr.bf16.mxu0 0
        %2152 = vmatpush1.bf16.msra.mxu0 %v2129
        %2153 = vmatprep.subr.bf16.mxu0 0
        %2154 = vmatpush1.bf16.msra.mxu0 %v2130
        %2155 = vmatprep.subr.bf16.mxu0 0
        %2156 = vmatpush1.bf16.msra.mxu0 0
        %2157 = vmatprep.subr.bf16.mxu0 0
        %2158 = vmatpush1.bf16.msra.mxu0 0
        %2159 = vmatprep.subr.bf16.mxu0 0
        %2160 = vmatpush1.bf16.msra.mxu0 0
        %2161 = vmatprep.subr.bf16.mxu0 0
        %2162 = vmatpush1.bf16.msra.mxu0 0
        %2163 = vmatprep.subr.bf16.mxu0 0
        %2164 = vmatpush1.bf16.msra.mxu0 0
        %2165 = vmatprep.subr.bf16.mxu0 0
        %2166 = vmatpush1.bf16.msra.mxu0 0
        %2167 = vmatprep.subr.bf16.mxu0 0
        %2168 = vmatpush1.bf16.msra.mxu0 0
        %2169 = vmatprep.subr.bf16.mxu0 0
        %2170 = vmatpush1.bf16.msra.mxu0 0
        %2171 = vmatprep.mubr.bf16.mxu0 0
        %2172 = vmatmul.mubr.bf16.gmra.mrb[0].mxu0 %v2064
        %v2173 = vpop.f32.mrb[0].mxu0
        %v2174 = vadd.f32 %v2089, %v2173
        %v2175 = vpop.f32.mrb[0].mxu0
        %v2176 = vpop.f32.mrb[0].mxu0
        %v2177 = vadd.f32 %v2089, %v2176
        %v2178 = vpop.f32.mrb[0].mxu0
        %2179 = vmatprep.mubr.bf16.mxu0 0
        %2180 = vmatmul.mubr.bf16.gmra.mrb[0].mxu0 %v2065
        %v2181 = vpop.f32.mrb[0].mxu0
        %v2182 = vadd.f32 %v2089, %v2181
        %v2183 = vpop.f32.mrb[0].mxu0
        %v2184 = vpop.f32.mrb[0].mxu0
        %v2185 = vadd.f32 %v2089, %v2184
        %v2186 = vpop.f32.mrb[0].mxu0
        %2187 = vmatprep.mubr.bf16.mxu0 0
        %2188 = vmatmul.mubr.bf16.gmra.mrb[0].mxu0 %v2066
        %v2189 = vpop.f32.mrb[0].mxu0
        %v2190 = vadd.f32 %v2089, %v2189
        %v2191 = vpop.f32.mrb[0].mxu0
        %v2192 = vpop.f32.mrb[0].mxu0
        %v2193 = vadd.f32 %v2089, %v2192
        %v2194 = vpop.f32.mrb[0].mxu0
        %2195 = vmatprep.mubr.bf16.mxu0 0
        %2196 = vmatmul.mubr.bf16.gmra.mrb[0].mxu0 %v2067
        %v2197 = vpop.f32.mrb[0].mxu0
        %v2198 = vadd.f32 %v2089, %v2197
        %v2199 = vpop.f32.mrb[0].mxu0
        %v2200 = vpop.f32.mrb[0].mxu0
        %v2201 = vadd.f32 %v2089, %v2200
        %v2202 = vpop.f32.mrb[0].mxu0
        %2203 = vdwg.mxu0
        %v2204 = vpack.c.bf16 %v880, %v879
        %v2205 = vpack.c.bf16 %v882, %v881
        %v2206 = vpack.c.bf16 %v884, %v883
        %v2207 = vpack.c.bf16 %v886, %v885
        %v2208 = vld [vmem:[%s13] sm:$0xf]
        %v2209 = vld [vmem:[%s13 + $0x4] sm:$0xf]
        %v2210 = vld [vmem:[%s13 + $0x8] sm:$0xf]
        %v2211 = vld [vmem:[%s13 + $0xc] sm:$0xf]
        %v2212 = vld [vmem:[%s13 + $0x10] sm:$0xf]
        %v2213 = vld [vmem:[%s13 + $0x14] sm:$0xf]
        %v2214 = vld [vmem:[%s13 + $0x18] sm:$0xf]
        %v2215 = vld [vmem:[%s13 + $0x1c] sm:$0xf]
        %v2216 = vld [vmem:[%s13 + $0x20] sm:$0xf]
        %v2217 = vld [vmem:[%s13 + $0x24] sm:$0xf]
        %v2218 = vld [vmem:[%s13 + $0x28] sm:$0xf]
        %v2219 = vld [vmem:[%s13 + $0x2c] sm:$0xf]
        %v2220 = vld [vmem:[%s13 + $0x30] sm:$0xf]
        %v2221 = vld [vmem:[%s13 + $0x34] sm:$0xf]
        %v2222 = vld [vmem:[%s13 + $0x38] sm:$0xf]
        %v2223 = vld [vmem:[%s13 + $0x3c] sm:$0xf]
        %v2224 = vpack.c.bf16 %v2177, %v2174
        %v2225 = vpack.c.bf16 %v2185, %v2182
        %v2226 = vpack.c.bf16 %v2193, %v2190
        %v2227 = vpack.c.bf16 %v2201, %v2198
        %v2228 = vld [vmem:[%s14] sm:$0xf]
        %v2229 = vld [vmem:[%s14 + $0x4] sm:$0xf]
        %v2230 = vld [vmem:[%s14 + $0x8] sm:$0xf]
        %v2231 = vld [vmem:[%s14 + $0xc] sm:$0xf]
        %v2232 = vld [vmem:[%s14 + $0x10] sm:$0xf]
        %v2233 = vld [vmem:[%s14 + $0x14] sm:$0xf]
        %v2234 = vld [vmem:[%s14 + $0x18] sm:$0xf]
        %v2235 = vld [vmem:[%s14 + $0x1c] sm:$0xf]
        %v2236 = vld [vmem:[%s14 + $0x20] sm:$0xf]
        %v2237 = vld [vmem:[%s14 + $0x24] sm:$0xf]
        %v2238 = vld [vmem:[%s14 + $0x28] sm:$0xf]
        %v2239 = vld [vmem:[%s14 + $0x2c] sm:$0xf]
        %v2240 = vld [vmem:[%s14 + $0x30] sm:$0xf]
        %v2241 = vld [vmem:[%s14 + $0x34] sm:$0xf]
        %v2242 = vld [vmem:[%s14 + $0x38] sm:$0xf]
        %v2243 = vld [vmem:[%s14 + $0x3c] sm:$0xf]
        %v2260 = vunpack.c.l.b16 %v2228
        %v2261 = vunpack.c.l.b16 %v2229
        %v2262 = vunpack.c.l.b16 %v2230
        %v2263 = vunpack.c.l.b16 %v2231
        %v2264 = vunpack.c.l.b16 %v2232
        %v2265 = vunpack.c.l.b16 %v2233
        %v2266 = vunpack.c.l.b16 %v2234
        %v2267 = vunpack.c.l.b16 %v2235
        %v2268 = vunpack.c.l.b16 %v2236
        %v2269 = vunpack.c.l.b16 %v2237
        %v2270 = vunpack.c.l.b16 %v2238
        %v2271 = vunpack.c.l.b16 %v2239
        %v2272 = vunpack.c.l.b16 %v2240
        %v2273 = vunpack.c.l.b16 %v2241
        %v2274 = vunpack.c.l.b16 %v2242
        %v2275 = vunpack.c.l.b16 %v2243
        %v2276 = vpack.c.b16 %v2261, %v2260
        %v2277 = vpack.c.b16 %v2263, %v2262
        %v2278 = vpack.c.b16 %v2265, %v2264
        %v2279 = vpack.c.b16 %v2267, %v2266
        %v2280 = vpack.c.b16 %v2269, %v2268
        %v2281 = vpack.c.b16 %v2271, %v2270
        %v2282 = vpack.c.b16 %v2273, %v2272
        %v2283 = vpack.c.b16 %v2275, %v2274
        %2292 = vmatprep.subr.bf16.mxu0 0
        %2293 = vmatpush1.bf16.msra.mxu0 %v2276
        %2294 = vmatprep.subr.bf16.mxu0 0
        %2295 = vmatpush1.bf16.msra.mxu0 %v2277
        %2296 = vmatprep.subr.bf16.mxu0 0
        %2297 = vmatpush1.bf16.msra.mxu0 %v2278
        %2298 = vmatprep.subr.bf16.mxu0 0
        %2299 = vmatpush1.bf16.msra.mxu0 %v2279
        %2300 = vmatprep.subr.bf16.mxu0 0
        %2301 = vmatpush1.bf16.msra.mxu0 %v2280
        %2302 = vmatprep.subr.bf16.mxu0 0
        %2303 = vmatpush1.bf16.msra.mxu0 %v2281
        %2304 = vmatprep.subr.bf16.mxu0 0
        %2305 = vmatpush1.bf16.msra.mxu0 %v2282
        %2306 = vmatprep.subr.bf16.mxu0 0
        %2307 = vmatpush1.bf16.msra.mxu0 %v2283
        %2308 = vmatprep.subr.bf16.mxu0 0
        %2309 = vmatpush1.bf16.msra.mxu0 0
        %2310 = vmatprep.subr.bf16.mxu0 0
        %2311 = vmatpush1.bf16.msra.mxu0 0
        %2312 = vmatprep.subr.bf16.mxu0 0
        %2313 = vmatpush1.bf16.msra.mxu0 0
        %2314 = vmatprep.subr.bf16.mxu0 0
        %2315 = vmatpush1.bf16.msra.mxu0 0
        %2316 = vmatprep.subr.bf16.mxu0 0
        %2317 = vmatpush1.bf16.msra.mxu0 0
        %2318 = vmatprep.subr.bf16.mxu0 0
        %2319 = vmatpush1.bf16.msra.mxu0 0
        %2320 = vmatprep.subr.bf16.mxu0 0
        %2321 = vmatpush1.bf16.msra.mxu0 0
        %2322 = vmatprep.subr.bf16.mxu0 0
        %2323 = vmatpush1.bf16.msra.mxu0 0
        %2324 = vmatprep.mubr.bf16.mxu0 0
        %2325 = vmatmul.mubr.bf16.gmra.mrb[0].mxu0 %v2224
        %v2326 = vpop.f32.mrb[0].mxu0
        %v2327 = vadd.f32 0.0, %v2326
        %v2328 = vpop.f32.mrb[0].mxu0
        %v2329 = vpop.f32.mrb[0].mxu0
        %v2330 = vadd.f32 0.0, %v2329
        %v2331 = vpop.f32.mrb[0].mxu0
        %2332 = vmatprep.mubr.bf16.mxu0 0
        %2333 = vmatmul.mubr.bf16.gmra.mrb[0].mxu0 %v2225
        %v2334 = vpop.f32.mrb[0].mxu0
        %v2335 = vadd.f32 0.0, %v2334
        %v2336 = vpop.f32.mrb[0].mxu0
        %v2337 = vpop.f32.mrb[0].mxu0
        %v2338 = vadd.f32 0.0, %v2337
        %v2339 = vpop.f32.mrb[0].mxu0
        %2340 = vmatprep.mubr.bf16.mxu0 0
        %2341 = vmatmul.mubr.bf16.gmra.mrb[0].mxu0 %v2226
        %v2342 = vpop.f32.mrb[0].mxu0
        %v2343 = vadd.f32 0.0, %v2342
        %v2344 = vpop.f32.mrb[0].mxu0
        %v2345 = vpop.f32.mrb[0].mxu0
        %v2346 = vadd.f32 0.0, %v2345
        %v2347 = vpop.f32.mrb[0].mxu0
        %2348 = vmatprep.mubr.bf16.mxu0 0
        %2349 = vmatmul.mubr.bf16.gmra.mrb[0].mxu0 %v2227
        %v2350 = vpop.f32.mrb[0].mxu0
        %v2351 = vadd.f32 0.0, %v2350
        %v2352 = vpop.f32.mrb[0].mxu0
        %v2353 = vpop.f32.mrb[0].mxu0
        %v2354 = vadd.f32 0.0, %v2353
        %v2355 = vpop.f32.mrb[0].mxu0
        %2356 = vdwg.mxu0
        %v2373 = vunpack.c.l.b16 %v2208
        %v2374 = vunpack.c.l.b16 %v2209
        %v2375 = vunpack.c.l.b16 %v2210
        %v2376 = vunpack.c.l.b16 %v2211
        %v2377 = vunpack.c.l.b16 %v2212
        %v2378 = vunpack.c.l.b16 %v2213
        %v2379 = vunpack.c.l.b16 %v2214
        %v2380 = vunpack.c.l.b16 %v2215
        %v2381 = vunpack.c.l.b16 %v2216
        %v2382 = vunpack.c.l.b16 %v2217
        %v2383 = vunpack.c.l.b16 %v2218
        %v2384 = vunpack.c.l.b16 %v2219
        %v2385 = vunpack.c.l.b16 %v2220
        %v2386 = vunpack.c.l.b16 %v2221
        %v2387 = vunpack.c.l.b16 %v2222
        %v2388 = vunpack.c.l.b16 %v2223
        %v2389 = vpack.c.b16 %v2374, %v2373
        %v2390 = vpack.c.b16 %v2376, %v2375
        %v2391 = vpack.c.b16 %v2378, %v2377
        %v2392 = vpack.c.b16 %v2380, %v2379
        %v2393 = vpack.c.b16 %v2382, %v2381
        %v2394 = vpack.c.b16 %v2384, %v2383
        %v2395 = vpack.c.b16 %v2386, %v2385
        %v2396 = vpack.c.b16 %v2388, %v2387
        %2405 = vmatprep.subr.bf16.mxu0 0
        %2406 = vmatpush1.bf16.msra.mxu0 %v2389
        %2407 = vmatprep.subr.bf16.mxu0 0
        %2408 = vmatpush1.bf16.msra.mxu0 %v2390
        %2409 = vmatprep.subr.bf16.mxu0 0
        %2410 = vmatpush1.bf16.msra.mxu0 %v2391
        %2411 = vmatprep.subr.bf16.mxu0 0
        %2412 = vmatpush1.bf16.msra.mxu0 %v2392
        %2413 = vmatprep.subr.bf16.mxu0 0
        %2414 = vmatpush1.bf16.msra.mxu0 %v2393
        %2415 = vmatprep.subr.bf16.mxu0 0
        %2416 = vmatpush1.bf16.msra.mxu0 %v2394
        %2417 = vmatprep.subr.bf16.mxu0 0
        %2418 = vmatpush1.bf16.msra.mxu0 %v2395
        %2419 = vmatprep.subr.bf16.mxu0 0
        %2420 = vmatpush1.bf16.msra.mxu0 %v2396
        %2421 = vmatprep.subr.bf16.mxu0 0
        %2422 = vmatpush1.bf16.msra.mxu0 0
        %2423 = vmatprep.subr.bf16.mxu0 0
        %2424 = vmatpush1.bf16.msra.mxu0 0
        %2425 = vmatprep.subr.bf16.mxu0 0
        %2426 = vmatpush1.bf16.msra.mxu0 0
        %2427 = vmatprep.subr.bf16.mxu0 0
        %2428 = vmatpush1.bf16.msra.mxu0 0
        %2429 = vmatprep.subr.bf16.mxu0 0
        %2430 = vmatpush1.bf16.msra.mxu0 0
        %2431 = vmatprep.subr.bf16.mxu0 0
        %2432 = vmatpush1.bf16.msra.mxu0 0
        %2433 = vmatprep.subr.bf16.mxu0 0
        %2434 = vmatpush1.bf16.msra.mxu0 0
        %2435 = vmatprep.subr.bf16.mxu0 0
        %2436 = vmatpush1.bf16.msra.mxu0 0
        %2437 = vmatprep.mubr.bf16.mxu0 0
        %2438 = vmatmul.mubr.bf16.gmra.mrb[0].mxu0 %v2204
        %v2439 = vpop.f32.mrb[0].mxu0
        %v2440 = vadd.f32 %v2327, %v2439
        %v2441 = vpop.f32.mrb[0].mxu0
        %v2442 = vpop.f32.mrb[0].mxu0
        %v2443 = vadd.f32 %v2330, %v2442
        %v2444 = vpop.f32.mrb[0].mxu0
        %2445 = vmatprep.mubr.bf16.mxu0 0
        %2446 = vmatmul.mubr.bf16.gmra.mrb[0].mxu0 %v2205
        %v2447 = vpop.f32.mrb[0].mxu0
        %v2448 = vadd.f32 %v2335, %v2447
        %v2449 = vpop.f32.mrb[0].mxu0
        %v2450 = vpop.f32.mrb[0].mxu0
        %v2451 = vadd.f32 %v2338, %v2450
        %v2452 = vpop.f32.mrb[0].mxu0
        %2453 = vmatprep.mubr.bf16.mxu0 0
        %2454 = vmatmul.mubr.bf16.gmra.mrb[0].mxu0 %v2206
        %v2455 = vpop.f32.mrb[0].mxu0
        %v2456 = vadd.f32 %v2343, %v2455
        %v2457 = vpop.f32.mrb[0].mxu0
        %v2458 = vpop.f32.mrb[0].mxu0
        %v2459 = vadd.f32 %v2346, %v2458
        %v2460 = vpop.f32.mrb[0].mxu0
        %2461 = vmatprep.mubr.bf16.mxu0 0
        %2462 = vmatmul.mubr.bf16.gmra.mrb[0].mxu0 %v2207
        %v2463 = vpop.f32.mrb[0].mxu0
        %v2464 = vadd.f32 %v2351, %v2463
        %v2465 = vpop.f32.mrb[0].mxu0
        %v2466 = vpop.f32.mrb[0].mxu0
        %v2467 = vadd.f32 %v2354, %v2466
        %v2468 = vpop.f32.mrb[0].mxu0
        %2469 = vdwg.mxu0
        %v2470 = vld [vmem:[%s15] sm:$0x1]
        %v2472 = vlaneseq
        %v2473 = vshrl.u32 %v2472, 7
        %v2474 = vsub.s32 0, %v2473
        %v2475 = vrot.slane %v2470, %v2474
        %v2477 = vadd.f32 %v2440, %v2475
        %v2478 = vadd.f32 %v2443, %v2475
        %v2479 = vadd.f32 %v2448, %v2475
        %v2480 = vadd.f32 %v2451, %v2475
        %v2481 = vadd.f32 %v2456, %v2475
        %v2482 = vadd.f32 %v2459, %v2475
        %v2483 = vadd.f32 %v2464, %v2475
        %v2484 = vadd.f32 %v2467, %v2475
        %v2485 = vadd.f32 %v879, %v2477
        %v2486 = vadd.f32 %v880, %v2478
        %v2487 = vadd.f32 %v881, %v2479
        %v2488 = vadd.f32 %v882, %v2480
        %v2489 = vadd.f32 %v883, %v2481
        %v2490 = vadd.f32 %v884, %v2482
        %v2491 = vadd.f32 %v885, %v2483
        %v2492 = vadd.f32 %v886, %v2484
        %v2493 = vld [vmem:[%s16] sm:$0x1]
        %v2494 = vld [vmem:[%s17] sm:$0x1]
        %2495 = vadd.xlane.f32.xlu0 %v2485
        %v2496 = vpop.xlane.xlu0 %2495
        %2497 = vadd.xlane.f32.xlu0 %v2486
        %v2498 = vpop.xlane.xlu0 %2497
        %2499 = vadd.xlane.f32.xlu0 %v2487
        %v2500 = vpop.xlane.xlu0 %2499
        %2501 = vadd.xlane.f32.xlu0 %v2488
        %v2502 = vpop.xlane.xlu0 %2501
        %2503 = vadd.xlane.f32.xlu0 %v2489
        %v2504 = vpop.xlane.xlu0 %2503
        %2505 = vadd.xlane.f32.xlu0 %v2490
        %v2506 = vpop.xlane.xlu0 %2505
        %2507 = vadd.xlane.f32.xlu0 %v2491
        %v2508 = vpop.xlane.xlu0 %2507
        %2509 = vadd.xlane.f32.xlu0 %v2492
        %v2510 = vpop.xlane.xlu0 %2509
        %v2511 = vmul.f32 %v2496, %v905
        %v2512 = vmul.f32 %v2498, %v905
        %v2513 = vmul.f32 %v2500, %v905
        %v2514 = vmul.f32 %v2502, %v905
        %v2515 = vmul.f32 %v2504, %v905
        %v2516 = vmul.f32 %v2506, %v905
        %v2517 = vmul.f32 %v2508, %v905
        %v2518 = vmul.f32 %v2510, %v905
        %v2519 = vsub.f32 %v2485, %v2511
        %v2520 = vsub.f32 %v2486, %v2512
        %v2521 = vsub.f32 %v2487, %v2513
        %v2522 = vsub.f32 %v2488, %v2514
        %v2523 = vsub.f32 %v2489, %v2515
        %v2524 = vsub.f32 %v2490, %v2516
        %v2525 = vsub.f32 %v2491, %v2517
        %v2526 = vsub.f32 %v2492, %v2518
        %v2527 = vmul.f32 %v2519, %v2519
        %v2528 = vmul.f32 %v2520, %v2520
        %v2529 = vmul.f32 %v2521, %v2521
        %v2530 = vmul.f32 %v2522, %v2522
        %v2531 = vmul.f32 %v2523, %v2523
        %v2532 = vmul.f32 %v2524, %v2524
        %v2533 = vmul.f32 %v2525, %v2525
        %v2534 = vmul.f32 %v2526, %v2526
        %2535 = vadd.xlane.f32.xlu0 %v2527
        %v2536 = vpop.xlane.xlu0 %2535
        %2537 = vadd.xlane.f32.xlu0 %v2528
        %v2538 = vpop.xlane.xlu0 %2537
        %2539 = vadd.xlane.f32.xlu0 %v2529
        %v2540 = vpop.xlane.xlu0 %2539
        %2541 = vadd.xlane.f32.xlu0 %v2530
        %v2542 = vpop.xlane.xlu0 %2541
        %2543 = vadd.xlane.f32.xlu0 %v2531
        %v2544 = vpop.xlane.xlu0 %2543
        %2545 = vadd.xlane.f32.xlu0 %v2532
        %v2546 = vpop.xlane.xlu0 %2545
        %2547 = vadd.xlane.f32.xlu0 %v2533
        %v2548 = vpop.xlane.xlu0 %2547
        %2549 = vadd.xlane.f32.xlu0 %v2534
        %v2550 = vpop.xlane.xlu0 %2549
        %v2551 = vmul.f32 %v2536, %v905
        %v2552 = vmul.f32 %v2538, %v905
        %v2553 = vmul.f32 %v2540, %v905
        %v2554 = vmul.f32 %v2542, %v905
        %v2555 = vmul.f32 %v2544, %v905
        %v2556 = vmul.f32 %v2546, %v905
        %v2557 = vmul.f32 %v2548, %v905
        %v2558 = vmul.f32 %v2550, %v905
        %v2559 = vadd.f32 %v2551, 1e-05
        %v2560 = vadd.f32 %v2552, 1e-05
        %v2561 = vadd.f32 %v2553, 1e-05
        %v2562 = vadd.f32 %v2554, 1e-05
        %v2563 = vadd.f32 %v2555, 1e-05
        %v2564 = vadd.f32 %v2556, 1e-05
        %v2565 = vadd.f32 %v2557, 1e-05
        %v2566 = vadd.f32 %v2558, 1e-05
        %v2567 = vrsqrt.pop %v2559
        %v2568 = vrsqrt.pop %v2560
        %v2569 = vrsqrt.pop %v2561
        %v2570 = vrsqrt.pop %v2562
        %v2571 = vrsqrt.pop %v2563
        %v2572 = vrsqrt.pop %v2564
        %v2573 = vrsqrt.pop %v2565
        %v2574 = vrsqrt.pop %v2566
        %v2575 = vmul.f32 %v2519, %v2567
        %v2576 = vmul.f32 %v2520, %v2568
        %v2577 = vmul.f32 %v2521, %v2569
        %v2578 = vmul.f32 %v2522, %v2570
        %v2579 = vmul.f32 %v2523, %v2571
        %v2580 = vmul.f32 %v2524, %v2572
        %v2581 = vmul.f32 %v2525, %v2573
        %v2582 = vmul.f32 %v2526, %v2574
        %v2584 = vlaneseq
        %v2585 = vshrl.u32 %v2584, 7
        %v2586 = vsub.s32 0, %v2585
        %v2587 = vrot.slane %v2493, %v2586
        %v2589 = vmul.f32 %v2575, %v2587
        %v2590 = vmul.f32 %v2576, %v2587
        %v2591 = vmul.f32 %v2577, %v2587
        %v2592 = vmul.f32 %v2578, %v2587
        %v2593 = vmul.f32 %v2579, %v2587
        %v2594 = vmul.f32 %v2580, %v2587
        %v2595 = vmul.f32 %v2581, %v2587
        %v2596 = vmul.f32 %v2582, %v2587
        %v2598 = vlaneseq
        %v2599 = vshrl.u32 %v2598, 7
        %v2600 = vsub.s32 0, %v2599
        %v2601 = vrot.slane %v2494, %v2600
        %v2603 = vadd.f32 %v2589, %v2601
        %v2604 = vadd.f32 %v2590, %v2601
        %v2605 = vadd.f32 %v2591, %v2601
        %v2606 = vadd.f32 %v2592, %v2601
        %v2607 = vadd.f32 %v2593, %v2601
        %v2608 = vadd.f32 %v2594, %v2601
        %v2609 = vadd.f32 %v2595, %v2601
        %v2610 = vadd.f32 %v2596, %v2601
        %v2611 = vpack.c.bf16 %v2604, %v2603
        %v2612 = vpack.c.bf16 %v2606, %v2605
        %v2613 = vpack.c.bf16 %v2608, %v2607
        %v2614 = vpack.c.bf16 %v2610, %v2609
        %v2615 = vld [vmem:[%s18] sm:$0xff]
        %v2616 = vld [vmem:[%s18 + $0x8] sm:$0xff]
        %v2617 = vld [vmem:[%s18 + $0x10] sm:$0xff]
        %v2618 = vld [vmem:[%s18 + $0x18] sm:$0xff]
        %v2619 = vld [vmem:[%s18 + $0x20] sm:$0xff]
        %v2620 = vld [vmem:[%s18 + $0x28] sm:$0xff]
        %v2621 = vld [vmem:[%s18 + $0x30] sm:$0xff]
        %v2622 = vld [vmem:[%s18 + $0x38] sm:$0xff]
        %v2623 = vld [vmem:[%s18 + $0x40] sm:$0xff]
        %v2624 = vld [vmem:[%s18 + $0x48] sm:$0xff]
        %v2625 = vld [vmem:[%s18 + $0x50] sm:$0xff]
        %v2626 = vld [vmem:[%s18 + $0x58] sm:$0xff]
        %v2627 = vld [vmem:[%s18 + $0x60] sm:$0xff]
        %v2628 = vld [vmem:[%s18 + $0x68] sm:$0xff]
        %v2629 = vld [vmem:[%s18 + $0x70] sm:$0xff]
        %v2630 = vld [vmem:[%s18 + $0x78] sm:$0xff]
        %v2631 = vld [vmem:[%s19] sm:$0x3]
        %v2633 = vlaneseq
        %v2634 = vshrl.u32 %v2633, 7
        %v2635 = vsub.s32 0, %v2634
        %v2636 = vrot.slane %v2631, %v2635
        %v2637 = vlaneseq
        %v2638 = vshrl.u32 %v2637, 7
        %v2639 = vsub.s32 1, %v2638
        %v2640 = vrot.slane %v2631, %v2639
        %v2659 = vunpack.c.l.b16 %v2615
        %v2660 = vunpack.c.h.b16 %v2615
        %v2661 = vunpack.c.l.b16 %v2616
        %v2662 = vunpack.c.h.b16 %v2616
        %v2663 = vunpack.c.l.b16 %v2617
        %v2664 = vunpack.c.h.b16 %v2617
        %v2665 = vunpack.c.l.b16 %v2618
        %v2666 = vunpack.c.h.b16 %v2618
        %v2667 = vunpack.c.l.b16 %v2619
        %v2668 = vunpack.c.h.b16 %v2619
        %v2669 = vunpack.c.l.b16 %v2620
        %v2670 = vunpack.c.h.b16 %v2620
        %v2671 = vunpack.c.l.b16 %v2621
        %v2672 = vunpack.c.h.b16 %v2621
        %v2673 = vunpack.c.l.b16 %v2622
        %v2674 = vunpack.c.h.b16 %v2622
        %v2675 = vunpack.c.l.b16 %v2623
        %v2676 = vunpack.c.h.b16 %v2623
        %v2677 = vunpack.c.l.b16 %v2624
        %v2678 = vunpack.c.h.b16 %v2624
        %v2679 = vunpack.c.l.b16 %v2625
        %v2680 = vunpack.c.h.b16 %v2625
        %v2681 = vunpack.c.l.b16 %v2626
        %v2682 = vunpack.c.h.b16 %v2626
        %v2683 = vunpack.c.l.b16 %v2627
        %v2684 = vunpack.c.h.b16 %v2627
        %v2685 = vunpack.c.l.b16 %v2628
        %v2686 = vunpack.c.h.b16 %v2628
        %v2687 = vunpack.c.l.b16 %v2629
        %v2688 = vunpack.c.h.b16 %v2629
        %v2689 = vunpack.c.l.b16 %v2630
        %v2690 = vunpack.c.h.b16 %v2630
        %v2691 = vpack.c.b16 %v2661, %v2659
        %v2692 = vpack.c.b16 %v2662, %v2660
        %v2693 = vpack.c.b16 %v2665, %v2663
        %v2694 = vpack.c.b16 %v2666, %v2664
        %v2695 = vpack.c.b16 %v2669, %v2667
        %v2696 = vpack.c.b16 %v2670, %v2668
        %v2697 = vpack.c.b16 %v2673, %v2671
        %v2698 = vpack.c.b16 %v2674, %v2672
        %v2699 = vpack.c.b16 %v2677, %v2675
        %v2700 = vpack.c.b16 %v2678, %v2676
        %v2701 = vpack.c.b16 %v2681, %v2679
        %v2702 = vpack.c.b16 %v2682, %v2680
        %v2703 = vpack.c.b16 %v2685, %v2683
        %v2704 = vpack.c.b16 %v2686, %v2684
        %v2705 = vpack.c.b16 %v2689, %v2687
        %v2706 = vpack.c.b16 %v2690, %v2688
        %2723 = vmatprep.subr.bf16.mxu0 %v2692
        %2724 = vmatpush1.bf16.msra.mxu0 %v2691
        %2725 = vmatprep.subr.bf16.mxu0 %v2694
        %2726 = vmatpush1.bf16.msra.mxu0 %v2693
        %2727 = vmatprep.subr.bf16.mxu0 %v2696
        %2728 = vmatpush1.bf16.msra.mxu0 %v2695
        %2729 = vmatprep.subr.bf16.mxu0 %v2698
        %2730 = vmatpush1.bf16.msra.mxu0 %v2697
        %2731 = vmatprep.subr.bf16.mxu0 %v2700
        %2732 = vmatpush1.bf16.msra.mxu0 %v2699
        %2733 = vmatprep.subr.bf16.mxu0 %v2702
        %2734 = vmatpush1.bf16.msra.mxu0 %v2701
        %2735 = vmatprep.subr.bf16.mxu0 %v2704
        %2736 = vmatpush1.bf16.msra.mxu0 %v2703
        %2737 = vmatprep.subr.bf16.mxu0 %v2706
        %2738 = vmatpush1.bf16.msra.mxu0 %v2705
        %2739 = vmatprep.subr.bf16.mxu0 0
        %2740 = vmatpush1.bf16.msra.mxu0 0
        %2741 = vmatprep.subr.bf16.mxu0 0
        %2742 = vmatpush1.bf16.msra.mxu0 0
        %2743 = vmatprep.subr.bf16.mxu0 0
        %2744 = vmatpush1.bf16.msra.mxu0 0
        %2745 = vmatprep.subr.bf16.mxu0 0
        %2746 = vmatpush1.bf16.msra.mxu0 0
        %2747 = vmatprep.subr.bf16.mxu0 0
        %2748 = vmatpush1.bf16.msra.mxu0 0
        %2749 = vmatprep.subr.bf16.mxu0 0
        %2750 = vmatpush1.bf16.msra.mxu0 0
        %2751 = vmatprep.subr.bf16.mxu0 0
        %2752 = vmatpush1.bf16.msra.mxu0 0
        %2753 = vmatprep.subr.bf16.mxu0 0
        %2754 = vmatpush1.bf16.msra.mxu0 0
        %2755 = vmatprep.mubr.bf16.mxu0 0
        %2756 = vmatmul.mubr.bf16.gmra.mrb[0].mxu0 %v2611
        %v2757 = vpop.f32.mrb[0].mxu0
        %v2758 = vadd.f32 %v2636, %v2757
        %v2759 = vpop.f32.mrb[0].mxu0
        %v2760 = vadd.f32 %v2640, %v2759
        %v2761 = vpop.f32.mrb[0].mxu0
        %v2762 = vadd.f32 %v2636, %v2761
        %v2763 = vpop.f32.mrb[0].mxu0
        %v2764 = vadd.f32 %v2640, %v2763
        %2765 = vmatprep.mubr.bf16.mxu0 0
        %2766 = vmatmul.mubr.bf16.gmra.mrb[0].mxu0 %v2612
        %v2767 = vpop.f32.mrb[0].mxu0
        %v2768 = vadd.f32 %v2636, %v2767
        %v2769 = vpop.f32.mrb[0].mxu0
        %v2770 = vadd.f32 %v2640, %v2769
        %v2771 = vpop.f32.mrb[0].mxu0
        %v2772 = vadd.f32 %v2636, %v2771
        %v2773 = vpop.f32.mrb[0].mxu0
        %v2774 = vadd.f32 %v2640, %v2773
        %2775 = vmatprep.mubr.bf16.mxu0 0
        %2776 = vmatmul.mubr.bf16.gmra.mrb[0].mxu0 %v2613
        %v2777 = vpop.f32.mrb[0].mxu0
        %v2778 = vadd.f32 %v2636, %v2777
        %v2779 = vpop.f32.mrb[0].mxu0
        %v2780 = vadd.f32 %v2640, %v2779
        %v2781 = vpop.f32.mrb[0].mxu0
        %v2782 = vadd.f32 %v2636, %v2781
        %v2783 = vpop.f32.mrb[0].mxu0
        %v2784 = vadd.f32 %v2640, %v2783
        %2785 = vmatprep.mubr.bf16.mxu0 0
        %2786 = vmatmul.mubr.bf16.gmra.mrb[0].mxu0 %v2614
        %v2787 = vpop.f32.mrb[0].mxu0
        %v2788 = vadd.f32 %v2636, %v2787
        %v2789 = vpop.f32.mrb[0].mxu0
        %v2790 = vadd.f32 %v2640, %v2789
        %v2791 = vpop.f32.mrb[0].mxu0
        %v2792 = vadd.f32 %v2636, %v2791
        %v2793 = vpop.f32.mrb[0].mxu0
        %v2794 = vadd.f32 %v2640, %v2793
        %2795 = vdwg.mxu0
        %v2796 = vmax.f32 %v2758, 0.0
        %v2797 = vmax.f32 %v2760, 0.0
        %v2798 = vmax.f32 %v2762, 0.0
        %v2799 = vmax.f32 %v2764, 0.0
        %v2800 = vmax.f32 %v2768, 0.0
        %v2801 = vmax.f32 %v2770, 0.0
        %v2802 = vmax.f32 %v2772, 0.0
        %v2803 = vmax.f32 %v2774, 0.0
        %v2804 = vmax.f32 %v2778, 0.0
        %v2805 = vmax.f32 %v2780, 0.0
        %v2806 = vmax.f32 %v2782, 0.0
        %v2807 = vmax.f32 %v2784, 0.0
        %v2808 = vmax.f32 %v2788, 0.0
        %v2809 = vmax.f32 %v2790, 0.0
        %v2810 = vmax.f32 %v2792, 0.0
        %v2811 = vmax.f32 %v2794, 0.0
        %v2812 = vpack.c.bf16 %v2798, %v2796
        %v2813 = vpack.c.bf16 %v2799, %v2797
        %v2814 = vpack.c.bf16 %v2802, %v2800
        %v2815 = vpack.c.bf16 %v2803, %v2801
        %v2816 = vpack.c.bf16 %v2806, %v2804
        %v2817 = vpack.c.bf16 %v2807, %v2805
        %v2818 = vpack.c.bf16 %v2810, %v2808
        %v2819 = vpack.c.bf16 %v2811, %v2809
        %v2820 = vld [vmem:[%s20] sm:$0xf]
        %v2821 = vld [vmem:[%s20 + $0x4] sm:$0xf]
        %v2822 = vld [vmem:[%s20 + $0x8] sm:$0xf]
        %v2823 = vld [vmem:[%s20 + $0xc] sm:$0xf]
        %v2824 = vld [vmem:[%s20 + $0x10] sm:$0xf]
        %v2825 = vld [vmem:[%s20 + $0x14] sm:$0xf]
        %v2826 = vld [vmem:[%s20 + $0x18] sm:$0xf]
        %v2827 = vld [vmem:[%s20 + $0x1c] sm:$0xf]
        %v2828 = vld [vmem:[%s20 + $0x20] sm:$0xf]
        %v2829 = vld [vmem:[%s20 + $0x24] sm:$0xf]
        %v2830 = vld [vmem:[%s20 + $0x28] sm:$0xf]
        %v2831 = vld [vmem:[%s20 + $0x2c] sm:$0xf]
        %v2832 = vld [vmem:[%s20 + $0x30] sm:$0xf]
        %v2833 = vld [vmem:[%s20 + $0x34] sm:$0xf]
        %v2834 = vld [vmem:[%s20 + $0x38] sm:$0xf]
        %v2835 = vld [vmem:[%s20 + $0x3c] sm:$0xf]
        %v2836 = vld [vmem:[%s20 + $0x40] sm:$0xf]
        %v2837 = vld [vmem:[%s20 + $0x44] sm:$0xf]
        %v2838 = vld [vmem:[%s20 + $0x48] sm:$0xf]
        %v2839 = vld [vmem:[%s20 + $0x4c] sm:$0xf]
        %v2840 = vld [vmem:[%s20 + $0x50] sm:$0xf]
        %v2841 = vld [vmem:[%s20 + $0x54] sm:$0xf]
        %v2842 = vld [vmem:[%s20 + $0x58] sm:$0xf]
        %v2843 = vld [vmem:[%s20 + $0x5c] sm:$0xf]
        %v2844 = vld [vmem:[%s20 + $0x60] sm:$0xf]
        %v2845 = vld [vmem:[%s20 + $0x64] sm:$0xf]
        %v2846 = vld [vmem:[%s20 + $0x68] sm:$0xf]
        %v2847 = vld [vmem:[%s20 + $0x6c] sm:$0xf]
        %v2848 = vld [vmem:[%s20 + $0x70] sm:$0xf]
        %v2849 = vld [vmem:[%s20 + $0x74] sm:$0xf]
        %v2850 = vld [vmem:[%s20 + $0x78] sm:$0xf]
        %v2851 = vld [vmem:[%s20 + $0x7c] sm:$0xf]
        %v2852 = vld [vmem:[%s21] sm:$0x1]
        %v2854 = vlaneseq
        %v2855 = vshrl.u32 %v2854, 7
        %v2856 = vsub.s32 0, %v2855
        %v2857 = vrot.slane %v2852, %v2856
        %v2891 = vunpack.c.l.b16 %v2820
        %v2892 = vunpack.c.l.b16 %v2821
        %v2893 = vunpack.c.l.b16 %v2822
        %v2894 = vunpack.c.l.b16 %v2823
        %v2895 = vunpack.c.l.b16 %v2824
        %v2896 = vunpack.c.l.b16 %v2825
        %v2897 = vunpack.c.l.b16 %v2826
        %v2898 = vunpack.c.l.b16 %v2827
        %v2899 = vunpack.c.l.b16 %v2828
        %v2900 = vunpack.c.l.b16 %v2829
        %v2901 = vunpack.c.l.b16 %v2830
        %v2902 = vunpack.c.l.b16 %v2831
        %v2903 = vunpack.c.l.b16 %v2832
        %v2904 = vunpack.c.l.b16 %v2833
        %v2905 = vunpack.c.l.b16 %v2834
        %v2906 = vunpack.c.l.b16 %v2835
        %v2907 = vunpack.c.l.b16 %v2836
        %v2908 = vunpack.c.l.b16 %v2837
        %v2909 = vunpack.c.l.b16 %v2838
        %v2910 = vunpack.c.l.b16 %v2839
        %v2911 = vunpack.c.l.b16 %v2840
        %v2912 = vunpack.c.l.b16 %v2841
        %v2913 = vunpack.c.l.b16 %v2842
        %v2914 = vunpack.c.l.b16 %v2843
        %v2915 = vunpack.c.l.b16 %v2844
        %v2916 = vunpack.c.l.b16 %v2845
        %v2917 = vunpack.c.l.b16 %v2846
        %v2918 = vunpack.c.l.b16 %v2847
        %v2919 = vunpack.c.l.b16 %v2848
        %v2920 = vunpack.c.l.b16 %v2849
        %v2921 = vunpack.c.l.b16 %v2850
        %v2922 = vunpack.c.l.b16 %v2851
        %v2923 = vpack.c.b16 %v2892, %v2891
        %v2924 = vpack.c.b16 %v2894, %v2893
        %v2925 = vpack.c.b16 %v2896, %v2895
        %v2926 = vpack.c.b16 %v2898, %v2897
        %v2927 = vpack.c.b16 %v2900, %v2899
        %v2928 = vpack.c.b16 %v2902, %v2901
        %v2929 = vpack.c.b16 %v2904, %v2903
        %v2930 = vpack.c.b16 %v2906, %v2905
        %v2931 = vpack.c.b16 %v2908, %v2907
        %v2932 = vpack.c.b16 %v2910, %v2909
        %v2933 = vpack.c.b16 %v2912, %v2911
        %v2934 = vpack.c.b16 %v2914, %v2913
        %v2935 = vpack.c.b16 %v2916, %v2915
        %v2936 = vpack.c.b16 %v2918, %v2917
        %v2937 = vpack.c.b16 %v2920, %v2919
        %v2938 = vpack.c.b16 %v2922, %v2921
        %2955 = vmatprep.subr.bf16.mxu0 0
        %2956 = vmatpush1.bf16.msra.mxu0 %v2923
        %2957 = vmatprep.subr.bf16.mxu0 0
        %2958 = vmatpush1.bf16.msra.mxu0 %v2924
        %2959 = vmatprep.subr.bf16.mxu0 0
        %2960 = vmatpush1.bf16.msra.mxu0 %v2925
        %2961 = vmatprep.subr.bf16.mxu0 0
        %2962 = vmatpush1.bf16.msra.mxu0 %v2926
        %2963 = vmatprep.subr.bf16.mxu0 0
        %2964 = vmatpush1.bf16.msra.mxu0 %v2927
        %2965 = vmatprep.subr.bf16.mxu0 0
        %2966 = vmatpush1.bf16.msra.mxu0 %v2928
        %2967 = vmatprep.subr.bf16.mxu0 0
        %2968 = vmatpush1.bf16.msra.mxu0 %v2929
        %2969 = vmatprep.subr.bf16.mxu0 0
        %2970 = vmatpush1.bf16.msra.mxu0 %v2930
        %2971 = vmatprep.subr.bf16.mxu0 0
        %2972 = vmatpush1.bf16.msra.mxu0 %v2931
        %2973 = vmatprep.subr.bf16.mxu0 0
        %2974 = vmatpush1.bf16.msra.mxu0 %v2932
        %2975 = vmatprep.subr.bf16.mxu0 0
        %2976 = vmatpush1.bf16.msra.mxu0 %v2933
        %2977 = vmatprep.subr.bf16.mxu0 0
        %2978 = vmatpush1.bf16.msra.mxu0 %v2934
        %2979 = vmatprep.subr.bf16.mxu0 0
        %2980 = vmatpush1.bf16.msra.mxu0 %v2935
        %2981 = vmatprep.subr.bf16.mxu0 0
        %2982 = vmatpush1.bf16.msra.mxu0 %v2936
        %2983 = vmatprep.subr.bf16.mxu0 0
        %2984 = vmatpush1.bf16.msra.mxu0 %v2937
        %2985 = vmatprep.subr.bf16.mxu0 0
        %2986 = vmatpush1.bf16.msra.mxu0 %v2938
        %2987 = vmatprep.mubr.bf16.mxu0 %v2813
        %2988 = vmatmul.mubr.bf16.gmra.mrb[0].mxu0 %v2812
        %v2989 = vpop.f32.mrb[0].mxu0
        %v2990 = vadd.f32 %v2857, %v2989
        %v2991 = vpop.f32.mrb[0].mxu0
        %v2992 = vpop.f32.mrb[0].mxu0
        %v2993 = vadd.f32 %v2857, %v2992
        %v2994 = vpop.f32.mrb[0].mxu0
        %2995 = vmatprep.mubr.bf16.mxu0 %v2815
        %2996 = vmatmul.mubr.bf16.gmra.mrb[0].mxu0 %v2814
        %v2997 = vpop.f32.mrb[0].mxu0
        %v2998 = vadd.f32 %v2857, %v2997
        %v2999 = vpop.f32.mrb[0].mxu0
        %v3000 = vpop.f32.mrb[0].mxu0
        %v3001 = vadd.f32 %v2857, %v3000
        %v3002 = vpop.f32.mrb[0].mxu0
        %3003 = vmatprep.mubr.bf16.mxu0 %v2817
        %3004 = vmatmul.mubr.bf16.gmra.mrb[0].mxu0 %v2816
        %v3005 = vpop.f32.mrb[0].mxu0
        %v3006 = vadd.f32 %v2857, %v3005
        %v3007 = vpop.f32.mrb[0].mxu0
        %v3008 = vpop.f32.mrb[0].mxu0
        %v3009 = vadd.f32 %v2857, %v3008
        %v3010 = vpop.f32.mrb[0].mxu0
        %3011 = vmatprep.mubr.bf16.mxu0 %v2819
        %3012 = vmatmul.mubr.bf16.gmra.mrb[0].mxu0 %v2818
        %v3013 = vpop.f32.mrb[0].mxu0
        %v3014 = vadd.f32 %v2857, %v3013
        %v3015 = vpop.f32.mrb[0].mxu0
        %v3016 = vpop.f32.mrb[0].mxu0
        %v3017 = vadd.f32 %v2857, %v3016
        %v3018 = vpop.f32.mrb[0].mxu0
        %3019 = vdwg.mxu0
        %v3020 = vpack.c.bf16 %v2486, %v2485
        %v3021 = vpack.c.bf16 %v2488, %v2487
        %v3022 = vpack.c.bf16 %v2490, %v2489
        %v3023 = vpack.c.bf16 %v2492, %v2491
        %v3024 = vld [vmem:[%s22] sm:$0xf]
        %v3025 = vld [vmem:[%s22 + $0x4] sm:$0xf]
        %v3026 = vld [vmem:[%s22 + $0x8] sm:$0xf]
        %v3027 = vld [vmem:[%s22 + $0xc] sm:$0xf]
        %v3028 = vld [vmem:[%s22 + $0x10] sm:$0xf]
        %v3029 = vld [vmem:[%s22 + $0x14] sm:$0xf]
        %v3030 = vld [vmem:[%s22 + $0x18] sm:$0xf]
        %v3031 = vld [vmem:[%s22 + $0x1c] sm:$0xf]
        %v3032 = vld [vmem:[%s22 + $0x20] sm:$0xf]
        %v3033 = vld [vmem:[%s22 + $0x24] sm:$0xf]
        %v3034 = vld [vmem:[%s22 + $0x28] sm:$0xf]
        %v3035 = vld [vmem:[%s22 + $0x2c] sm:$0xf]
        %v3036 = vld [vmem:[%s22 + $0x30] sm:$0xf]
        %v3037 = vld [vmem:[%s22 + $0x34] sm:$0xf]
        %v3038 = vld [vmem:[%s22 + $0x38] sm:$0xf]
        %v3039 = vld [vmem:[%s22 + $0x3c] sm:$0xf]
        %v3040 = vpack.c.bf16 %v2993, %v2990
        %v3041 = vpack.c.bf16 %v3001, %v2998
        %v3042 = vpack.c.bf16 %v3009, %v3006
        %v3043 = vpack.c.bf16 %v3017, %v3014
        %v3044 = vld [vmem:[%s23] sm:$0xf]
        %v3045 = vld [vmem:[%s23 + $0x4] sm:$0xf]
        %v3046 = vld [vmem:[%s23 + $0x8] sm:$0xf]
        %v3047 = vld [vmem:[%s23 + $0xc] sm:$0xf]
        %v3048 = vld [vmem:[%s23 + $0x10] sm:$0xf]
        %v3049 = vld [vmem:[%s23 + $0x14] sm:$0xf]
        %v3050 = vld [vmem:[%s23 + $0x18] sm:$0xf]
        %v3051 = vld [vmem:[%s23 + $0x1c] sm:$0xf]
        %v3052 = vld [vmem:[%s23 + $0x20] sm:$0xf]
        %v3053 = vld [vmem:[%s23 + $0x24] sm:$0xf]
        %v3054 = vld [vmem:[%s23 + $0x28] sm:$0xf]
        %v3055 = vld [vmem:[%s23 + $0x2c] sm:$0xf]
        %v3056 = vld [vmem:[%s23 + $0x30] sm:$0xf]
        %v3057 = vld [vmem:[%s23 + $0x34] sm:$0xf]
        %v3058 = vld [vmem:[%s23 + $0x38] sm:$0xf]
        %v3059 = vld [vmem:[%s23 + $0x3c] sm:$0xf]
        %v3076 = vunpack.c.l.b16 %v3044
        %v3077 = vunpack.c.l.b16 %v3045
        %v3078 = vunpack.c.l.b16 %v3046
        %v3079 = vunpack.c.l.b16 %v3047
        %v3080 = vunpack.c.l.b16 %v3048
        %v3081 = vunpack.c.l.b16 %v3049
        %v3082 = vunpack.c.l.b16 %v3050
        %v3083 = vunpack.c.l.b16 %v3051
        %v3084 = vunpack.c.l.b16 %v3052
        %v3085 = vunpack.c.l.b16 %v3053
        %v3086 = vunpack.c.l.b16 %v3054
        %v3087 = vunpack.c.l.b16 %v3055
        %v3088 = vunpack.c.l.b16 %v3056
        %v3089 = vunpack.c.l.b16 %v3057
        %v3090 = vunpack.c.l.b16 %v3058
        %v3091 = vunpack.c.l.b16 %v3059
        %v3092 = vpack.c.b16 %v3077, %v3076
        %v3093 = vpack.c.b16 %v3079, %v3078
        %v3094 = vpack.c.b16 %v3081, %v3080
        %v3095 = vpack.c.b16 %v3083, %v3082
        %v3096 = vpack.c.b16 %v3085, %v3084
        %v3097 = vpack.c.b16 %v3087, %v3086
        %v3098 = vpack.c.b16 %v3089, %v3088
        %v3099 = vpack.c.b16 %v3091, %v3090
        %3108 = vmatprep.subr.bf16.mxu0 0
        %3109 = vmatpush1.bf16.msra.mxu0 %v3092
        %3110 = vmatprep.subr.bf16.mxu0 0
        %3111 = vmatpush1.bf16.msra.mxu0 %v3093
        %3112 = vmatprep.subr.bf16.mxu0 0
        %3113 = vmatpush1.bf16.msra.mxu0 %v3094
        %3114 = vmatprep.subr.bf16.mxu0 0
        %3115 = vmatpush1.bf16.msra.mxu0 %v3095
        %3116 = vmatprep.subr.bf16.mxu0 0
        %3117 = vmatpush1.bf16.msra.mxu0 %v3096
        %3118 = vmatprep.subr.bf16.mxu0 0
        %3119 = vmatpush1.bf16.msra.mxu0 %v3097
        %3120 = vmatprep.subr.bf16.mxu0 0
        %3121 = vmatpush1.bf16.msra.mxu0 %v3098
        %3122 = vmatprep.subr.bf16.mxu0 0
        %3123 = vmatpush1.bf16.msra.mxu0 %v3099
        %3124 = vmatprep.subr.bf16.mxu0 0
        %3125 = vmatpush1.bf16.msra.mxu0 0
        %3126 = vmatprep.subr.bf16.mxu0 0
        %3127 = vmatpush1.bf16.msra.mxu0 0
        %3128 = vmatprep.subr.bf16.mxu0 0
        %3129 = vmatpush1.bf16.msra.mxu0 0
        %3130 = vmatprep.subr.bf16.mxu0 0
        %3131 = vmatpush1.bf16.msra.mxu0 0
        %3132 = vmatprep.subr.bf16.mxu0 0
        %3133 = vmatpush1.bf16.msra.mxu0 0
        %3134 = vmatprep.subr.bf16.mxu0 0
        %3135 = vmatpush1.bf16.msra.mxu0 0
        %3136 = vmatprep.subr.bf16.mxu0 0
        %3137 = vmatpush1.bf16.msra.mxu0 0
        %3138 = vmatprep.subr.bf16.mxu0 0
        %3139 = vmatpush1.bf16.msra.mxu0 0
        %3140 = vmatprep.mubr.bf16.mxu0 0
        %3141 = vmatmul.mubr.bf16.gmra.mrb[0].mxu0 %v3040
        %v3142 = vpop.f32.mrb[0].mxu0
        %v3143 = vadd.f32 0.0, %v3142
        %v3144 = vpop.f32.mrb[0].mxu0
        %v3145 = vpop.f32.mrb[0].mxu0
        %v3146 = vadd.f32 0.0, %v3145
        %v3147 = vpop.f32.mrb[0].mxu0
        %3148 = vmatprep.mubr.bf16.mxu0 0
        %3149 = vmatmul.mubr.bf16.gmra.mrb[0].mxu0 %v3041
        %v3150 = vpop.f32.mrb[0].mxu0
        %v3151 = vadd.f32 0.0, %v3150
        %v3152 = vpop.f32.mrb[0].mxu0
        %v3153 = vpop.f32.mrb[0].mxu0
        %v3154 = vadd.f32 0.0, %v3153
        %v3155 = vpop.f32.mrb[0].mxu0
        %3156 = vmatprep.mubr.bf16.mxu0 0
        %3157 = vmatmul.mubr.bf16.gmra.mrb[0].mxu0 %v3042
        %v3158 = vpop.f32.mrb[0].mxu0
        %v3159 = vadd.f32 0.0, %v3158
        %v3160 = vpop.f32.mrb[0].mxu0
        %v3161 = vpop.f32.mrb[0].mxu0
        %v3162 = vadd.f32 0.0, %v3161
        %v3163 = vpop.f32.mrb[0].mxu0
        %3164 = vmatprep.mubr.bf16.mxu0 0
        %3165 = vmatmul.mubr.bf16.gmra.mrb[0].mxu0 %v3043
        %v3166 = vpop.f32.mrb[0].mxu0
        %v3167 = vadd.f32 0.0, %v3166
        %v3168 = vpop.f32.mrb[0].mxu0
        %v3169 = vpop.f32.mrb[0].mxu0
        %v3170 = vadd.f32 0.0, %v3169
        %v3171 = vpop.f32.mrb[0].mxu0
        %3172 = vdwg.mxu0
        %v3189 = vunpack.c.l.b16 %v3024
        %v3190 = vunpack.c.l.b16 %v3025
        %v3191 = vunpack.c.l.b16 %v3026
        %v3192 = vunpack.c.l.b16 %v3027
        %v3193 = vunpack.c.l.b16 %v3028
        %v3194 = vunpack.c.l.b16 %v3029
        %v3195 = vunpack.c.l.b16 %v3030
        %v3196 = vunpack.c.l.b16 %v3031
        %v3197 = vunpack.c.l.b16 %v3032
        %v3198 = vunpack.c.l.b16 %v3033
        %v3199 = vunpack.c.l.b16 %v3034
        %v3200 = vunpack.c.l.b16 %v3035
        %v3201 = vunpack.c.l.b16 %v3036
        %v3202 = vunpack.c.l.b16 %v3037
        %v3203 = vunpack.c.l.b16 %v3038
        %v3204 = vunpack.c.l.b16 %v3039
        %v3205 = vpack.c.b16 %v3190, %v3189
        %v3206 = vpack.c.b16 %v3192, %v3191
        %v3207 = vpack.c.b16 %v3194, %v3193
        %v3208 = vpack.c.b16 %v3196, %v3195
        %v3209 = vpack.c.b16 %v3198, %v3197
        %v3210 = vpack.c.b16 %v3200, %v3199
        %v3211 = vpack.c.b16 %v3202, %v3201
        %v3212 = vpack.c.b16 %v3204, %v3203
        %3221 = vmatprep.subr.bf16.mxu0 0
        %3222 = vmatpush1.bf16.msra.mxu0 %v3205
        %3223 = vmatprep.subr.bf16.mxu0 0
        %3224 = vmatpush1.bf16.msra.mxu0 %v3206
        %3225 = vmatprep.subr.bf16.mxu0 0
        %3226 = vmatpush1.bf16.msra.mxu0 %v3207
        %3227 = vmatprep.subr.bf16.mxu0 0
        %3228 = vmatpush1.bf16.msra.mxu0 %v3208
        %3229 = vmatprep.subr.bf16.mxu0 0
        %3230 = vmatpush1.bf16.msra.mxu0 %v3209
        %3231 = vmatprep.subr.bf16.mxu0 0
        %3232 = vmatpush1.bf16.msra.mxu0 %v3210
        %3233 = vmatprep.subr.bf16.mxu0 0
        %3234 = vmatpush1.bf16.msra.mxu0 %v3211
        %3235 = vmatprep.subr.bf16.mxu0 0
        %3236 = vmatpush1.bf16.msra.mxu0 %v3212
        %3237 = vmatprep.subr.bf16.mxu0 0
        %3238 = vmatpush1.bf16.msra.mxu0 0
        %3239 = vmatprep.subr.bf16.mxu0 0
        %3240 = vmatpush1.bf16.msra.mxu0 0
        %3241 = vmatprep.subr.bf16.mxu0 0
        %3242 = vmatpush1.bf16.msra.mxu0 0
        %3243 = vmatprep.subr.bf16.mxu0 0
        %3244 = vmatpush1.bf16.msra.mxu0 0
        %3245 = vmatprep.subr.bf16.mxu0 0
        %3246 = vmatpush1.bf16.msra.mxu0 0
        %3247 = vmatprep.subr.bf16.mxu0 0
        %3248 = vmatpush1.bf16.msra.mxu0 0
        %3249 = vmatprep.subr.bf16.mxu0 0
        %3250 = vmatpush1.bf16.msra.mxu0 0
        %3251 = vmatprep.subr.bf16.mxu0 0
        %3252 = vmatpush1.bf16.msra.mxu0 0
        %3253 = vmatprep.mubr.bf16.mxu0 0
        %3254 = vmatmul.mubr.bf16.gmra.mrb[0].mxu0 %v3020
        %v3255 = vpop.f32.mrb[0].mxu0
        %v3256 = vadd.f32 %v3143, %v3255
        %v3257 = vpop.f32.mrb[0].mxu0
        %v3258 = vpop.f32.mrb[0].mxu0
        %v3259 = vadd.f32 %v3146, %v3258
        %v3260 = vpop.f32.mrb[0].mxu0
        %3261 = vmatprep.mubr.bf16.mxu0 0
        %3262 = vmatmul.mubr.bf16.gmra.mrb[0].mxu0 %v3021
        %v3263 = vpop.f32.mrb[0].mxu0
        %v3264 = vadd.f32 %v3151, %v3263
        %v3265 = vpop.f32.mrb[0].mxu0
        %v3266 = vpop.f32.mrb[0].mxu0
        %v3267 = vadd.f32 %v3154, %v3266
        %v3268 = vpop.f32.mrb[0].mxu0
        %3269 = vmatprep.mubr.bf16.mxu0 0
        %3270 = vmatmul.mubr.bf16.gmra.mrb[0].mxu0 %v3022
        %v3271 = vpop.f32.mrb[0].mxu0
        %v3272 = vadd.f32 %v3159, %v3271
        %v3273 = vpop.f32.mrb[0].mxu0
        %v3274 = vpop.f32.mrb[0].mxu0
        %v3275 = vadd.f32 %v3162, %v3274
        %v3276 = vpop.f32.mrb[0].mxu0
        %3277 = vmatprep.mubr.bf16.mxu0 0
        %3278 = vmatmul.mubr.bf16.gmra.mrb[0].mxu0 %v3023
        %v3279 = vpop.f32.mrb[0].mxu0
        %v3280 = vadd.f32 %v3167, %v3279
        %v3281 = vpop.f32.mrb[0].mxu0
        %v3282 = vpop.f32.mrb[0].mxu0
        %v3283 = vadd.f32 %v3170, %v3282
        %v3284 = vpop.f32.mrb[0].mxu0
        %3285 = vdwg.mxu0
        %v3286 = vld [vmem:[%s24] sm:$0x1]
        %v3288 = vlaneseq
        %v3289 = vshrl.u32 %v3288, 7
        %v3290 = vsub.s32 0, %v3289
        %v3291 = vrot.slane %v3286, %v3290
        %v3293 = vadd.f32 %v3256, %v3291
        %v3294 = vadd.f32 %v3259, %v3291
        %v3295 = vadd.f32 %v3264, %v3291
        %v3296 = vadd.f32 %v3267, %v3291
        %v3297 = vadd.f32 %v3272, %v3291
        %v3298 = vadd.f32 %v3275, %v3291
        %v3299 = vadd.f32 %v3280, %v3291
        %v3300 = vadd.f32 %v3283, %v3291
        %v3301 = vadd.f32 %v2485, %v3293
        %v3302 = vadd.f32 %v2486, %v3294
        %v3303 = vadd.f32 %v2487, %v3295
        %v3304 = vadd.f32 %v2488, %v3296
        %v3305 = vadd.f32 %v2489, %v3297
        %v3306 = vadd.f32 %v2490, %v3298
        %v3307 = vadd.f32 %v2491, %v3299
        %v3308 = vadd.f32 %v2492, %v3300
        %v3309 = vld [vmem:[%s25] sm:$0x1]
        %v3310 = vld [vmem:[%s26] sm:$0x1]
        %3311 = vadd.xlane.f32.xlu0 %v3301
        %v3312 = vpop.xlane.xlu0 %3311
        %3313 = vadd.xlane.f32.xlu0 %v3302
        %v3314 = vpop.xlane.xlu0 %3313
        %3315 = vadd.xlane.f32.xlu0 %v3303
        %v3316 = vpop.xlane.xlu0 %3315
        %3317 = vadd.xlane.f32.xlu0 %v3304
        %v3318 = vpop.xlane.xlu0 %3317
        %3319 = vadd.xlane.f32.xlu0 %v3305
        %v3320 = vpop.xlane.xlu0 %3319
        %3321 = vadd.xlane.f32.xlu0 %v3306
        %v3322 = vpop.xlane.xlu0 %3321
        %3323 = vadd.xlane.f32.xlu0 %v3307
        %v3324 = vpop.xlane.xlu0 %3323
        %3325 = vadd.xlane.f32.xlu0 %v3308
        %v3326 = vpop.xlane.xlu0 %3325
        %v3327 = vmul.f32 %v3312, %v905
        %v3328 = vmul.f32 %v3314, %v905
        %v3329 = vmul.f32 %v3316, %v905
        %v3330 = vmul.f32 %v3318, %v905
        %v3331 = vmul.f32 %v3320, %v905
        %v3332 = vmul.f32 %v3322, %v905
        %v3333 = vmul.f32 %v3324, %v905
        %v3334 = vmul.f32 %v3326, %v905
        %v3335 = vsub.f32 %v3301, %v3327
        %v3336 = vsub.f32 %v3302, %v3328
        %v3337 = vsub.f32 %v3303, %v3329
        %v3338 = vsub.f32 %v3304, %v3330
        %v3339 = vsub.f32 %v3305, %v3331
        %v3340 = vsub.f32 %v3306, %v3332
        %v3341 = vsub.f32 %v3307, %v3333
        %v3342 = vsub.f32 %v3308, %v3334
        %v3343 = vmul.f32 %v3335, %v3335
        %v3344 = vmul.f32 %v3336, %v3336
        %v3345 = vmul.f32 %v3337, %v3337
        %v3346 = vmul.f32 %v3338, %v3338
        %v3347 = vmul.f32 %v3339, %v3339
        %v3348 = vmul.f32 %v3340, %v3340
        %v3349 = vmul.f32 %v3341, %v3341
        %v3350 = vmul.f32 %v3342, %v3342
        %3351 = vadd.xlane.f32.xlu0 %v3343
        %v3352 = vpop.xlane.xlu0 %3351
        %3353 = vadd.xlane.f32.xlu0 %v3344
        %v3354 = vpop.xlane.xlu0 %3353
        %3355 = vadd.xlane.f32.xlu0 %v3345
        %v3356 = vpop.xlane.xlu0 %3355
        %3357 = vadd.xlane.f32.xlu0 %v3346
        %v3358 = vpop.xlane.xlu0 %3357
        %3359 = vadd.xlane.f32.xlu0 %v3347
        %v3360 = vpop.xlane.xlu0 %3359
        %3361 = vadd.xlane.f32.xlu0 %v3348
        %v3362 = vpop.xlane.xlu0 %3361
        %3363 = vadd.xlane.f32.xlu0 %v3349
        %v3364 = vpop.xlane.xlu0 %3363
        %3365 = vadd.xlane.f32.xlu0 %v3350
        %v3366 = vpop.xlane.xlu0 %3365
        %v3367 = vmul.f32 %v3352, %v905
        %v3368 = vmul.f32 %v3354, %v905
        %v3369 = vmul.f32 %v3356, %v905
        %v3370 = vmul.f32 %v3358, %v905
        %v3371 = vmul.f32 %v3360, %v905
        %v3372 = vmul.f32 %v3362, %v905
        %v3373 = vmul.f32 %v3364, %v905
        %v3374 = vmul.f32 %v3366, %v905
        %v3375 = vadd.f32 %v3367, 1e-05
        %v3376 = vadd.f32 %v3368, 1e-05
        %v3377 = vadd.f32 %v3369, 1e-05
        %v3378 = vadd.f32 %v3370, 1e-05
        %v3379 = vadd.f32 %v3371, 1e-05
        %v3380 = vadd.f32 %v3372, 1e-05
        %v3381 = vadd.f32 %v3373, 1e-05
        %v3382 = vadd.f32 %v3374, 1e-05
        %v3383 = vrsqrt.pop %v3375
        %v3384 = vrsqrt.pop %v3376
        %v3385 = vrsqrt.pop %v3377
        %v3386 = vrsqrt.pop %v3378
        %v3387 = vrsqrt.pop %v3379
        %v3388 = vrsqrt.pop %v3380
        %v3389 = vrsqrt.pop %v3381
        %v3390 = vrsqrt.pop %v3382
        %v3391 = vmul.f32 %v3335, %v3383
        %v3392 = vmul.f32 %v3336, %v3384
        %v3393 = vmul.f32 %v3337, %v3385
        %v3394 = vmul.f32 %v3338, %v3386
        %v3395 = vmul.f32 %v3339, %v3387
        %v3396 = vmul.f32 %v3340, %v3388
        %v3397 = vmul.f32 %v3341, %v3389
        %v3398 = vmul.f32 %v3342, %v3390
        %v3400 = vlaneseq
        %v3401 = vshrl.u32 %v3400, 7
        %v3402 = vsub.s32 0, %v3401
        %v3403 = vrot.slane %v3309, %v3402
        %v3405 = vmul.f32 %v3391, %v3403
        %v3406 = vmul.f32 %v3392, %v3403
        %v3407 = vmul.f32 %v3393, %v3403
        %v3408 = vmul.f32 %v3394, %v3403
        %v3409 = vmul.f32 %v3395, %v3403
        %v3410 = vmul.f32 %v3396, %v3403
        %v3411 = vmul.f32 %v3397, %v3403
        %v3412 = vmul.f32 %v3398, %v3403
        %v3414 = vlaneseq
        %v3415 = vshrl.u32 %v3414, 7
        %v3416 = vsub.s32 0, %v3415
        %v3417 = vrot.slane %v3310, %v3416
        %v3419 = vadd.f32 %v3405, %v3417
        %v3420 = vadd.f32 %v3406, %v3417
        %v3421 = vadd.f32 %v3407, %v3417
        %v3422 = vadd.f32 %v3408, %v3417
        %v3423 = vadd.f32 %v3409, %v3417
        %v3424 = vadd.f32 %v3410, %v3417
        %v3425 = vadd.f32 %v3411, %v3417
        %v3426 = vadd.f32 %v3412, %v3417
        %3427 = vst [vmem:[%s875] sm:$0xff] %v3419
        %3428 = vst [vmem:[%s875 + $0x8] sm:$0xff] %v3420
        %3429 = vst [vmem:[%s875 + $0x10] sm:$0xff] %v3421
        %3430 = vst [vmem:[%s875 + $0x18] sm:$0xff] %v3422
        %3431 = vst [vmem:[%s875 + $0x20] sm:$0xff] %v3423
        %3432 = vst [vmem:[%s875 + $0x28] sm:$0xff] %v3424
        %3433 = vst [vmem:[%s875 + $0x30] sm:$0xff] %v3425
        %3434 = vst [vmem:[%s875 + $0x38] sm:$0xff] %v3426
        %s3435 = sand.u32 %s618, 1
        %s3436 = sand.u32 %s618, 1
        %s3437 = smul.addr %s3436, 64
        %s3438 = scalar_lea.vmem [#allocation3], %s3437
        // Predicated region
        $region167: #{dtqn_forward.4} parent=161 // pred_check
          %p3439 = pneg %p628
        $region168: #{dtqn_forward.4} parent=161 // pred_check_branch
          %3441 = sbr.rel (%p3439) target = $region170
        $region169: #{dtqn_forward.4} parent=161 // pred_region
          %s3442 = smul.u32 4, %s38
          %s3443 = smul.addr %s3442, 8
          %s3444 = scalar_lea.vmem %s27, %s3443
          // Predicated region
          $region171: #{dtqn_forward.4} parent=169 // pred_check
            _
          $region172: #{dtqn_forward.4} parent=169 // pred_check_branch
            %3446 = sbr.rel (0) target = $region174
          $region173: #{dtqn_forward.4} parent=169 // pred_region
            // Predicated region
            $region175: #{dtqn_forward.4} parent=173 // pred_check
              _
            $region176: #{dtqn_forward.4} parent=173 // pred_check_branch
              %3448 = sbr.rel (0) target = $region178
            $region177: #{dtqn_forward.4} parent=173 // pred_region
              // Predicated region
              $region190: #{dtqn_forward.4} parent=177 // pred_check
                _
              $region191: #{dtqn_forward.4} parent=177 // pred_check_branch
                %3477 = sbr.rel (0) target = $region193
              $region192: #{dtqn_forward.4} parent=177 // pred_region
                loop: start=0, step=1, limit=1
                $region194: #{dtqn_forward.4} parent=192 // loop_pre_header
                  _
                $region195: #{dtqn_forward.4} parent=192 // loop_header
                  %s3479 = sphi 0, %s3483
                  %p3480 = scmp.ge.s32.totalorder %s3479, 1
                  %s3484 = sphi %s3438, %s3438
                  %s3485 = sphi %s3444, %s3444
                $region196: #{dtqn_forward.4} parent=192 // loop_header_branch
                  %3482 = sbr.rel (%p3480) target = $region200
                $region197: #{dtqn_forward.4} parent=192 // loop_body
                  %v3486 = vld [vmem:[%s3484] sm:$0xff]
                  %3487 = vst [vmem:[%s3485] sm:$0xff] %v3486
                  %v3488 = vld [vmem:[%s3484 + $0x8] sm:$0xff]
                  %3489 = vst [vmem:[%s3485 + $0x8] sm:$0xff] %v3488
                  %v3490 = vld [vmem:[%s3484 + $0x10] sm:$0xff]
                  %3491 = vst [vmem:[%s3485 + $0x10] sm:$0xff] %v3490
                  %v3492 = vld [vmem:[%s3484 + $0x18] sm:$0xff]
                  %3493 = vst [vmem:[%s3485 + $0x18] sm:$0xff] %v3492
                  %v3494 = vld [vmem:[%s3484 + $0x20] sm:$0xff]
                  %3495 = vst [vmem:[%s3485 + $0x40] sm:$0xff] %v3494
                  %v3496 = vld [vmem:[%s3484 + $0x28] sm:$0xff]
                  %3497 = vst [vmem:[%s3485 + $0x48] sm:$0xff] %v3496
                  %v3498 = vld [vmem:[%s3484 + $0x30] sm:$0xff]
                  %3499 = vst [vmem:[%s3485 + $0x50] sm:$0xff] %v3498
                  %v3500 = vld [vmem:[%s3484 + $0x38] sm:$0xff]
                  %3501 = vst [vmem:[%s3485 + $0x58] sm:$0xff] %v3500
                $region198: #{dtqn_forward.4} parent=192 // loop_footer
                  %s3483 = sadd.s32 1, %s3479
                $region199: #{dtqn_forward.4} parent=192 // loop_footer_branch
                  %3478 = sbr.rel target = $region195
                $region200: #{dtqn_forward.4} parent=192 // loop_exit
                  _
              $region193: #{dtqn_forward.4} parent=177 // pred_fallthru
                _
              // Predicated region
              $region201: #{dtqn_forward.4} parent=177 // pred_check
                _
              $region202: #{dtqn_forward.4} parent=177 // pred_check_branch
                %3503 = sbr.rel target = $region204
              $region203: #{dtqn_forward.4} parent=177 // pred_region
                _
              $region204: #{dtqn_forward.4} parent=177 // pred_fallthru
                _
            $region178: #{dtqn_forward.4} parent=173 // pred_fallthru
              _
            // Predicated region
            $region179: #{dtqn_forward.4} parent=173 // pred_check
              _
            $region180: #{dtqn_forward.4} parent=173 // pred_check_branch
              %3450 = sbr.rel target = $region182
            $region181: #{dtqn_forward.4} parent=173 // pred_region
              loop: start=0, step=1, limit=1
              $region183: #{dtqn_forward.4} parent=181 // loop_pre_header
                _
              $region184: #{dtqn_forward.4} parent=181 // loop_header
                %s3453 = sphi 0, %s3457
                %p3454 = scmp.ge.s32.totalorder %s3453, 1
                %s3458 = sphi %s3438, %s3438
                %s3459 = sphi %s3444, %s3444
              $region185: #{dtqn_forward.4} parent=181 // loop_header_branch
                %3456 = sbr.rel (%p3454) target = $region189
              $region186: #{dtqn_forward.4} parent=181 // loop_body
                %v3460 = vld [vmem:[%s3458] sm:$0xff]
                %3461 = vst [vmem:[%s3459] sm:$0xff] %v3460
                %v3462 = vld [vmem:[%s3458 + $0x8] sm:$0xff]
                %3463 = vst [vmem:[%s3459 + $0x8] sm:$0xff] %v3462
                %v3464 = vld [vmem:[%s3458 + $0x10] sm:$0xff]
                %3465 = vst [vmem:[%s3459 + $0x10] sm:$0xff] %v3464
                %v3466 = vld [vmem:[%s3458 + $0x18] sm:$0xff]
                %3467 = vst [vmem:[%s3459 + $0x18] sm:$0xff] %v3466
                %v3468 = vld [vmem:[%s3458 + $0x20] sm:$0xff]
                %3469 = vst [vmem:[%s3459 + $0x40] sm:$0xff] %v3468
                %v3470 = vld [vmem:[%s3458 + $0x28] sm:$0xff]
                %3471 = vst [vmem:[%s3459 + $0x48] sm:$0xff] %v3470
                %v3472 = vld [vmem:[%s3458 + $0x30] sm:$0xff]
                %3473 = vst [vmem:[%s3459 + $0x50] sm:$0xff] %v3472
                %v3474 = vld [vmem:[%s3458 + $0x38] sm:$0xff]
                %3475 = vst [vmem:[%s3459 + $0x58] sm:$0xff] %v3474
              $region187: #{dtqn_forward.4} parent=181 // loop_footer
                %s3457 = sadd.s32 1, %s3453
              $region188: #{dtqn_forward.4} parent=181 // loop_footer_branch
                %3452 = sbr.rel target = $region184
              $region189: #{dtqn_forward.4} parent=181 // loop_exit
                _
            $region182: #{dtqn_forward.4} parent=173 // pred_fallthru
              _
          $region174: #{dtqn_forward.4} parent=169 // pred_fallthru
            _
          %3504 = vnop
        $region170: #{dtqn_forward.4} parent=161 // pred_fallthru
          _
      $region162: #{dtqn_forward.4} parent=5 // pred_fallthru
        _
      %p3505 = scmp.le.s32.totalorder 2, %s33
      // Predicated region
      $region205: #{dtqn_forward.4} parent=5 // pred_check
        %p3506 = pneg %p3505
      $region206: #{dtqn_forward.4} parent=5 // pred_check_branch
        %3508 = sbr.rel (%p3506) target = $region208
      $region207: #{dtqn_forward.4} parent=5 // pred_region
        %s3509 = ssub.s32 %s33, 2
        // Predicated region
        $region209: #{dtqn_forward.4} parent=207 // pred_check
          %p3510 = pneg %p634
        $region210: #{dtqn_forward.4} parent=207 // pred_check_branch
          %3512 = sbr.rel (%p3510) target = $region212
        $region211: #{dtqn_forward.4} parent=207 // pred_region
          %s3513 = sand.u32 %s619, 1
          %s3514 = sand.u32 %s619, 1
          %s3515 = smul.addr %s3514, 64
          %s3516 = scalar_lea.vmem [#allocation3], %s3515
        $region212: #{dtqn_forward.4} parent=207 // pred_fallthru
          _
      $region208: #{dtqn_forward.4} parent=5 // pred_fallthru
        _
    $region6: #{dtqn_forward.4} parent=1 // loop_footer
      %s37 = sadd.s32 1, %s33
    $region7: #{dtqn_forward.4} parent=1 // loop_footer_branch
      %32 = sbr.rel target = $region3
    $region8: #{dtqn_forward.4} parent=1 // loop_exit
      _

</llo_original>
